<compile_context>
chip_gen: v7x
topology: tpu7x:2x2x1
jax: 0.10.0
libtpu: 0.0.40
codegen_flags: <defaults>
</compile_context>

<pallas_src>
import functools

import jax
import jax.numpy as jnp
from jax.experimental import pallas as pl
from jax.experimental.pallas import tpu as pltpu

IMG_H = 16
IMG_W = 16
NUM_CLASSES = 2
BATCH = 2

C1, C2, C3, FC = 32, 64, 128, 128   # conv1/conv2/conv3/linear_1 widths
_LANE = 128                          # lane-dense width for the logits store
_OUT_ROWS = 8                        # sublane-padded output rows
_CH = 128                            # conv row-chunk size (M of each MXU dot)


# ----------------------------------------------------------------------------
# Fused forward kernel builder
# ----------------------------------------------------------------------------
@functools.lru_cache(maxsize=None)
def _build_fused_forward(B, H, W):
    assert H % 8 == 0 and W % 8 == 0, "spatial dims must be divisible by 8"
    assert B <= _OUT_ROWS
    f32 = jnp.float32
    H2, W2 = H // 2, W // 2
    H3, W3 = H // 4, W // 4
    H4, W4 = H // 8, W // 8

    n1 = B * H * W                    # conv1 output rows, unpadded (b, h, w)
    n2 = B * (H2 + 2) * (W2 + 2)      # pool1 out / conv2 in, padded grid
    n3 = B * (H3 + 2) * (W3 + 2)      # pool2 out / conv3 in, padded grid
    FLAT = H4 * W4 * C3               # flatten width into linear_1

    def conv1_layer(xp_ref, w_ref, b_ref, dst_ref):
        """conv1 + ReLU: single K=27 im2col dot per 128-row chunk.

        The 27-wide patch (b, h, w) x (kh, kw, ci) is built wrapper-side;
        output rows are unpadded (b, h, w)."""
        bias = b_ref[...]                              # hoisted out of the loop
        start = 0
        while start < n1:
            ch = min(_CH, n1 - start)
            acc = jnp.dot(xp_ref[pl.ds(start, ch), :], w_ref[...],
                          preferred_element_type=f32)
            dst_ref[pl.ds(start, ch), :] = jnp.maximum(acc + bias, 0.0)
            start += ch

    def conv_layer(src_ref, w_ref, b_ref, dst_ref, stage_ref, Hc, Wc, Cin, Cout):
        """3x3 'same' conv + bias + ReLU over a zero-padded flat grid.

        The 9 shifted taps of each row chunk are staged side-by-side on the
        lane axis of stage_ref (CH, 9*Cin), so the conv is ONE K=9*Cin MXU dot
        per chunk instead of 9 accumulating K=Cin dots.
        INVARIANT: rows outside the computed window (grid halo / batch seams)
        are never written and never read — pools only read interior positions.
        """
        Wp = Wc + 2
        n_rows = B * (Hc + 2) * Wp
        base = Wp + 1                          # first row with a full 3x3 window
        n_win = n_rows - 2 * base
        offs = [(kh - 1) * Wp + (kw - 1) for kh in range(3) for kw in range(3)]
        bias = b_ref[...]                              # hoisted out of the loop
        start = 0
        while start < n_win:
            ch = min(_CH, n_win - start)
            for k, d in enumerate(offs):
                stage_ref[pl.ds(0, ch), pl.ds(k * Cin, Cin)] = (
                    src_ref[pl.ds(base + start + d, ch), :])
            acc = jnp.dot(stage_ref[pl.ds(0, ch), :], w_ref[...],
                          preferred_element_type=f32)
            dst_ref[pl.ds(base + start, ch), :] = jnp.maximum(acc + bias, 0.0)
            start += ch

    def pool_layer(src_ref, dst_ref, Hc, Wc, src_padded):
        """2x2 stride-2 max-pool into the interior of the next padded grid.

        4 sublane-strided loads + 3 elementwise maxes per output row (no
        decimation matmul).  Each interior destination row is written in one
        store together with its left/right halo zeros; top/bottom halo rows
        get one strip store each — no full-buffer zero init."""
        Ho, Wo = Hc // 2, Wc // 2
        Wq, C = Wo + 2, dst_ref.shape[1]
        HqWq = (Ho + 2) * Wq
        if src_padded:
            Wp = Wc + 2
            HpWp = (Hc + 2) * Wp
        zrow = jnp.zeros((1, C), f32)
        zstrip = jnp.zeros((Wq, C), f32)
        for b in range(B):
            dst_ref[pl.ds(b * HqWq, Wq), :] = zstrip                   # hp = 0
            dst_ref[pl.ds(b * HqWq + (Ho + 1) * Wq, Wq), :] = zstrip   # hp = Ho+1
            for io in range(Ho):
                if src_padded:
                    r0 = b * HpWp + (2 * io + 1) * Wp + 1
                    rstep = Wp
                else:
                    r0 = b * Hc * Wc + (2 * io) * Wc
                    rstep = Wc
                t = jnp.maximum(
                    jnp.maximum(src_ref[pl.ds(r0, Wo, stride=2), :],
                                src_ref[pl.ds(r0 + 1, Wo, stride=2), :]),
                    jnp.maximum(src_ref[pl.ds(r0 + rstep, Wo, stride=2), :],
                                src_ref[pl.ds(r0 + rstep + 1, Wo, stride=2), :]))
                row = jnp.concatenate([zrow, t, zrow], axis=0)         # (Wq, C)
                dst_ref[pl.ds(b * HqWq + (io + 1) * Wq, Wq), :] = row

    def kernel(xp_ref, w1_ref, b1_ref, w2_ref, b2_ref, w3_ref, b3_ref,
               wl1_ref, bl1_ref, wo_ref, bo_ref,
               out_ref,
               c1_ref, p2_ref, c2_ref, p3_ref, c3_ref,
               stg2_ref, stg3_ref, fc_ref):
        # conv1 + relu, pool1
        conv1_layer(xp_ref, w1_ref, b1_ref, c1_ref)
        pool_layer(c1_ref, p2_ref, H, W, src_padded=False)
        # conv2 + relu, pool2
        conv_layer(p2_ref, w2_ref, b2_ref, c2_ref, stg2_ref, H2, W2, C1, C2)
        pool_layer(c2_ref, p3_ref, H2, W2, src_padded=True)
        # conv3 + relu
        conv_layer(p3_ref, w3_ref, b3_ref, c3_ref, stg3_ref, H3, W3, C2, C3)

        # pool3 + flatten: each pooled (1, C3) row lands at lane slot s*C3 of a
        # lane-dense (8, FLAT) tile (offsets multiples of 128 -> unmasked
        # stores); rows >= B stay zero.  Then linear_1 and output are exactly
        # TWO dots — no serialized M=1 accumulation chain.
        Wp3 = W3 + 2
        HpWp3 = (H3 + 2) * Wp3
        fc_ref[...] = jnp.zeros(fc_ref.shape, jnp.float32)
        for b in range(B):
            for io in range(H4):
                for jo in range(W4):
                    r = b * HpWp3 + (2 * io + 1) * Wp3 + (2 * jo + 1)
                    t = jnp.maximum(
                        jnp.maximum(c3_ref[pl.ds(r, 1), :],
                                    c3_ref[pl.ds(r + 1, 1), :]),
                        jnp.maximum(c3_ref[pl.ds(r + Wp3, 1), :],
                                    c3_ref[pl.ds(r + Wp3 + 1, 1), :]))
                    s = io * W4 + jo
                    fc_ref[pl.ds(b, 1), pl.ds(s * C3, C3)] = t
        h = jnp.dot(fc_ref[...], wl1_ref[...],
                    preferred_element_type=jnp.float32) + bl1_ref[...]
        # TODO(synk): Dropout(0.2) between linear_1 and output is identity at
        # inference; training-mode dropout is not implemented in the kernel.
        out_ref[...] = (jnp.dot(h, wo_ref[...],
                                preferred_element_type=jnp.float32)
                        + bo_ref[...])

    in_specs = [pl.BlockSpec(memory_space=pltpu.MemorySpace.VMEM)
                for _ in range(11)]
    return pl.pallas_call(
        kernel,
        out_shape=jax.ShapeDtypeStruct((_OUT_ROWS, _LANE), jnp.float32),
        in_specs=in_specs,
        out_specs=pl.BlockSpec(memory_space=pltpu.MemorySpace.VMEM),
        scratch_shapes=[
            pltpu.VMEM((n1, C1), jnp.float32),        # conv1 out (unpadded rows)
            pltpu.VMEM((n2, C1), jnp.float32),        # pool1 out -> conv2 in
            pltpu.VMEM((n2, C2), jnp.float32),        # conv2 out (padded grid)
            pltpu.VMEM((n3, C2), jnp.float32),        # pool2 out -> conv3 in
            pltpu.VMEM((n3, C3), jnp.float32),        # conv3 out (padded grid)
            pltpu.VMEM((_CH, 9 * C1), jnp.float32),   # conv2 im2col staging
            pltpu.VMEM((_CH, 9 * C2), jnp.float32),   # conv3 im2col staging
            pltpu.VMEM((_OUT_ROWS, FLAT), jnp.float32),  # pool3 + flatten tile
        ],
    )


# ----------------------------------------------------------------------------
# Parameters
# ----------------------------------------------------------------------------
def init_params(key):
    ks = jax.random.split(key, 10)
    flat_dim = (IMG_H // 8) * (IMG_W // 8) * C3   # 2*2*128 = 512

    def nrm(k, shape, scale):
        return scale * jax.random.normal(k, shape, dtype=jnp.float32)

    return {
        "w1": nrm(ks[0], (3, 3, 3, C1), 0.10),   "b1": nrm(ks[1], (C1,), 0.01),
        "w2": nrm(ks[2], (3, 3, C1, C2), 0.05),  "b2": nrm(ks[3], (C2,), 0.01),
        "w3": nrm(ks[4], (3, 3, C2, C3), 0.05),  "b3": nrm(ks[5], (C3,), 0.01),
        "wl1": nrm(ks[6], (flat_dim, FC), 0.05), "bl1": nrm(ks[7], (FC,), 0.01),
        "wout": nrm(ks[8], (FC, NUM_CLASSES), 0.05),
        "bout": nrm(ks[9], (NUM_CLASSES,), 0.01),
    }


def pack_kernel_params(params):
    """One-time repack of weights into kernel-friendly layouts (no per-call
    reshape/cast ops; wout/bout zero-padded to a lane-dense width of 128).

    NOTE: layouts assume HWIO conv weights and (h, w, c) flatten order; when
    porting trained PyTorch weights (OIHW, (c, h, w) flatten), transpose
    w1/w2/w3 and permute wl1's rows first."""
    pad_n = _LANE - NUM_CLASSES
    return {
        "w1": params["w1"].reshape(9 * 3, C1),
        "b1": params["b1"].reshape(1, C1),
        "w2": params["w2"].reshape(9 * C1, C2),
        "b2": params["b2"].reshape(1, C2),
        "w3": params["w3"].reshape(9 * C2, C3),
        "b3": params["b3"].reshape(1, C3),
        "wl1": params["wl1"],
        "bl1": params["bl1"].reshape(1, FC),
        "wout": jnp.pad(params["wout"], ((0, 0), (0, pad_n))),
        "bout": jnp.pad(params["bout"], (0, pad_n)).reshape(1, _LANE),
    }


# ----------------------------------------------------------------------------
# Forward pass
# ----------------------------------------------------------------------------
@jax.jit
def dogcat_forward(images_nchw, kparams, targets=None):
    B, Cin_img, H, W = images_nchw.shape
    x = jnp.transpose(images_nchw, (0, 2, 3, 1)).astype(jnp.float32)   # NHWC
    xp = jnp.pad(x, ((0, 0), (1, 1), (1, 1), (0, 0)))
    # conv1-only wrapper-side im2col: Cin=3 is too shallow for the MXU as nine
    # K=3 taps, so build the 27-wide patch once (~55 KB) and do one K=27 dot
    # per chunk in-kernel.  Everything else (tap fusion, pooling, FCs) happens
    # inside the fused kernel with activations resident in VMEM.
    patch = jnp.concatenate(
        [xp[:, kh:kh + H, kw:kw + W, :] for kh in range(3) for kw in range(3)],
        axis=-1).reshape(B * H * W, 9 * Cin_img)

    fwd = _build_fused_forward(B, H, W)
    logits_pad = fwd(patch,
                     kparams["w1"], kparams["b1"],
                     kparams["w2"], kparams["b2"],
                     kparams["w3"], kparams["b3"],
                     kparams["wl1"], kparams["bl1"],
                     kparams["wout"], kparams["bout"])
    logits = logits_pad[:B, :NUM_CLASSES]

    if targets is not None:
        # cross-entropy (mean over batch), matching nn.CrossEntropyLoss
        logp = jax.nn.log_softmax(logits, axis=-1)
        loss = -jnp.mean(jnp.take_along_axis(logp, targets[:, None], axis=-1))
        return logits, loss
    return logits, None


# ----------------------------------------------------------------------------
# Independent pure-JAX/XLA reference (no Pallas) for a correctness check.
# ----------------------------------------------------------------------------
def reference_forward(images_nchw, params):
    x = jnp.transpose(images_nchw, (0, 2, 3, 1)).astype(jnp.float32)
    hi = jax.lax.Precision.HIGHEST

    def conv(x, w, b):
        y = jax.lax.conv_general_dilated(
            x, w, window_strides=(1, 1), padding="SAME",
            dimension_numbers=("NHWC", "HWIO", "NHWC"), precision=hi)
        return jnp.maximum(y + b, 0.0)

    def pool(x):
        return jnp.maximum(
            jnp.maximum(x[:, 0::2, 0::2, :], x[:, 0::2, 1::2, :]),
            jnp.maximum(x[:, 1::2, 0::2, :], x[:, 1::2, 1::2, :]))

    x = pool(conv(x, params["w1"], params["b1"]))
    x = pool(conv(x, params["w2"], params["b2"]))
    x = pool(conv(x, params["w3"], params["b3"]))
    flat = x.reshape(x.shape[0], -1)                      # (h, w, c) flatten
    h = jnp.dot(flat, params["wl1"], precision=hi) + params["bl1"]
    return jnp.dot(h, params["wout"], precision=hi) + params["bout"]


if __name__ == "__main__":
    key = jax.random.PRNGKey(0)
    k_img, k_par = jax.random.split(key)
    images = jax.random.normal(k_img, (BATCH, 3, IMG_H, IMG_W), dtype=jnp.float32)

    params = init_params(k_par)
    kparams = pack_kernel_params(params)

    logits, loss = dogcat_forward(images, kparams)
    logits = jax.block_until_ready(logits)

    ref = reference_forward(images, params)
    assert logits.shape == (BATCH, NUM_CLASSES)
    assert loss is None
    assert jnp.allclose(logits, ref, atol=2e-3, rtol=2e-3), (logits, ref)

    print("KERNEL_OK")
</pallas_src>

<mosaic_0001>
module attributes {stable_mosaic.version = 11 : i64} {
  func.func @kernel(%arg0: memref<512x27xf32, #tpu.memory_space<vmem>>, %arg1: memref<27x32xf32, #tpu.memory_space<vmem>>, %arg2: memref<1x32xf32, #tpu.memory_space<vmem>>, %arg3: memref<288x64xf32, #tpu.memory_space<vmem>>, %arg4: memref<1x64xf32, #tpu.memory_space<vmem>>, %arg5: memref<576x128xf32, #tpu.memory_space<vmem>>, %arg6: memref<1x128xf32, #tpu.memory_space<vmem>>, %arg7: memref<512x128xf32, #tpu.memory_space<vmem>>, %arg8: memref<1x128xf32, #tpu.memory_space<vmem>>, %arg9: memref<128x128xf32, #tpu.memory_space<vmem>>, %arg10: memref<1x128xf32, #tpu.memory_space<vmem>>, %arg11: memref<8x128xf32, #tpu.memory_space<vmem>>, %arg12: memref<512x32xf32, #tpu.memory_space<vmem>>, %arg13: memref<200x32xf32, #tpu.memory_space<vmem>>, %arg14: memref<200x64xf32, #tpu.memory_space<vmem>>, %arg15: memref<72x64xf32, #tpu.memory_space<vmem>>, %arg16: memref<72x128xf32, #tpu.memory_space<vmem>>, %arg17: memref<128x288xf32, #tpu.memory_space<vmem>>, %arg18: memref<128x576xf32, #tpu.memory_space<vmem>>, %arg19: memref<8x512xf32, #tpu.memory_space<vmem>>) attributes {dimension_semantics = [], scalar_prefetch = 0 : i64, scratch_operands = 8 : i64, tpu.core_type = #tpu.core_type<tc>} {
    %c0 = arith.constant 0 : index
    %c0_0 = arith.constant 0 : index
    %0 = vector.load %arg2[%c0, %c0_0] : memref<1x32xf32, #tpu.memory_space<vmem>>, vector<1x32xf32>
    %c0_1 = arith.constant 0 : index
    %c0_2 = arith.constant 0 : index
    %1 = vector.load %arg0[%c0_1, %c0_2] : memref<512x27xf32, #tpu.memory_space<vmem>>, vector<128x27xf32>
    %c0_3 = arith.constant 0 : index
    %c0_4 = arith.constant 0 : index
    %2 = vector.load %arg1[%c0_3, %c0_4] : memref<27x32xf32, #tpu.memory_space<vmem>>, vector<27x32xf32>
    %cst = arith.constant dense<0.000000e+00> : vector<128x32xf32>
    %3 = tpu.matmul %1, %2, %cst {dimension_numbers = #tpu.dot_dimension_numbers<[1], [0], [0], [1], [0, 0, 1, 1], [], []>} : vector<128x27xf32>, vector<27x32xf32>, vector<128x32xf32> -> vector<128x32xf32>
    %4 = vector.broadcast %0 : vector<1x32xf32> to vector<128x32xf32>
    %5 = arith.addf %3, %4 : vector<128x32xf32>
    %cst_5 = arith.constant 0.000000e+00 : f32
    %6 = vector.broadcast %cst_5 : f32 to vector<128x32xf32>
    %7 = arith.maximumf %5, %6 : vector<128x32xf32>
    %c0_6 = arith.constant 0 : index
    %c0_7 = arith.constant 0 : index
    %8 = vector.load %arg12[%c0_6, %c0_7] : memref<512x32xf32, #tpu.memory_space<vmem>>, vector<128x32xf32>
    tpu.vector_store %arg12[%c0_6, %c0_7], %7 {strides = array<i32>} : memref<512x32xf32, #tpu.memory_space<vmem>>, vector<128x32xf32>,
    %c128 = arith.constant 128 : index
    %c0_8 = arith.constant 0 : index
    %9 = vector.load %arg0[%c128, %c0_8] : memref<512x27xf32, #tpu.memory_space<vmem>>, vector<128x27xf32>
    %c0_9 = arith.constant 0 : index
    %c0_10 = arith.constant 0 : index
    %10 = vector.load %arg1[%c0_9, %c0_10] : memref<27x32xf32, #tpu.memory_space<vmem>>, vector<27x32xf32>
    %cst_11 = arith.constant dense<0.000000e+00> : vector<128x32xf32>
    %11 = tpu.matmul %9, %10, %cst_11 {dimension_numbers = #tpu.dot_dimension_numbers<[1], [0], [0], [1], [0, 0, 1, 1], [], []>} : vector<128x27xf32>, vector<27x32xf32>, vector<128x32xf32> -> vector<128x32xf32>
    %12 = vector.broadcast %0 : vector<1x32xf32> to vector<128x32xf32>
    %13 = arith.addf %11, %12 : vector<128x32xf32>
    %cst_12 = arith.constant 0.000000e+00 : f32
    %14 = vector.broadcast %cst_12 : f32 to vector<128x32xf32>
    %15 = arith.maximumf %13, %14 : vector<128x32xf32>
    %c128_13 = arith.constant 128 : index
    %c0_14 = arith.constant 0 : index
    %16 = vector.load %arg12[%c128_13, %c0_14] : memref<512x32xf32, #tpu.memory_space<vmem>>, vector<128x32xf32>
    tpu.vector_store %arg12[%c128_13, %c0_14], %15 {strides = array<i32>} : memref<512x32xf32, #tpu.memory_space<vmem>>, vector<128x32xf32>,
    %c256 = arith.constant 256 : index
    %c0_15 = arith.constant 0 : index
    %17 = vector.load %arg0[%c256, %c0_15] : memref<512x27xf32, #tpu.memory_space<vmem>>, vector<128x27xf32>
    %c0_16 = arith.constant 0 : index
    %c0_17 = arith.constant 0 : index
    %18 = vector.load %arg1[%c0_16, %c0_17] : memref<27x32xf32, #tpu.memory_space<vmem>>, vector<27x32xf32>
    %cst_18 = arith.constant dense<0.000000e+00> : vector<128x32xf32>
    %19 = tpu.matmul %17, %18, %cst_18 {dimension_numbers = #tpu.dot_dimension_numbers<[1], [0], [0], [1], [0, 0, 1, 1], [], []>} : vector<128x27xf32>, vector<27x32xf32>, vector<128x32xf32> -> vector<128x32xf32>
    %20 = vector.broadcast %0 : vector<1x32xf32> to vector<128x32xf32>
    %21 = arith.addf %19, %20 : vector<128x32xf32>
    %cst_19 = arith.constant 0.000000e+00 : f32
    %22 = vector.broadcast %cst_19 : f32 to vector<128x32xf32>
    %23 = arith.maximumf %21, %22 : vector<128x32xf32>
    %c256_20 = arith.constant 256 : index
    %c0_21 = arith.constant 0 : index
    %24 = vector.load %arg12[%c256_20, %c0_21] : memref<512x32xf32, #tpu.memory_space<vmem>>, vector<128x32xf32>
    tpu.vector_store %arg12[%c256_20, %c0_21], %23 {strides = array<i32>} : memref<512x32xf32, #tpu.memory_space<vmem>>, vector<128x32xf32>,
    %c384 = arith.constant 384 : index
    %c0_22 = arith.constant 0 : index
    %25 = vector.load %arg0[%c384, %c0_22] : memref<512x27xf32, #tpu.memory_space<vmem>>, vector<128x27xf32>
    %c0_23 = arith.constant 0 : index
    %c0_24 = arith.constant 0 : index
    %26 = vector.load %arg1[%c0_23, %c0_24] : memref<27x32xf32, #tpu.memory_space<vmem>>, vector<27x32xf32>
    %cst_25 = arith.constant dense<0.000000e+00> : vector<128x32xf32>
    %27 = tpu.matmul %25, %26, %cst_25 {dimension_numbers = #tpu.dot_dimension_numbers<[1], [0], [0], [1], [0, 0, 1, 1], [], []>} : vector<128x27xf32>, vector<27x32xf32>, vector<128x32xf32> -> vector<128x32xf32>
    %28 = vector.broadcast %0 : vector<1x32xf32> to vector<128x32xf32>
    %29 = arith.addf %27, %28 : vector<128x32xf32>
    %cst_26 = arith.constant 0.000000e+00 : f32
    %30 = vector.broadcast %cst_26 : f32 to vector<128x32xf32>
    %31 = arith.maximumf %29, %30 : vector<128x32xf32>
    %c384_27 = arith.constant 384 : index
    %c0_28 = arith.constant 0 : index
    %32 = vector.load %arg12[%c384_27, %c0_28] : memref<512x32xf32, #tpu.memory_space<vmem>>, vector<128x32xf32>
    tpu.vector_store %arg12[%c384_27, %c0_28], %31 {strides = array<i32>} : memref<512x32xf32, #tpu.memory_space<vmem>>, vector<128x32xf32>,
    %cst_29 = arith.constant 0.000000e+00 : f32
    %33 = vector.broadcast %cst_29 : f32 to vector<1x32xf32>
    %cst_30 = arith.constant 0.000000e+00 : f32
    %34 = vector.broadcast %cst_30 : f32 to vector<10x32xf32>
    %c0_31 = arith.constant 0 : index
    %c0_32 = arith.constant 0 : index
    %35 = vector.load %arg13[%c0_31, %c0_32] : memref<200x32xf32, #tpu.memory_space<vmem>>, vector<10x32xf32>
    tpu.vector_store %arg13[%c0_31, %c0_32], %34 {strides = array<i32>} : memref<200x32xf32, #tpu.memory_space<vmem>>, vector<10x32xf32>,
    %c90 = arith.constant 90 : index
    %c0_33 = arith.constant 0 : index
    %36 = vector.load %arg13[%c90, %c0_33] : memref<200x32xf32, #tpu.memory_space<vmem>>, vector<10x32xf32>
    tpu.vector_store %arg13[%c90, %c0_33], %34 {strides = array<i32>} : memref<200x32xf32, #tpu.memory_space<vmem>>, vector<10x32xf32>,
    %c0_34 = arith.constant 0 : index
    %c0_35 = arith.constant 0 : index
    %37 = tpu.strided_load %arg12[%c0_34, %c0_35] {strides = array<i32: 2, 1>} : memref<512x32xf32, #tpu.memory_space<vmem>>, vector<8x32xf32>
    %c1 = arith.constant 1 : index
    %c0_36 = arith.constant 0 : index
    %38 = tpu.strided_load %arg12[%c1, %c0_36] {strides = array<i32: 2, 1>} : memref<512x32xf32, #tpu.memory_space<vmem>>, vector<8x32xf32>
    %39 = arith.maximumf %37, %38 : vector<8x32xf32>
    %c16 = arith.constant 16 : index
    %c0_37 = arith.constant 0 : index
    %40 = tpu.strided_load %arg12[%c16, %c0_37] {strides = array<i32: 2, 1>} : memref<512x32xf32, #tpu.memory_space<vmem>>, vector<8x32xf32>
    %c17 = arith.constant 17 : index
    %c0_38 = arith.constant 0 : index
    %41 = tpu.strided_load %arg12[%c17, %c0_38] {strides = array<i32: 2, 1>} : memref<512x32xf32, #tpu.memory_space<vmem>>, vector<8x32xf32>
    %42 = arith.maximumf %40, %41 : vector<8x32xf32>
    %43 = arith.maximumf %39, %42 : vector<8x32xf32>
    %44 = tpu.concatenate %33, %43, %33 in 0 : vector<1x32xf32>, vector<8x32xf32>, vector<1x32xf32> -> vector<10x32xf32>
    %c10 = arith.constant 10 : index
    %c0_39 = arith.constant 0 : index
    %45 = vector.load %arg13[%c10, %c0_39] : memref<200x32xf32, #tpu.memory_space<vmem>>, vector<10x32xf32>
    tpu.vector_store %arg13[%c10, %c0_39], %44 {strides = array<i32>} : memref<200x32xf32, #tpu.memory_space<vmem>>, vector<10x32xf32>,
    %c32 = arith.constant 32 : index
    %c0_40 = arith.constant 0 : index
    %46 = tpu.strided_load %arg12[%c32, %c0_40] {strides = array<i32: 2, 1>} : memref<512x32xf32, #tpu.memory_space<vmem>>, vector<8x32xf32>
    %c33 = arith.constant 33 : index
    %c0_41 = arith.constant 0 : index
    %47 = tpu.strided_load %arg12[%c33, %c0_41] {strides = array<i32: 2, 1>} : memref<512x32xf32, #tpu.memory_space<vmem>>, vector<8x32xf32>
    %48 = arith.maximumf %46, %47 : vector<8x32xf32>
    %c48 = arith.constant 48 : index
    %c0_42 = arith.constant 0 : index
    %49 = tpu.strided_load %arg12[%c48, %c0_42] {strides = array<i32: 2, 1>} : memref<512x32xf32, #tpu.memory_space<vmem>>, vector<8x32xf32>
    %c49 = arith.constant 49 : index
    %c0_43 = arith.constant 0 : index
    %50 = tpu.strided_load %arg12[%c49, %c0_43] {strides = array<i32: 2, 1>} : memref<512x32xf32, #tpu.memory_space<vmem>>, vector<8x32xf32>
    %51 = arith.maximumf %49, %50 : vector<8x32xf32>
    %52 = arith.maximumf %48, %51 : vector<8x32xf32>
    %53 = tpu.concatenate %33, %52, %33 in 0 : vector<1x32xf32>, vector<8x32xf32>, vector<1x32xf32> -> vector<10x32xf32>
    %c20 = arith.constant 20 : index
    %c0_44 = arith.constant 0 : index
    %54 = vector.load %arg13[%c20, %c0_44] : memref<200x32xf32, #tpu.memory_space<vmem>>, vector<10x32xf32>
    tpu.vector_store %arg13[%c20, %c0_44], %53 {strides = array<i32>} : memref<200x32xf32, #tpu.memory_space<vmem>>, vector<10x32xf32>,
    %c64 = arith.constant 64 : index
    %c0_45 = arith.constant 0 : index
    %55 = tpu.strided_load %arg12[%c64, %c0_45] {strides = array<i32: 2, 1>} : memref<512x32xf32, #tpu.memory_space<vmem>>, vector<8x32xf32>
    %c65 = arith.constant 65 : index
    %c0_46 = arith.constant 0 : index
    %56 = tpu.strided_load %arg12[%c65, %c0_46] {strides = array<i32: 2, 1>} : memref<512x32xf32, #tpu.memory_space<vmem>>, vector<8x32xf32>
    %57 = arith.maximumf %55, %56 : vector<8x32xf32>
    %c80 = arith.constant 80 : index
    %c0_47 = arith.constant 0 : index
    %58 = tpu.strided_load %arg12[%c80, %c0_47] {strides = array<i32: 2, 1>} : memref<512x32xf32, #tpu.memory_space<vmem>>, vector<8x32xf32>
    %c81 = arith.constant 81 : index
    %c0_48 = arith.constant 0 : index
    %59 = tpu.strided_load %arg12[%c81, %c0_48] {strides = array<i32: 2, 1>} : memref<512x32xf32, #tpu.memory_space<vmem>>, vector<8x32xf32>
    %60 = arith.maximumf %58, %59 : vector<8x32xf32>
    %61 = arith.maximumf %57, %60 : vector<8x32xf32>
    %62 = tpu.concatenate %33, %61, %33 in 0 : vector<1x32xf32>, vector<8x32xf32>, vector<1x32xf32> -> vector<10x32xf32>
    %c30 = arith.constant 30 : index
    %c0_49 = arith.constant 0 : index
    %63 = vector.load %arg13[%c30, %c0_49] : memref<200x32xf32, #tpu.memory_space<vmem>>, vector<10x32xf32>
    tpu.vector_store %arg13[%c30, %c0_49], %62 {strides = array<i32>} : memref<200x32xf32, #tpu.memory_space<vmem>>, vector<10x32xf32>,
    %c96 = arith.constant 96 : index
    %c0_50 = arith.constant 0 : index
    %64 = tpu.strided_load %arg12[%c96, %c0_50] {strides = array<i32: 2, 1>} : memref<512x32xf32, #tpu.memory_space<vmem>>, vector<8x32xf32>
    %c97 = arith.constant 97 : index
    %c0_51 = arith.constant 0 : index
    %65 = tpu.strided_load %arg12[%c97, %c0_51] {strides = array<i32: 2, 1>} : memref<512x32xf32, #tpu.memory_space<vmem>>, vector<8x32xf32>
    %66 = arith.maximumf %64, %65 : vector<8x32xf32>
    %c112 = arith.constant 112 : index
    %c0_52 = arith.constant 0 : index
    %67 = tpu.strided_load %arg12[%c112, %c0_52] {strides = array<i32: 2, 1>} : memref<512x32xf32, #tpu.memory_space<vmem>>, vector<8x32xf32>
    %c113 = arith.constant 113 : index
    %c0_53 = arith.constant 0 : index
    %68 = tpu.strided_load %arg12[%c113, %c0_53] {strides = array<i32: 2, 1>} : memref<512x32xf32, #tpu.memory_space<vmem>>, vector<8x32xf32>
    %69 = arith.maximumf %67, %68 : vector<8x32xf32>
    %70 = arith.maximumf %66, %69 : vector<8x32xf32>
    %71 = tpu.concatenate %33, %70, %33 in 0 : vector<1x32xf32>, vector<8x32xf32>, vector<1x32xf32> -> vector<10x32xf32>
    %c40 = arith.constant 40 : index
    %c0_54 = arith.constant 0 : index
    %72 = vector.load %arg13[%c40, %c0_54] : memref<200x32xf32, #tpu.memory_space<vmem>>, vector<10x32xf32>
    tpu.vector_store %arg13[%c40, %c0_54], %71 {strides = array<i32>} : memref<200x32xf32, #tpu.memory_space<vmem>>, vector<10x32xf32>,
    %c128_55 = arith.constant 128 : index
    %c0_56 = arith.constant 0 : index
    %73 = tpu.strided_load %arg12[%c128_55, %c0_56] {strides = array<i32: 2, 1>} : memref<512x32xf32, #tpu.memory_space<vmem>>, vector<8x32xf32>
    %c129 = arith.constant 129 : index
    %c0_57 = arith.constant 0 : index
    %74 = tpu.strided_load %arg12[%c129, %c0_57] {strides = array<i32: 2, 1>} : memref<512x32xf32, #tpu.memory_space<vmem>>, vector<8x32xf32>
    %75 = arith.maximumf %73, %74 : vector<8x32xf32>
    %c144 = arith.constant 144 : index
    %c0_58 = arith.constant 0 : index
    %76 = tpu.strided_load %arg12[%c144, %c0_58] {strides = array<i32: 2, 1>} : memref<512x32xf32, #tpu.memory_space<vmem>>, vector<8x32xf32>
    %c145 = arith.constant 145 : index
    %c0_59 = arith.constant 0 : index
    %77 = tpu.strided_load %arg12[%c145, %c0_59] {strides = array<i32: 2, 1>} : memref<512x32xf32, #tpu.memory_space<vmem>>, vector<8x32xf32>
    %78 = arith.maximumf %76, %77 : vector<8x32xf32>
    %79 = arith.maximumf %75, %78 : vector<8x32xf32>
    %80 = tpu.concatenate %33, %79, %33 in 0 : vector<1x32xf32>, vector<8x32xf32>, vector<1x32xf32> -> vector<10x32xf32>
    %c50 = arith.constant 50 : index
    %c0_60 = arith.constant 0 : index
    %81 = vector.load %arg13[%c50, %c0_60] : memref<200x32xf32, #tpu.memory_space<vmem>>, vector<10x32xf32>
    tpu.vector_store %arg13[%c50, %c0_60], %80 {strides = array<i32>} : memref<200x32xf32, #tpu.memory_space<vmem>>, vector<10x32xf32>,
    %c160 = arith.constant 160 : index
    %c0_61 = arith.constant 0 : index
    %82 = tpu.strided_load %arg12[%c160, %c0_61] {strides = array<i32: 2, 1>} : memref<512x32xf32, #tpu.memory_space<vmem>>, vector<8x32xf32>
    %c161 = arith.constant 161 : index
    %c0_62 = arith.constant 0 : index
    %83 = tpu.strided_load %arg12[%c161, %c0_62] {strides = array<i32: 2, 1>} : memref<512x32xf32, #tpu.memory_space<vmem>>, vector<8x32xf32>
    %84 = arith.maximumf %82, %83 : vector<8x32xf32>
    %c176 = arith.constant 176 : index
    %c0_63 = arith.constant 0 : index
    %85 = tpu.strided_load %arg12[%c176, %c0_63] {strides = array<i32: 2, 1>} : memref<512x32xf32, #tpu.memory_space<vmem>>, vector<8x32xf32>
    %c177 = arith.constant 177 : index
    %c0_64 = arith.constant 0 : index
    %86 = tpu.strided_load %arg12[%c177, %c0_64] {strides = array<i32: 2, 1>} : memref<512x32xf32, #tpu.memory_space<vmem>>, vector<8x32xf32>
    %87 = arith.maximumf %85, %86 : vector<8x32xf32>
    %88 = arith.maximumf %84, %87 : vector<8x32xf32>
    %89 = tpu.concatenate %33, %88, %33 in 0 : vector<1x32xf32>, vector<8x32xf32>, vector<1x32xf32> -> vector<10x32xf32>
    %c60 = arith.constant 60 : index
    %c0_65 = arith.constant 0 : index
    %90 = vector.load %arg13[%c60, %c0_65] : memref<200x32xf32, #tpu.memory_space<vmem>>, vector<10x32xf32>
    tpu.vector_store %arg13[%c60, %c0_65], %89 {strides = array<i32>} : memref<200x32xf32, #tpu.memory_space<vmem>>, vector<10x32xf32>,
    %c192 = arith.constant 192 : index
    %c0_66 = arith.constant 0 : index
    %91 = tpu.strided_load %arg12[%c192, %c0_66] {strides = array<i32: 2, 1>} : memref<512x32xf32, #tpu.memory_space<vmem>>, vector<8x32xf32>
    %c193 = arith.constant 193 : index
    %c0_67 = arith.constant 0 : index
    %92 = tpu.strided_load %arg12[%c193, %c0_67] {strides = array<i32: 2, 1>} : memref<512x32xf32, #tpu.memory_space<vmem>>, vector<8x32xf32>
    %93 = arith.maximumf %91, %92 : vector<8x32xf32>
    %c208 = arith.constant 208 : index
    %c0_68 = arith.constant 0 : index
    %94 = tpu.strided_load %arg12[%c208, %c0_68] {strides = array<i32: 2, 1>} : memref<512x32xf32, #tpu.memory_space<vmem>>, vector<8x32xf32>
    %c209 = arith.constant 209 : index
    %c0_69 = arith.constant 0 : index
    %95 = tpu.strided_load %arg12[%c209, %c0_69] {strides = array<i32: 2, 1>} : memref<512x32xf32, #tpu.memory_space<vmem>>, vector<8x32xf32>
    %96 = arith.maximumf %94, %95 : vector<8x32xf32>
    %97 = arith.maximumf %93, %96 : vector<8x32xf32>
    %98 = tpu.concatenate %33, %97, %33 in 0 : vector<1x32xf32>, vector<8x32xf32>, vector<1x32xf32> -> vector<10x32xf32>
    %c70 = arith.constant 70 : index
    %c0_70 = arith.constant 0 : index
    %99 = vector.load %arg13[%c70, %c0_70] : memref<200x32xf32, #tpu.memory_space<vmem>>, vector<10x32xf32>
    tpu.vector_store %arg13[%c70, %c0_70], %98 {strides = array<i32>} : memref<200x32xf32, #tpu.memory_space<vmem>>, vector<10x32xf32>,
    %c224 = arith.constant 224 : index
    %c0_71 = arith.constant 0 : index
    %100 = tpu.strided_load %arg12[%c224, %c0_71] {strides = array<i32: 2, 1>} : memref<512x32xf32, #tpu.memory_space<vmem>>, vector<8x32xf32>
    %c225 = arith.constant 225 : index
    %c0_72 = arith.constant 0 : index
    %101 = tpu.strided_load %arg12[%c225, %c0_72] {strides = array<i32: 2, 1>} : memref<512x32xf32, #tpu.memory_space<vmem>>, vector<8x32xf32>
    %102 = arith.maximumf %100, %101 : vector<8x32xf32>
    %c240 = arith.constant 240 : index
    %c0_73 = arith.constant 0 : index
    %103 = tpu.strided_load %arg12[%c240, %c0_73] {strides = array<i32: 2, 1>} : memref<512x32xf32, #tpu.memory_space<vmem>>, vector<8x32xf32>
    %c241 = arith.constant 241 : index
    %c0_74 = arith.constant 0 : index
    %104 = tpu.strided_load %arg12[%c241, %c0_74] {strides = array<i32: 2, 1>} : memref<512x32xf32, #tpu.memory_space<vmem>>, vector<8x32xf32>
    %105 = arith.maximumf %103, %104 : vector<8x32xf32>
    %106 = arith.maximumf %102, %105 : vector<8x32xf32>
    %107 = tpu.concatenate %33, %106, %33 in 0 : vector<1x32xf32>, vector<8x32xf32>, vector<1x32xf32> -> vector<10x32xf32>
    %c80_75 = arith.constant 80 : index
    %c0_76 = arith.constant 0 : index
    %108 = vector.load %arg13[%c80_75, %c0_76] : memref<200x32xf32, #tpu.memory_space<vmem>>, vector<10x32xf32>
    tpu.vector_store %arg13[%c80_75, %c0_76], %107 {strides = array<i32>} : memref<200x32xf32, #tpu.memory_space<vmem>>, vector<10x32xf32>,
    %c100 = arith.constant 100 : index
    %c0_77 = arith.constant 0 : index
    %109 = vector.load %arg13[%c100, %c0_77] : memref<200x32xf32, #tpu.memory_space<vmem>>, vector<10x32xf32>
    tpu.vector_store %arg13[%c100, %c0_77], %34 {strides = array<i32>} : memref<200x32xf32, #tpu.memory_space<vmem>>, vector<10x32xf32>,
    %c190 = arith.constant 190 : index
    %c0_78 = arith.constant 0 : index
    %110 = vector.load %arg13[%c190, %c0_78] : memref<200x32xf32, #tpu.memory_space<vmem>>, vector<10x32xf32>
    tpu.vector_store %arg13[%c190, %c0_78], %34 {strides = array<i32>} : memref<200x32xf32, #tpu.memory_space<vmem>>, vector<10x32xf32>,
    %c256_79 = arith.constant 256 : index
    %c0_80 = arith.constant 0 : index
    %111 = tpu.strided_load %arg12[%c256_79, %c0_80] {strides = array<i32: 2, 1>} : memref<512x32xf32, #tpu.memory_space<vmem>>, vector<8x32xf32>
    %c257 = arith.constant 257 : index
    %c0_81 = arith.constant 0 : index
    %112 = tpu.strided_load %arg12[%c257, %c0_81] {strides = array<i32: 2, 1>} : memref<512x32xf32, #tpu.memory_space<vmem>>, vector<8x32xf32>
    %113 = arith.maximumf %111, %112 : vector<8x32xf32>
    %c272 = arith.constant 272 : index
    %c0_82 = arith.constant 0 : index
    %114 = tpu.strided_load %arg12[%c272, %c0_82] {strides = array<i32: 2, 1>} : memref<512x32xf32, #tpu.memory_space<vmem>>, vector<8x32xf32>
    %c273 = arith.constant 273 : index
    %c0_83 = arith.constant 0 : index
    %115 = tpu.strided_load %arg12[%c273, %c0_83] {strides = array<i32: 2, 1>} : memref<512x32xf32, #tpu.memory_space<vmem>>, vector<8x32xf32>
    %116 = arith.maximumf %114, %115 : vector<8x32xf32>
    %117 = arith.maximumf %113, %116 : vector<8x32xf32>
    %118 = tpu.concatenate %33, %117, %33 in 0 : vector<1x32xf32>, vector<8x32xf32>, vector<1x32xf32> -> vector<10x32xf32>
    %c110 = arith.constant 110 : index
    %c0_84 = arith.constant 0 : index
    %119 = vector.load %arg13[%c110, %c0_84] : memref<200x32xf32, #tpu.memory_space<vmem>>, vector<10x32xf32>
    tpu.vector_store %arg13[%c110, %c0_84], %118 {strides = array<i32>} : memref<200x32xf32, #tpu.memory_space<vmem>>, vector<10x32xf32>,
    %c288 = arith.constant 288 : index
    %c0_85 = arith.constant 0 : index
    %120 = tpu.strided_load %arg12[%c288, %c0_85] {strides = array<i32: 2, 1>} : memref<512x32xf32, #tpu.memory_space<vmem>>, vector<8x32xf32>
    %c289 = arith.constant 289 : index
    %c0_86 = arith.constant 0 : index
    %121 = tpu.strided_load %arg12[%c289, %c0_86] {strides = array<i32: 2, 1>} : memref<512x32xf32, #tpu.memory_space<vmem>>, vector<8x32xf32>
    %122 = arith.maximumf %120, %121 : vector<8x32xf32>
    %c304 = arith.constant 304 : index
    %c0_87 = arith.constant 0 : index
    %123 = tpu.strided_load %arg12[%c304, %c0_87] {strides = array<i32: 2, 1>} : memref<512x32xf32, #tpu.memory_space<vmem>>, vector<8x32xf32>
    %c305 = arith.constant 305 : index
    %c0_88 = arith.constant 0 : index
    %124 = tpu.strided_load %arg12[%c305, %c0_88] {strides = array<i32: 2, 1>} : memref<512x32xf32, #tpu.memory_space<vmem>>, vector<8x32xf32>
    %125 = arith.maximumf %123, %124 : vector<8x32xf32>
    %126 = arith.maximumf %122, %125 : vector<8x32xf32>
    %127 = tpu.concatenate %33, %126, %33 in 0 : vector<1x32xf32>, vector<8x32xf32>, vector<1x32xf32> -> vector<10x32xf32>
    %c120 = arith.constant 120 : index
    %c0_89 = arith.constant 0 : index
    %128 = vector.load %arg13[%c120, %c0_89] : memref<200x32xf32, #tpu.memory_space<vmem>>, vector<10x32xf32>
    tpu.vector_store %arg13[%c120, %c0_89], %127 {strides = array<i32>} : memref<200x32xf32, #tpu.memory_space<vmem>>, vector<10x32xf32>,
    %c320 = arith.constant 320 : index
    %c0_90 = arith.constant 0 : index
    %129 = tpu.strided_load %arg12[%c320, %c0_90] {strides = array<i32: 2, 1>} : memref<512x32xf32, #tpu.memory_space<vmem>>, vector<8x32xf32>
    %c321 = arith.constant 321 : index
    %c0_91 = arith.constant 0 : index
    %130 = tpu.strided_load %arg12[%c321, %c0_91] {strides = array<i32: 2, 1>} : memref<512x32xf32, #tpu.memory_space<vmem>>, vector<8x32xf32>
    %131 = arith.maximumf %129, %130 : vector<8x32xf32>
    %c336 = arith.constant 336 : index
    %c0_92 = arith.constant 0 : index
    %132 = tpu.strided_load %arg12[%c336, %c0_92] {strides = array<i32: 2, 1>} : memref<512x32xf32, #tpu.memory_space<vmem>>, vector<8x32xf32>
    %c337 = arith.constant 337 : index
    %c0_93 = arith.constant 0 : index
    %133 = tpu.strided_load %arg12[%c337, %c0_93] {strides = array<i32: 2, 1>} : memref<512x32xf32, #tpu.memory_space<vmem>>, vector<8x32xf32>
    %134 = arith.maximumf %132, %133 : vector<8x32xf32>
    %135 = arith.maximumf %131, %134 : vector<8x32xf32>
    %136 = tpu.concatenate %33, %135, %33 in 0 : vector<1x32xf32>, vector<8x32xf32>, vector<1x32xf32> -> vector<10x32xf32>
    %c130 = arith.constant 130 : index
    %c0_94 = arith.constant 0 : index
    %137 = vector.load %arg13[%c130, %c0_94] : memref<200x32xf32, #tpu.memory_space<vmem>>, vector<10x32xf32>
    tpu.vector_store %arg13[%c130, %c0_94], %136 {strides = array<i32>} : memref<200x32xf32, #tpu.memory_space<vmem>>, vector<10x32xf32>,
    %c352 = arith.constant 352 : index
    %c0_95 = arith.constant 0 : index
    %138 = tpu.strided_load %arg12[%c352, %c0_95] {strides = array<i32: 2, 1>} : memref<512x32xf32, #tpu.memory_space<vmem>>, vector<8x32xf32>
    %c353 = arith.constant 353 : index
    %c0_96 = arith.constant 0 : index
    %139 = tpu.strided_load %arg12[%c353, %c0_96] {strides = array<i32: 2, 1>} : memref<512x32xf32, #tpu.memory_space<vmem>>, vector<8x32xf32>
    %140 = arith.maximumf %138, %139 : vector<8x32xf32>
    %c368 = arith.constant 368 : index
    %c0_97 = arith.constant 0 : index
    %141 = tpu.strided_load %arg12[%c368, %c0_97] {strides = array<i32: 2, 1>} : memref<512x32xf32, #tpu.memory_space<vmem>>, vector<8x32xf32>
    %c369 = arith.constant 369 : index
    %c0_98 = arith.constant 0 : index
    %142 = tpu.strided_load %arg12[%c369, %c0_98] {strides = array<i32: 2, 1>} : memref<512x32xf32, #tpu.memory_space<vmem>>, vector<8x32xf32>
    %143 = arith.maximumf %141, %142 : vector<8x32xf32>
    %144 = arith.maximumf %140, %143 : vector<8x32xf32>
    %145 = tpu.concatenate %33, %144, %33 in 0 : vector<1x32xf32>, vector<8x32xf32>, vector<1x32xf32> -> vector<10x32xf32>
    %c140 = arith.constant 140 : index
    %c0_99 = arith.constant 0 : index
    %146 = vector.load %arg13[%c140, %c0_99] : memref<200x32xf32, #tpu.memory_space<vmem>>, vector<10x32xf32>
    tpu.vector_store %arg13[%c140, %c0_99], %145 {strides = array<i32>} : memref<200x32xf32, #tpu.memory_space<vmem>>, vector<10x32xf32>,
    %c384_100 = arith.constant 384 : index
    %c0_101 = arith.constant 0 : index
    %147 = tpu.strided_load %arg12[%c384_100, %c0_101] {strides = array<i32: 2, 1>} : memref<512x32xf32, #tpu.memory_space<vmem>>, vector<8x32xf32>
    %c385 = arith.constant 385 : index
    %c0_102 = arith.constant 0 : index
    %148 = tpu.strided_load %arg12[%c385, %c0_102] {strides = array<i32: 2, 1>} : memref<512x32xf32, #tpu.memory_space<vmem>>, vector<8x32xf32>
    %149 = arith.maximumf %147, %148 : vector<8x32xf32>
    %c400 = arith.constant 400 : index
    %c0_103 = arith.constant 0 : index
    %150 = tpu.strided_load %arg12[%c400, %c0_103] {strides = array<i32: 2, 1>} : memref<512x32xf32, #tpu.memory_space<vmem>>, vector<8x32xf32>
    %c401 = arith.constant 401 : index
    %c0_104 = arith.constant 0 : index
    %151 = tpu.strided_load %arg12[%c401, %c0_104] {strides = array<i32: 2, 1>} : memref<512x32xf32, #tpu.memory_space<vmem>>, vector<8x32xf32>
    %152 = arith.maximumf %150, %151 : vector<8x32xf32>
    %153 = arith.maximumf %149, %152 : vector<8x32xf32>
    %154 = tpu.concatenate %33, %153, %33 in 0 : vector<1x32xf32>, vector<8x32xf32>, vector<1x32xf32> -> vector<10x32xf32>
    %c150 = arith.constant 150 : index
    %c0_105 = arith.constant 0 : index
    %155 = vector.load %arg13[%c150, %c0_105] : memref<200x32xf32, #tpu.memory_space<vmem>>, vector<10x32xf32>
    tpu.vector_store %arg13[%c150, %c0_105], %154 {strides = array<i32>} : memref<200x32xf32, #tpu.memory_space<vmem>>, vector<10x32xf32>,
    %c416 = arith.constant 416 : index
    %c0_106 = arith.constant 0 : index
    %156 = tpu.strided_load %arg12[%c416, %c0_106] {strides = array<i32: 2, 1>} : memref<512x32xf32, #tpu.memory_space<vmem>>, vector<8x32xf32>
    %c417 = arith.constant 417 : index
    %c0_107 = arith.constant 0 : index
    %157 = tpu.strided_load %arg12[%c417, %c0_107] {strides = array<i32: 2, 1>} : memref<512x32xf32, #tpu.memory_space<vmem>>, vector<8x32xf32>
    %158 = arith.maximumf %156, %157 : vector<8x32xf32>
    %c432 = arith.constant 432 : index
    %c0_108 = arith.constant 0 : index
    %159 = tpu.strided_load %arg12[%c432, %c0_108] {strides = array<i32: 2, 1>} : memref<512x32xf32, #tpu.memory_space<vmem>>, vector<8x32xf32>
    %c433 = arith.constant 433 : index
    %c0_109 = arith.constant 0 : index
    %160 = tpu.strided_load %arg12[%c433, %c0_109] {strides = array<i32: 2, 1>} : memref<512x32xf32, #tpu.memory_space<vmem>>, vector<8x32xf32>
    %161 = arith.maximumf %159, %160 : vector<8x32xf32>
    %162 = arith.maximumf %158, %161 : vector<8x32xf32>
    %163 = tpu.concatenate %33, %162, %33 in 0 : vector<1x32xf32>, vector<8x32xf32>, vector<1x32xf32> -> vector<10x32xf32>
    %c160_110 = arith.constant 160 : index
    %c0_111 = arith.constant 0 : index
    %164 = vector.load %arg13[%c160_110, %c0_111] : memref<200x32xf32, #tpu.memory_space<vmem>>, vector<10x32xf32>
    tpu.vector_store %arg13[%c160_110, %c0_111], %163 {strides = array<i32>} : memref<200x32xf32, #tpu.memory_space<vmem>>, vector<10x32xf32>,
    %c448 = arith.constant 448 : index
    %c0_112 = arith.constant 0 : index
    %165 = tpu.strided_load %arg12[%c448, %c0_112] {strides = array<i32: 2, 1>} : memref<512x32xf32, #tpu.memory_space<vmem>>, vector<8x32xf32>
    %c449 = arith.constant 449 : index
    %c0_113 = arith.constant 0 : index
    %166 = tpu.strided_load %arg12[%c449, %c0_113] {strides = array<i32: 2, 1>} : memref<512x32xf32, #tpu.memory_space<vmem>>, vector<8x32xf32>
    %167 = arith.maximumf %165, %166 : vector<8x32xf32>
    %c464 = arith.constant 464 : index
    %c0_114 = arith.constant 0 : index
    %168 = tpu.strided_load %arg12[%c464, %c0_114] {strides = array<i32: 2, 1>} : memref<512x32xf32, #tpu.memory_space<vmem>>, vector<8x32xf32>
    %c465 = arith.constant 465 : index
    %c0_115 = arith.constant 0 : index
    %169 = tpu.strided_load %arg12[%c465, %c0_115] {strides = array<i32: 2, 1>} : memref<512x32xf32, #tpu.memory_space<vmem>>, vector<8x32xf32>
    %170 = arith.maximumf %168, %169 : vector<8x32xf32>
    %171 = arith.maximumf %167, %170 : vector<8x32xf32>
    %172 = tpu.concatenate %33, %171, %33 in 0 : vector<1x32xf32>, vector<8x32xf32>, vector<1x32xf32> -> vector<10x32xf32>
    %c170 = arith.constant 170 : index
    %c0_116 = arith.constant 0 : index
    %173 = vector.load %arg13[%c170, %c0_116] : memref<200x32xf32, #tpu.memory_space<vmem>>, vector<10x32xf32>
    tpu.vector_store %arg13[%c170, %c0_116], %172 {strides = array<i32>} : memref<200x32xf32, #tpu.memory_space<vmem>>, vector<10x32xf32>,
    %c480 = arith.constant 480 : index
    %c0_117 = arith.constant 0 : index
    %174 = tpu.strided_load %arg12[%c480, %c0_117] {strides = array<i32: 2, 1>} : memref<512x32xf32, #tpu.memory_space<vmem>>, vector<8x32xf32>
    %c481 = arith.constant 481 : index
    %c0_118 = arith.constant 0 : index
    %175 = tpu.strided_load %arg12[%c481, %c0_118] {strides = array<i32: 2, 1>} : memref<512x32xf32, #tpu.memory_space<vmem>>, vector<8x32xf32>
    %176 = arith.maximumf %174, %175 : vector<8x32xf32>
    %c496 = arith.constant 496 : index
    %c0_119 = arith.constant 0 : index
    %177 = tpu.strided_load %arg12[%c496, %c0_119] {strides = array<i32: 2, 1>} : memref<512x32xf32, #tpu.memory_space<vmem>>, vector<8x32xf32>
    %c497 = arith.constant 497 : index
    %c0_120 = arith.constant 0 : index
    %178 = tpu.strided_load %arg12[%c497, %c0_120] {strides = array<i32: 2, 1>} : memref<512x32xf32, #tpu.memory_space<vmem>>, vector<8x32xf32>
    %179 = arith.maximumf %177, %178 : vector<8x32xf32>
    %180 = arith.maximumf %176, %179 : vector<8x32xf32>
    %181 = tpu.concatenate %33, %180, %33 in 0 : vector<1x32xf32>, vector<8x32xf32>, vector<1x32xf32> -> vector<10x32xf32>
    %c180 = arith.constant 180 : index
    %c0_121 = arith.constant 0 : index
    %182 = vector.load %arg13[%c180, %c0_121] : memref<200x32xf32, #tpu.memory_space<vmem>>, vector<10x32xf32>
    tpu.vector_store %arg13[%c180, %c0_121], %181 {strides = array<i32>} : memref<200x32xf32, #tpu.memory_space<vmem>>, vector<10x32xf32>,
    %c0_122 = arith.constant 0 : index
    %c0_123 = arith.constant 0 : index
    %183 = vector.load %arg4[%c0_122, %c0_123] : memref<1x64xf32, #tpu.memory_space<vmem>>, vector<1x64xf32>
    %c0_124 = arith.constant 0 : index
    %c0_125 = arith.constant 0 : index
    %184 = vector.load %arg13[%c0_124, %c0_125] : memref<200x32xf32, #tpu.memory_space<vmem>>, vector<128x32xf32>
    %c0_126 = arith.constant 0 : index
    %c0_127 = arith.constant 0 : index
    %185 = vector.load %arg17[%c0_126, %c0_127] : memref<128x288xf32, #tpu.memory_space<vmem>>, vector<128x32xf32>
    tpu.vector_store %arg17[%c0_126, %c0_127], %184 {strides = array<i32>} : memref<128x288xf32, #tpu.memory_space<vmem>>, vector<128x32xf32>,
    %c1_128 = arith.constant 1 : index
    %c0_129 = arith.constant 0 : index
    %186 = vector.load %arg13[%c1_128, %c0_129] : memref<200x32xf32, #tpu.memory_space<vmem>>, vector<128x32xf32>
    %c0_130 = arith.constant 0 : index
    %c32_131 = arith.constant 32 : index
    %187 = vector.load %arg17[%c0_130, %c32_131] : memref<128x288xf32, #tpu.memory_space<vmem>>, vector<128x32xf32>
    tpu.vector_store %arg17[%c0_130, %c32_131], %186 {strides = array<i32>} : memref<128x288xf32, #tpu.memory_space<vmem>>, vector<128x32xf32>,
    %c2 = arith.constant 2 : index
    %c0_132 = arith.constant 0 : index
    %188 = vector.load %arg13[%c2, %c0_132] : memref<200x32xf32, #tpu.memory_space<vmem>>, vector<128x32xf32>
    %c0_133 = arith.constant 0 : index
    %c64_134 = arith.constant 64 : index
    %189 = vector.load %arg17[%c0_133, %c64_134] : memref<128x288xf32, #tpu.memory_space<vmem>>, vector<128x32xf32>
    tpu.vector_store %arg17[%c0_133, %c64_134], %188 {strides = array<i32>} : memref<128x288xf32, #tpu.memory_space<vmem>>, vector<128x32xf32>,
    %c10_135 = arith.constant 10 : index
    %c0_136 = arith.constant 0 : index
    %190 = vector.load %arg13[%c10_135, %c0_136] : memref<200x32xf32, #tpu.memory_space<vmem>>, vector<128x32xf32>
    %c0_137 = arith.constant 0 : index
    %c96_138 = arith.constant 96 : index
    %191 = vector.load %arg17[%c0_137, %c96_138] : memref<128x288xf32, #tpu.memory_space<vmem>>, vector<128x32xf32>
    tpu.vector_store %arg17[%c0_137, %c96_138], %190 {strides = array<i32>} : memref<128x288xf32, #tpu.memory_space<vmem>>, vector<128x32xf32>,
    %c11 = arith.constant 11 : index
    %c0_139 = arith.constant 0 : index
    %192 = vector.load %arg13[%c11, %c0_139] : memref<200x32xf32, #tpu.memory_space<vmem>>, vector<128x32xf32>
    %c0_140 = arith.constant 0 : index
    %c128_141 = arith.constant 128 : index
    %193 = vector.load %arg17[%c0_140, %c128_141] : memref<128x288xf32, #tpu.memory_space<vmem>>, vector<128x32xf32>
    tpu.vector_store %arg17[%c0_140, %c128_141], %192 {strides = array<i32>} : memref<128x288xf32, #tpu.memory_space<vmem>>, vector<128x32xf32>,
    %c12 = arith.constant 12 : index
    %c0_142 = arith.constant 0 : index
    %194 = vector.load %arg13[%c12, %c0_142] : memref<200x32xf32, #tpu.memory_space<vmem>>, vector<128x32xf32>
    %c0_143 = arith.constant 0 : index
    %c160_144 = arith.constant 160 : index
    %195 = vector.load %arg17[%c0_143, %c160_144] : memref<128x288xf32, #tpu.memory_space<vmem>>, vector<128x32xf32>
    tpu.vector_store %arg17[%c0_143, %c160_144], %194 {strides = array<i32>} : memref<128x288xf32, #tpu.memory_space<vmem>>, vector<128x32xf32>,
    %c20_145 = arith.constant 20 : index
    %c0_146 = arith.constant 0 : index
    %196 = vector.load %arg13[%c20_145, %c0_146] : memref<200x32xf32, #tpu.memory_space<vmem>>, vector<128x32xf32>
    %c0_147 = arith.constant 0 : index
    %c192_148 = arith.constant 192 : index
    %197 = vector.load %arg17[%c0_147, %c192_148] : memref<128x288xf32, #tpu.memory_space<vmem>>, vector<128x32xf32>
    tpu.vector_store %arg17[%c0_147, %c192_148], %196 {strides = array<i32>} : memref<128x288xf32, #tpu.memory_space<vmem>>, vector<128x32xf32>,
    %c21 = arith.constant 21 : index
    %c0_149 = arith.constant 0 : index
    %198 = vector.load %arg13[%c21, %c0_149] : memref<200x32xf32, #tpu.memory_space<vmem>>, vector<128x32xf32>
    %c0_150 = arith.constant 0 : index
    %c224_151 = arith.constant 224 : index
    %199 = vector.load %arg17[%c0_150, %c224_151] : memref<128x288xf32, #tpu.memory_space<vmem>>, vector<128x32xf32>
    tpu.vector_store %arg17[%c0_150, %c224_151], %198 {strides = array<i32>} : memref<128x288xf32, #tpu.memory_space<vmem>>, vector<128x32xf32>,
    %c22 = arith.constant 22 : index
    %c0_152 = arith.constant 0 : index
    %200 = vector.load %arg13[%c22, %c0_152] : memref<200x32xf32, #tpu.memory_space<vmem>>, vector<128x32xf32>
    %c0_153 = arith.constant 0 : index
    %c256_154 = arith.constant 256 : index
    %201 = vector.load %arg17[%c0_153, %c256_154] : memref<128x288xf32, #tpu.memory_space<vmem>>, vector<128x32xf32>
    tpu.vector_store %arg17[%c0_153, %c256_154], %200 {strides = array<i32>} : memref<128x288xf32, #tpu.memory_space<vmem>>, vector<128x32xf32>,
    %c0_155 = arith.constant 0 : index
    %c0_156 = arith.constant 0 : index
    %202 = vector.load %arg17[%c0_155, %c0_156] : memref<128x288xf32, #tpu.memory_space<vmem>>, vector<128x288xf32>
    %c0_157 = arith.constant 0 : index
    %c0_158 = arith.constant 0 : index
    %203 = vector.load %arg3[%c0_157, %c0_158] : memref<288x64xf32, #tpu.memory_space<vmem>>, vector<288x64xf32>
    %cst_159 = arith.constant dense<0.000000e+00> : vector<128x64xf32>
    %204 = tpu.matmul %202, %203, %cst_159 {dimension_numbers = #tpu.dot_dimension_numbers<[1], [0], [0], [1], [0, 0, 1, 1], [], []>} : vector<128x288xf32>, vector<288x64xf32>, vector<128x64xf32> -> vector<128x64xf32>
    %205 = vector.broadcast %183 : vector<1x64xf32> to vector<128x64xf32>
    %206 = arith.addf %204, %205 : vector<128x64xf32>
    %cst_160 = arith.constant 0.000000e+00 : f32
    %207 = vector.broadcast %cst_160 : f32 to vector<128x64xf32>
    %208 = arith.maximumf %206, %207 : vector<128x64xf32>
    %c11_161 = arith.constant 11 : index
    %c0_162 = arith.constant 0 : index
    %209 = vector.load %arg14[%c11_161, %c0_162] : memref<200x64xf32, #tpu.memory_space<vmem>>, vector<128x64xf32>
    tpu.vector_store %arg14[%c11_161, %c0_162], %208 {strides = array<i32>} : memref<200x64xf32, #tpu.memory_space<vmem>>, vector<128x64xf32>,
    %c128_163 = arith.constant 128 : index
    %c0_164 = arith.constant 0 : index
    %210 = vector.load %arg13[%c128_163, %c0_164] : memref<200x32xf32, #tpu.memory_space<vmem>>, vector<50x32xf32>
    %c0_165 = arith.constant 0 : index
    %c0_166 = arith.constant 0 : index
    %211 = vector.load %arg17[%c0_165, %c0_166] : memref<128x288xf32, #tpu.memory_space<vmem>>, vector<50x32xf32>
    tpu.vector_store %arg17[%c0_165, %c0_166], %210 {strides = array<i32>} : memref<128x288xf32, #tpu.memory_space<vmem>>, vector<50x32xf32>,
    %c129_167 = arith.constant 129 : index
    %c0_168 = arith.constant 0 : index
    %212 = vector.load %arg13[%c129_167, %c0_168] : memref<200x32xf32, #tpu.memory_space<vmem>>, vector<50x32xf32>
    %c0_169 = arith.constant 0 : index
    %c32_170 = arith.constant 32 : index
    %213 = vector.load %arg17[%c0_169, %c32_170] : memref<128x288xf32, #tpu.memory_space<vmem>>, vector<50x32xf32>
    tpu.vector_store %arg17[%c0_169, %c32_170], %212 {strides = array<i32>} : memref<128x288xf32, #tpu.memory_space<vmem>>, vector<50x32xf32>,
    %c130_171 = arith.constant 130 : index
    %c0_172 = arith.constant 0 : index
    %214 = vector.load %arg13[%c130_171, %c0_172] : memref<200x32xf32, #tpu.memory_space<vmem>>, vector<50x32xf32>
    %c0_173 = arith.constant 0 : index
    %c64_174 = arith.constant 64 : index
    %215 = vector.load %arg17[%c0_173, %c64_174] : memref<128x288xf32, #tpu.memory_space<vmem>>, vector<50x32xf32>
    tpu.vector_store %arg17[%c0_173, %c64_174], %214 {strides = array<i32>} : memref<128x288xf32, #tpu.memory_space<vmem>>, vector<50x32xf32>,
    %c138 = arith.constant 138 : index
    %c0_175 = arith.constant 0 : index
    %216 = vector.load %arg13[%c138, %c0_175] : memref<200x32xf32, #tpu.memory_space<vmem>>, vector<50x32xf32>
    %c0_176 = arith.constant 0 : index
    %c96_177 = arith.constant 96 : index
    %217 = vector.load %arg17[%c0_176, %c96_177] : memref<128x288xf32, #tpu.memory_space<vmem>>, vector<50x32xf32>
    tpu.vector_store %arg17[%c0_176, %c96_177], %216 {strides = array<i32>} : memref<128x288xf32, #tpu.memory_space<vmem>>, vector<50x32xf32>,
    %c139 = arith.constant 139 : index
    %c0_178 = arith.constant 0 : index
    %218 = vector.load %arg13[%c139, %c0_178] : memref<200x32xf32, #tpu.memory_space<vmem>>, vector<50x32xf32>
    %c0_179 = arith.constant 0 : index
    %c128_180 = arith.constant 128 : index
    %219 = vector.load %arg17[%c0_179, %c128_180] : memref<128x288xf32, #tpu.memory_space<vmem>>, vector<50x32xf32>
    tpu.vector_store %arg17[%c0_179, %c128_180], %218 {strides = array<i32>} : memref<128x288xf32, #tpu.memory_space<vmem>>, vector<50x32xf32>,
    %c140_181 = arith.constant 140 : index
    %c0_182 = arith.constant 0 : index
    %220 = vector.load %arg13[%c140_181, %c0_182] : memref<200x32xf32, #tpu.memory_space<vmem>>, vector<50x32xf32>
    %c0_183 = arith.constant 0 : index
    %c160_184 = arith.constant 160 : index
    %221 = vector.load %arg17[%c0_183, %c160_184] : memref<128x288xf32, #tpu.memory_space<vmem>>, vector<50x32xf32>
    tpu.vector_store %arg17[%c0_183, %c160_184], %220 {strides = array<i32>} : memref<128x288xf32, #tpu.memory_space<vmem>>, vector<50x32xf32>,
    %c148 = arith.constant 148 : index
    %c0_185 = arith.constant 0 : index
    %222 = vector.load %arg13[%c148, %c0_185] : memref<200x32xf32, #tpu.memory_space<vmem>>, vector<50x32xf32>
    %c0_186 = arith.constant 0 : index
    %c192_187 = arith.constant 192 : index
    %223 = vector.load %arg17[%c0_186, %c192_187] : memref<128x288xf32, #tpu.memory_space<vmem>>, vector<50x32xf32>
    tpu.vector_store %arg17[%c0_186, %c192_187], %222 {strides = array<i32>} : memref<128x288xf32, #tpu.memory_space<vmem>>, vector<50x32xf32>,
    %c149 = arith.constant 149 : index
    %c0_188 = arith.constant 0 : index
    %224 = vector.load %arg13[%c149, %c0_188] : memref<200x32xf32, #tpu.memory_space<vmem>>, vector<50x32xf32>
    %c0_189 = arith.constant 0 : index
    %c224_190 = arith.constant 224 : index
    %225 = vector.load %arg17[%c0_189, %c224_190] : memref<128x288xf32, #tpu.memory_space<vmem>>, vector<50x32xf32>
    tpu.vector_store %arg17[%c0_189, %c224_190], %224 {strides = array<i32>} : memref<128x288xf32, #tpu.memory_space<vmem>>, vector<50x32xf32>,
    %c150_191 = arith.constant 150 : index
    %c0_192 = arith.constant 0 : index
    %226 = vector.load %arg13[%c150_191, %c0_192] : memref<200x32xf32, #tpu.memory_space<vmem>>, vector<50x32xf32>
    %c0_193 = arith.constant 0 : index
    %c256_194 = arith.constant 256 : index
    %227 = vector.load %arg17[%c0_193, %c256_194] : memref<128x288xf32, #tpu.memory_space<vmem>>, vector<50x32xf32>
    tpu.vector_store %arg17[%c0_193, %c256_194], %226 {strides = array<i32>} : memref<128x288xf32, #tpu.memory_space<vmem>>, vector<50x32xf32>,
    %c0_195 = arith.constant 0 : index
    %c0_196 = arith.constant 0 : index
    %228 = vector.load %arg17[%c0_195, %c0_196] : memref<128x288xf32, #tpu.memory_space<vmem>>, vector<50x288xf32>
    %c0_197 = arith.constant 0 : index
    %c0_198 = arith.constant 0 : index
    %229 = vector.load %arg3[%c0_197, %c0_198] : memref<288x64xf32, #tpu.memory_space<vmem>>, vector<288x64xf32>
    %cst_199 = arith.constant dense<0.000000e+00> : vector<50x64xf32>
    %230 = tpu.matmul %228, %229, %cst_199 {dimension_numbers = #tpu.dot_dimension_numbers<[1], [0], [0], [1], [0, 0, 1, 1], [], []>} : vector<50x288xf32>, vector<288x64xf32>, vector<50x64xf32> -> vector<50x64xf32>
    %231 = vector.broadcast %183 : vector<1x64xf32> to vector<50x64xf32>
    %232 = arith.addf %230, %231 : vector<50x64xf32>
    %cst_200 = arith.constant 0.000000e+00 : f32
    %233 = vector.broadcast %cst_200 : f32 to vector<50x64xf32>
    %234 = arith.maximumf %232, %233 : vector<50x64xf32>
    %c139_201 = arith.constant 139 : index
    %c0_202 = arith.constant 0 : index
    %235 = vector.load %arg14[%c139_201, %c0_202] : memref<200x64xf32, #tpu.memory_space<vmem>>, vector<50x64xf32>
    tpu.vector_store %arg14[%c139_201, %c0_202], %234 {strides = array<i32>} : memref<200x64xf32, #tpu.memory_space<vmem>>, vector<50x64xf32>,
    %cst_203 = arith.constant 0.000000e+00 : f32
    %236 = vector.broadcast %cst_203 : f32 to vector<1x64xf32>
    %cst_204 = arith.constant 0.000000e+00 : f32
    %237 = vector.broadcast %cst_204 : f32 to vector<6x64xf32>
    %c0_205 = arith.constant 0 : index
    %c0_206 = arith.constant 0 : index
    %238 = vector.load %arg15[%c0_205, %c0_206] : memref<72x64xf32, #tpu.memory_space<vmem>>, vector<6x64xf32>
    tpu.vector_store %arg15[%c0_205, %c0_206], %237 {strides = array<i32>} : memref<72x64xf32, #tpu.memory_space<vmem>>, vector<6x64xf32>,
    %c30_207 = arith.constant 30 : index
    %c0_208 = arith.constant 0 : index
    %239 = vector.load %arg15[%c30_207, %c0_208] : memref<72x64xf32, #tpu.memory_space<vmem>>, vector<6x64xf32>
    tpu.vector_store %arg15[%c30_207, %c0_208], %237 {strides = array<i32>} : memref<72x64xf32, #tpu.memory_space<vmem>>, vector<6x64xf32>,
    %c11_209 = arith.constant 11 : index
    %c0_210 = arith.constant 0 : index
    %240 = tpu.strided_load %arg14[%c11_209, %c0_210] {strides = array<i32: 2, 1>} : memref<200x64xf32, #tpu.memory_space<vmem>>, vector<4x64xf32>
    %c12_211 = arith.constant 12 : index
    %c0_212 = arith.constant 0 : index
    %241 = tpu.strided_load %arg14[%c12_211, %c0_212] {strides = array<i32: 2, 1>} : memref<200x64xf32, #tpu.memory_space<vmem>>, vector<4x64xf32>
    %242 = arith.maximumf %240, %241 : vector<4x64xf32>
    %c21_213 = arith.constant 21 : index
    %c0_214 = arith.constant 0 : index
    %243 = tpu.strided_load %arg14[%c21_213, %c0_214] {strides = array<i32: 2, 1>} : memref<200x64xf32, #tpu.memory_space<vmem>>, vector<4x64xf32>
    %c22_215 = arith.constant 22 : index
    %c0_216 = arith.constant 0 : index
    %244 = tpu.strided_load %arg14[%c22_215, %c0_216] {strides = array<i32: 2, 1>} : memref<200x64xf32, #tpu.memory_space<vmem>>, vector<4x64xf32>
    %245 = arith.maximumf %243, %244 : vector<4x64xf32>
    %246 = arith.maximumf %242, %245 : vector<4x64xf32>
    %247 = tpu.concatenate %236, %246, %236 in 0 : vector<1x64xf32>, vector<4x64xf32>, vector<1x64xf32> -> vector<6x64xf32>
    %c6 = arith.constant 6 : index
    %c0_217 = arith.constant 0 : index
    %248 = vector.load %arg15[%c6, %c0_217] : memref<72x64xf32, #tpu.memory_space<vmem>>, vector<6x64xf32>
    tpu.vector_store %arg15[%c6, %c0_217], %247 {strides = array<i32>} : memref<72x64xf32, #tpu.memory_space<vmem>>, vector<6x64xf32>,
    %c31 = arith.constant 31 : index
    %c0_218 = arith.constant 0 : index
    %249 = tpu.strided_load %arg14[%c31, %c0_218] {strides = array<i32: 2, 1>} : memref<200x64xf32, #tpu.memory_space<vmem>>, vector<4x64xf32>
    %c32_219 = arith.constant 32 : index
    %c0_220 = arith.constant 0 : index
    %250 = tpu.strided_load %arg14[%c32_219, %c0_220] {strides = array<i32: 2, 1>} : memref<200x64xf32, #tpu.memory_space<vmem>>, vector<4x64xf32>
    %251 = arith.maximumf %249, %250 : vector<4x64xf32>
    %c41 = arith.constant 41 : index
    %c0_221 = arith.constant 0 : index
    %252 = tpu.strided_load %arg14[%c41, %c0_221] {strides = array<i32: 2, 1>} : memref<200x64xf32, #tpu.memory_space<vmem>>, vector<4x64xf32>
    %c42 = arith.constant 42 : index
    %c0_222 = arith.constant 0 : index
    %253 = tpu.strided_load %arg14[%c42, %c0_222] {strides = array<i32: 2, 1>} : memref<200x64xf32, #tpu.memory_space<vmem>>, vector<4x64xf32>
    %254 = arith.maximumf %252, %253 : vector<4x64xf32>
    %255 = arith.maximumf %251, %254 : vector<4x64xf32>
    %256 = tpu.concatenate %236, %255, %236 in 0 : vector<1x64xf32>, vector<4x64xf32>, vector<1x64xf32> -> vector<6x64xf32>
    %c12_223 = arith.constant 12 : index
    %c0_224 = arith.constant 0 : index
    %257 = vector.load %arg15[%c12_223, %c0_224] : memref<72x64xf32, #tpu.memory_space<vmem>>, vector<6x64xf32>
    tpu.vector_store %arg15[%c12_223, %c0_224], %256 {strides = array<i32>} : memref<72x64xf32, #tpu.memory_space<vmem>>, vector<6x64xf32>,
    %c51 = arith.constant 51 : index
    %c0_225 = arith.constant 0 : index
    %258 = tpu.strided_load %arg14[%c51, %c0_225] {strides = array<i32: 2, 1>} : memref<200x64xf32, #tpu.memory_space<vmem>>, vector<4x64xf32>
    %c52 = arith.constant 52 : index
    %c0_226 = arith.constant 0 : index
    %259 = tpu.strided_load %arg14[%c52, %c0_226] {strides = array<i32: 2, 1>} : memref<200x64xf32, #tpu.memory_space<vmem>>, vector<4x64xf32>
    %260 = arith.maximumf %258, %259 : vector<4x64xf32>
    %c61 = arith.constant 61 : index
    %c0_227 = arith.constant 0 : index
    %261 = tpu.strided_load %arg14[%c61, %c0_227] {strides = array<i32: 2, 1>} : memref<200x64xf32, #tpu.memory_space<vmem>>, vector<4x64xf32>
    %c62 = arith.constant 62 : index
    %c0_228 = arith.constant 0 : index
    %262 = tpu.strided_load %arg14[%c62, %c0_228] {strides = array<i32: 2, 1>} : memref<200x64xf32, #tpu.memory_space<vmem>>, vector<4x64xf32>
    %263 = arith.maximumf %261, %262 : vector<4x64xf32>
    %264 = arith.maximumf %260, %263 : vector<4x64xf32>
    %265 = tpu.concatenate %236, %264, %236 in 0 : vector<1x64xf32>, vector<4x64xf32>, vector<1x64xf32> -> vector<6x64xf32>
    %c18 = arith.constant 18 : index
    %c0_229 = arith.constant 0 : index
    %266 = vector.load %arg15[%c18, %c0_229] : memref<72x64xf32, #tpu.memory_space<vmem>>, vector<6x64xf32>
    tpu.vector_store %arg15[%c18, %c0_229], %265 {strides = array<i32>} : memref<72x64xf32, #tpu.memory_space<vmem>>, vector<6x64xf32>,
    %c71 = arith.constant 71 : index
    %c0_230 = arith.constant 0 : index
    %267 = tpu.strided_load %arg14[%c71, %c0_230] {strides = array<i32: 2, 1>} : memref<200x64xf32, #tpu.memory_space<vmem>>, vector<4x64xf32>
    %c72 = arith.constant 72 : index
    %c0_231 = arith.constant 0 : index
    %268 = tpu.strided_load %arg14[%c72, %c0_231] {strides = array<i32: 2, 1>} : memref<200x64xf32, #tpu.memory_space<vmem>>, vector<4x64xf32>
    %269 = arith.maximumf %267, %268 : vector<4x64xf32>
    %c81_232 = arith.constant 81 : index
    %c0_233 = arith.constant 0 : index
    %270 = tpu.strided_load %arg14[%c81_232, %c0_233] {strides = array<i32: 2, 1>} : memref<200x64xf32, #tpu.memory_space<vmem>>, vector<4x64xf32>
    %c82 = arith.constant 82 : index
    %c0_234 = arith.constant 0 : index
    %271 = tpu.strided_load %arg14[%c82, %c0_234] {strides = array<i32: 2, 1>} : memref<200x64xf32, #tpu.memory_space<vmem>>, vector<4x64xf32>
    %272 = arith.maximumf %270, %271 : vector<4x64xf32>
    %273 = arith.maximumf %269, %272 : vector<4x64xf32>
    %274 = tpu.concatenate %236, %273, %236 in 0 : vector<1x64xf32>, vector<4x64xf32>, vector<1x64xf32> -> vector<6x64xf32>
    %c24 = arith.constant 24 : index
    %c0_235 = arith.constant 0 : index
    %275 = vector.load %arg15[%c24, %c0_235] : memref<72x64xf32, #tpu.memory_space<vmem>>, vector<6x64xf32>
    tpu.vector_store %arg15[%c24, %c0_235], %274 {strides = array<i32>} : memref<72x64xf32, #tpu.memory_space<vmem>>, vector<6x64xf32>,
    %c36 = arith.constant 36 : index
    %c0_236 = arith.constant 0 : index
    %276 = vector.load %arg15[%c36, %c0_236] : memref<72x64xf32, #tpu.memory_space<vmem>>, vector<6x64xf32>
    tpu.vector_store %arg15[%c36, %c0_236], %237 {strides = array<i32>} : memref<72x64xf32, #tpu.memory_space<vmem>>, vector<6x64xf32>,
    %c66 = arith.constant 66 : index
    %c0_237 = arith.constant 0 : index
    %277 = vector.load %arg15[%c66, %c0_237] : memref<72x64xf32, #tpu.memory_space<vmem>>, vector<6x64xf32>
    tpu.vector_store %arg15[%c66, %c0_237], %237 {strides = array<i32>} : memref<72x64xf32, #tpu.memory_space<vmem>>, vector<6x64xf32>,
    %c111 = arith.constant 111 : index
    %c0_238 = arith.constant 0 : index
    %278 = tpu.strided_load %arg14[%c111, %c0_238] {strides = array<i32: 2, 1>} : memref<200x64xf32, #tpu.memory_space<vmem>>, vector<4x64xf32>
    %c112_239 = arith.constant 112 : index
    %c0_240 = arith.constant 0 : index
    %279 = tpu.strided_load %arg14[%c112_239, %c0_240] {strides = array<i32: 2, 1>} : memref<200x64xf32, #tpu.memory_space<vmem>>, vector<4x64xf32>
    %280 = arith.maximumf %278, %279 : vector<4x64xf32>
    %c121 = arith.constant 121 : index
    %c0_241 = arith.constant 0 : index
    %281 = tpu.strided_load %arg14[%c121, %c0_241] {strides = array<i32: 2, 1>} : memref<200x64xf32, #tpu.memory_space<vmem>>, vector<4x64xf32>
    %c122 = arith.constant 122 : index
    %c0_242 = arith.constant 0 : index
    %282 = tpu.strided_load %arg14[%c122, %c0_242] {strides = array<i32: 2, 1>} : memref<200x64xf32, #tpu.memory_space<vmem>>, vector<4x64xf32>
    %283 = arith.maximumf %281, %282 : vector<4x64xf32>
    %284 = arith.maximumf %280, %283 : vector<4x64xf32>
    %285 = tpu.concatenate %236, %284, %236 in 0 : vector<1x64xf32>, vector<4x64xf32>, vector<1x64xf32> -> vector<6x64xf32>
    %c42_243 = arith.constant 42 : index
    %c0_244 = arith.constant 0 : index
    %286 = vector.load %arg15[%c42_243, %c0_244] : memref<72x64xf32, #tpu.memory_space<vmem>>, vector<6x64xf32>
    tpu.vector_store %arg15[%c42_243, %c0_244], %285 {strides = array<i32>} : memref<72x64xf32, #tpu.memory_space<vmem>>, vector<6x64xf32>,
    %c131 = arith.constant 131 : index
    %c0_245 = arith.constant 0 : index
    %287 = tpu.strided_load %arg14[%c131, %c0_245] {strides = array<i32: 2, 1>} : memref<200x64xf32, #tpu.memory_space<vmem>>, vector<4x64xf32>
    %c132 = arith.constant 132 : index
    %c0_246 = arith.constant 0 : index
    %288 = tpu.strided_load %arg14[%c132, %c0_246] {strides = array<i32: 2, 1>} : memref<200x64xf32, #tpu.memory_space<vmem>>, vector<4x64xf32>
    %289 = arith.maximumf %287, %288 : vector<4x64xf32>
    %c141 = arith.constant 141 : index
    %c0_247 = arith.constant 0 : index
    %290 = tpu.strided_load %arg14[%c141, %c0_247] {strides = array<i32: 2, 1>} : memref<200x64xf32, #tpu.memory_space<vmem>>, vector<4x64xf32>
    %c142 = arith.constant 142 : index
    %c0_248 = arith.constant 0 : index
    %291 = tpu.strided_load %arg14[%c142, %c0_248] {strides = array<i32: 2, 1>} : memref<200x64xf32, #tpu.memory_space<vmem>>, vector<4x64xf32>
    %292 = arith.maximumf %290, %291 : vector<4x64xf32>
    %293 = arith.maximumf %289, %292 : vector<4x64xf32>
    %294 = tpu.concatenate %236, %293, %236 in 0 : vector<1x64xf32>, vector<4x64xf32>, vector<1x64xf32> -> vector<6x64xf32>
    %c48_249 = arith.constant 48 : index
    %c0_250 = arith.constant 0 : index
    %295 = vector.load %arg15[%c48_249, %c0_250] : memref<72x64xf32, #tpu.memory_space<vmem>>, vector<6x64xf32>
    tpu.vector_store %arg15[%c48_249, %c0_250], %294 {strides = array<i32>} : memref<72x64xf32, #tpu.memory_space<vmem>>, vector<6x64xf32>,
    %c151 = arith.constant 151 : index
    %c0_251 = arith.constant 0 : index
    %296 = tpu.strided_load %arg14[%c151, %c0_251] {strides = array<i32: 2, 1>} : memref<200x64xf32, #tpu.memory_space<vmem>>, vector<4x64xf32>
    %c152 = arith.constant 152 : index
    %c0_252 = arith.constant 0 : index
    %297 = tpu.strided_load %arg14[%c152, %c0_252] {strides = array<i32: 2, 1>} : memref<200x64xf32, #tpu.memory_space<vmem>>, vector<4x64xf32>
    %298 = arith.maximumf %296, %297 : vector<4x64xf32>
    %c161_253 = arith.constant 161 : index
    %c0_254 = arith.constant 0 : index
    %299 = tpu.strided_load %arg14[%c161_253, %c0_254] {strides = array<i32: 2, 1>} : memref<200x64xf32, #tpu.memory_space<vmem>>, vector<4x64xf32>
    %c162 = arith.constant 162 : index
    %c0_255 = arith.constant 0 : index
    %300 = tpu.strided_load %arg14[%c162, %c0_255] {strides = array<i32: 2, 1>} : memref<200x64xf32, #tpu.memory_space<vmem>>, vector<4x64xf32>
    %301 = arith.maximumf %299, %300 : vector<4x64xf32>
    %302 = arith.maximumf %298, %301 : vector<4x64xf32>
    %303 = tpu.concatenate %236, %302, %236 in 0 : vector<1x64xf32>, vector<4x64xf32>, vector<1x64xf32> -> vector<6x64xf32>
    %c54 = arith.constant 54 : index
    %c0_256 = arith.constant 0 : index
    %304 = vector.load %arg15[%c54, %c0_256] : memref<72x64xf32, #tpu.memory_space<vmem>>, vector<6x64xf32>
    tpu.vector_store %arg15[%c54, %c0_256], %303 {strides = array<i32>} : memref<72x64xf32, #tpu.memory_space<vmem>>, vector<6x64xf32>,
    %c171 = arith.constant 171 : index
    %c0_257 = arith.constant 0 : index
    %305 = tpu.strided_load %arg14[%c171, %c0_257] {strides = array<i32: 2, 1>} : memref<200x64xf32, #tpu.memory_space<vmem>>, vector<4x64xf32>
    %c172 = arith.constant 172 : index
    %c0_258 = arith.constant 0 : index
    %306 = tpu.strided_load %arg14[%c172, %c0_258] {strides = array<i32: 2, 1>} : memref<200x64xf32, #tpu.memory_space<vmem>>, vector<4x64xf32>
    %307 = arith.maximumf %305, %306 : vector<4x64xf32>
    %c181 = arith.constant 181 : index
    %c0_259 = arith.constant 0 : index
    %308 = tpu.strided_load %arg14[%c181, %c0_259] {strides = array<i32: 2, 1>} : memref<200x64xf32, #tpu.memory_space<vmem>>, vector<4x64xf32>
    %c182 = arith.constant 182 : index
    %c0_260 = arith.constant 0 : index
    %309 = tpu.strided_load %arg14[%c182, %c0_260] {strides = array<i32: 2, 1>} : memref<200x64xf32, #tpu.memory_space<vmem>>, vector<4x64xf32>
    %310 = arith.maximumf %308, %309 : vector<4x64xf32>
    %311 = arith.maximumf %307, %310 : vector<4x64xf32>
    %312 = tpu.concatenate %236, %311, %236 in 0 : vector<1x64xf32>, vector<4x64xf32>, vector<1x64xf32> -> vector<6x64xf32>
    %c60_261 = arith.constant 60 : index
    %c0_262 = arith.constant 0 : index
    %313 = vector.load %arg15[%c60_261, %c0_262] : memref<72x64xf32, #tpu.memory_space<vmem>>, vector<6x64xf32>
    tpu.vector_store %arg15[%c60_261, %c0_262], %312 {strides = array<i32>} : memref<72x64xf32, #tpu.memory_space<vmem>>, vector<6x64xf32>,
    %c0_263 = arith.constant 0 : index
    %c0_264 = arith.constant 0 : index
    %314 = vector.load %arg6[%c0_263, %c0_264] : memref<1x128xf32, #tpu.memory_space<vmem>>, vector<1x128xf32>
    %c0_265 = arith.constant 0 : index
    %c0_266 = arith.constant 0 : index
    %315 = vector.load %arg15[%c0_265, %c0_266] : memref<72x64xf32, #tpu.memory_space<vmem>>, vector<58x64xf32>
    %c0_267 = arith.constant 0 : index
    %c0_268 = arith.constant 0 : index
    %316 = vector.load %arg18[%c0_267, %c0_268] : memref<128x576xf32, #tpu.memory_space<vmem>>, vector<58x64xf32>
    tpu.vector_store %arg18[%c0_267, %c0_268], %315 {strides = array<i32>} : memref<128x576xf32, #tpu.memory_space<vmem>>, vector<58x64xf32>,
    %c1_269 = arith.constant 1 : index
    %c0_270 = arith.constant 0 : index
    %317 = vector.load %arg15[%c1_269, %c0_270] : memref<72x64xf32, #tpu.memory_space<vmem>>, vector<58x64xf32>
    %c0_271 = arith.constant 0 : index
    %c64_272 = arith.constant 64 : index
    %318 = vector.load %arg18[%c0_271, %c64_272] : memref<128x576xf32, #tpu.memory_space<vmem>>, vector<58x64xf32>
    tpu.vector_store %arg18[%c0_271, %c64_272], %317 {strides = array<i32>} : memref<128x576xf32, #tpu.memory_space<vmem>>, vector<58x64xf32>,
    %c2_273 = arith.constant 2 : index
    %c0_274 = arith.constant 0 : index
    %319 = vector.load %arg15[%c2_273, %c0_274] : memref<72x64xf32, #tpu.memory_space<vmem>>, vector<58x64xf32>
    %c0_275 = arith.constant 0 : index
    %c128_276 = arith.constant 128 : index
    %320 = vector.load %arg18[%c0_275, %c128_276] : memref<128x576xf32, #tpu.memory_space<vmem>>, vector<58x64xf32>
    tpu.vector_store %arg18[%c0_275, %c128_276], %319 {strides = array<i32>} : memref<128x576xf32, #tpu.memory_space<vmem>>, vector<58x64xf32>,
    %c6_277 = arith.constant 6 : index
    %c0_278 = arith.constant 0 : index
    %321 = vector.load %arg15[%c6_277, %c0_278] : memref<72x64xf32, #tpu.memory_space<vmem>>, vector<58x64xf32>
    %c0_279 = arith.constant 0 : index
    %c192_280 = arith.constant 192 : index
    %322 = vector.load %arg18[%c0_279, %c192_280] : memref<128x576xf32, #tpu.memory_space<vmem>>, vector<58x64xf32>
    tpu.vector_store %arg18[%c0_279, %c192_280], %321 {strides = array<i32>} : memref<128x576xf32, #tpu.memory_space<vmem>>, vector<58x64xf32>,
    %c7 = arith.constant 7 : index
    %c0_281 = arith.constant 0 : index
    %323 = vector.load %arg15[%c7, %c0_281] : memref<72x64xf32, #tpu.memory_space<vmem>>, vector<58x64xf32>
    %c0_282 = arith.constant 0 : index
    %c256_283 = arith.constant 256 : index
    %324 = vector.load %arg18[%c0_282, %c256_283] : memref<128x576xf32, #tpu.memory_space<vmem>>, vector<58x64xf32>
    tpu.vector_store %arg18[%c0_282, %c256_283], %323 {strides = array<i32>} : memref<128x576xf32, #tpu.memory_space<vmem>>, vector<58x64xf32>,
    %c8 = arith.constant 8 : index
    %c0_284 = arith.constant 0 : index
    %325 = vector.load %arg15[%c8, %c0_284] : memref<72x64xf32, #tpu.memory_space<vmem>>, vector<58x64xf32>
    %c0_285 = arith.constant 0 : index
    %c320_286 = arith.constant 320 : index
    %326 = vector.load %arg18[%c0_285, %c320_286] : memref<128x576xf32, #tpu.memory_space<vmem>>, vector<58x64xf32>
    tpu.vector_store %arg18[%c0_285, %c320_286], %325 {strides = array<i32>} : memref<128x576xf32, #tpu.memory_space<vmem>>, vector<58x64xf32>,
    %c12_287 = arith.constant 12 : index
    %c0_288 = arith.constant 0 : index
    %327 = vector.load %arg15[%c12_287, %c0_288] : memref<72x64xf32, #tpu.memory_space<vmem>>, vector<58x64xf32>
    %c0_289 = arith.constant 0 : index
    %c384_290 = arith.constant 384 : index
    %328 = vector.load %arg18[%c0_289, %c384_290] : memref<128x576xf32, #tpu.memory_space<vmem>>, vector<58x64xf32>
    tpu.vector_store %arg18[%c0_289, %c384_290], %327 {strides = array<i32>} : memref<128x576xf32, #tpu.memory_space<vmem>>, vector<58x64xf32>,
    %c13 = arith.constant 13 : index
    %c0_291 = arith.constant 0 : index
    %329 = vector.load %arg15[%c13, %c0_291] : memref<72x64xf32, #tpu.memory_space<vmem>>, vector<58x64xf32>
    %c0_292 = arith.constant 0 : index
    %c448_293 = arith.constant 448 : index
    %330 = vector.load %arg18[%c0_292, %c448_293] : memref<128x576xf32, #tpu.memory_space<vmem>>, vector<58x64xf32>
    tpu.vector_store %arg18[%c0_292, %c448_293], %329 {strides = array<i32>} : memref<128x576xf32, #tpu.memory_space<vmem>>, vector<58x64xf32>,
    %c14 = arith.constant 14 : index
    %c0_294 = arith.constant 0 : index
    %331 = vector.load %arg15[%c14, %c0_294] : memref<72x64xf32, #tpu.memory_space<vmem>>, vector<58x64xf32>
    %c0_295 = arith.constant 0 : index
    %c512 = arith.constant 512 : index
    %332 = vector.load %arg18[%c0_295, %c512] : memref<128x576xf32, #tpu.memory_space<vmem>>, vector<58x64xf32>
    tpu.vector_store %arg18[%c0_295, %c512], %331 {strides = array<i32>} : memref<128x576xf32, #tpu.memory_space<vmem>>, vector<58x64xf32>,
    %c0_296 = arith.constant 0 : index
    %c0_297 = arith.constant 0 : index
    %333 = vector.load %arg18[%c0_296, %c0_297] : memref<128x576xf32, #tpu.memory_space<vmem>>, vector<58x576xf32>
    %c0_298 = arith.constant 0 : index
    %c0_299 = arith.constant 0 : index
    %334 = vector.load %arg5[%c0_298, %c0_299] : memref<576x128xf32, #tpu.memory_space<vmem>>, vector<576x128xf32>
    %cst_300 = arith.constant dense<0.000000e+00> : vector<58x128xf32>
    %335 = tpu.matmul %333, %334, %cst_300 {dimension_numbers = #tpu.dot_dimension_numbers<[1], [0], [0], [1], [0, 0, 1, 1], [], []>} : vector<58x576xf32>, vector<576x128xf32>, vector<58x128xf32> -> vector<58x128xf32>
    %336 = vector.broadcast %314 : vector<1x128xf32> to vector<58x128xf32>
    %337 = arith.addf %335, %336 : vector<58x128xf32>
    %cst_301 = arith.constant 0.000000e+00 : f32
    %338 = vector.broadcast %cst_301 : f32 to vector<58x128xf32>
    %339 = arith.maximumf %337, %338 : vector<58x128xf32>
    %c7_302 = arith.constant 7 : index
    %c0_303 = arith.constant 0 : index
    %340 = vector.load %arg16[%c7_302, %c0_303] : memref<72x128xf32, #tpu.memory_space<vmem>>, vector<58x128xf32>
    tpu.vector_store %arg16[%c7_302, %c0_303], %339 {strides = array<i32>} : memref<72x128xf32, #tpu.memory_space<vmem>>, vector<58x128xf32>,
    %cst_304 = arith.constant 0.000000e+00 : f32
    %341 = vector.broadcast %cst_304 : f32 to vector<8x512xf32>
    %c0_305 = arith.constant 0 : index
    %c0_306 = arith.constant 0 : index
    %342 = vector.load %arg19[%c0_305, %c0_306] : memref<8x512xf32, #tpu.memory_space<vmem>>, vector<8x512xf32>
    tpu.vector_store %arg19[%c0_305, %c0_306], %341 {strides = array<i32>} : memref<8x512xf32, #tpu.memory_space<vmem>>, vector<8x512xf32>,
    %c7_307 = arith.constant 7 : index
    %c0_308 = arith.constant 0 : index
    %343 = vector.load %arg16[%c7_307, %c0_308] : memref<72x128xf32, #tpu.memory_space<vmem>>, vector<1x128xf32>
    %c8_309 = arith.constant 8 : index
    %c0_310 = arith.constant 0 : index
    %344 = vector.load %arg16[%c8_309, %c0_310] : memref<72x128xf32, #tpu.memory_space<vmem>>, vector<1x128xf32>
    %345 = arith.maximumf %343, %344 : vector<1x128xf32>
    %c13_311 = arith.constant 13 : index
    %c0_312 = arith.constant 0 : index
    %346 = vector.load %arg16[%c13_311, %c0_312] : memref<72x128xf32, #tpu.memory_space<vmem>>, vector<1x128xf32>
    %c14_313 = arith.constant 14 : index
    %c0_314 = arith.constant 0 : index
    %347 = vector.load %arg16[%c14_313, %c0_314] : memref<72x128xf32, #tpu.memory_space<vmem>>, vector<1x128xf32>
    %348 = arith.maximumf %346, %347 : vector<1x128xf32>
    %349 = arith.maximumf %345, %348 : vector<1x128xf32>
    %c0_315 = arith.constant 0 : index
    %c0_316 = arith.constant 0 : index
    %350 = vector.load %arg19[%c0_315, %c0_316] : memref<8x512xf32, #tpu.memory_space<vmem>>, vector<1x128xf32>
    tpu.vector_store %arg19[%c0_315, %c0_316], %349 {strides = array<i32>} : memref<8x512xf32, #tpu.memory_space<vmem>>, vector<1x128xf32>,
    %c9 = arith.constant 9 : index
    %c0_317 = arith.constant 0 : index
    %351 = vector.load %arg16[%c9, %c0_317] : memref<72x128xf32, #tpu.memory_space<vmem>>, vector<1x128xf32>
    %c10_318 = arith.constant 10 : index
    %c0_319 = arith.constant 0 : index
    %352 = vector.load %arg16[%c10_318, %c0_319] : memref<72x128xf32, #tpu.memory_space<vmem>>, vector<1x128xf32>
    %353 = arith.maximumf %351, %352 : vector<1x128xf32>
    %c15 = arith.constant 15 : index
    %c0_320 = arith.constant 0 : index
    %354 = vector.load %arg16[%c15, %c0_320] : memref<72x128xf32, #tpu.memory_space<vmem>>, vector<1x128xf32>
    %c16_321 = arith.constant 16 : index
    %c0_322 = arith.constant 0 : index
    %355 = vector.load %arg16[%c16_321, %c0_322] : memref<72x128xf32, #tpu.memory_space<vmem>>, vector<1x128xf32>
    %356 = arith.maximumf %354, %355 : vector<1x128xf32>
    %357 = arith.maximumf %353, %356 : vector<1x128xf32>
    %c0_323 = arith.constant 0 : index
    %c128_324 = arith.constant 128 : index
    %358 = vector.load %arg19[%c0_323, %c128_324] : memref<8x512xf32, #tpu.memory_space<vmem>>, vector<1x128xf32>
    tpu.vector_store %arg19[%c0_323, %c128_324], %357 {strides = array<i32>} : memref<8x512xf32, #tpu.memory_space<vmem>>, vector<1x128xf32>,
    %c19 = arith.constant 19 : index
    %c0_325 = arith.constant 0 : index
    %359 = vector.load %arg16[%c19, %c0_325] : memref<72x128xf32, #tpu.memory_space<vmem>>, vector<1x128xf32>
    %c20_326 = arith.constant 20 : index
    %c0_327 = arith.constant 0 : index
    %360 = vector.load %arg16[%c20_326, %c0_327] : memref<72x128xf32, #tpu.memory_space<vmem>>, vector<1x128xf32>
    %361 = arith.maximumf %359, %360 : vector<1x128xf32>
    %c25 = arith.constant 25 : index
    %c0_328 = arith.constant 0 : index
    %362 = vector.load %arg16[%c25, %c0_328] : memref<72x128xf32, #tpu.memory_space<vmem>>, vector<1x128xf32>
    %c26 = arith.constant 26 : index
    %c0_329 = arith.constant 0 : index
    %363 = vector.load %arg16[%c26, %c0_329] : memref<72x128xf32, #tpu.memory_space<vmem>>, vector<1x128xf32>
    %364 = arith.maximumf %362, %363 : vector<1x128xf32>
    %365 = arith.maximumf %361, %364 : vector<1x128xf32>
    %c0_330 = arith.constant 0 : index
    %c256_331 = arith.constant 256 : index
    %366 = vector.load %arg19[%c0_330, %c256_331] : memref<8x512xf32, #tpu.memory_space<vmem>>, vector<1x128xf32>
    tpu.vector_store %arg19[%c0_330, %c256_331], %365 {strides = array<i32>} : memref<8x512xf32, #tpu.memory_space<vmem>>, vector<1x128xf32>,
    %c21_332 = arith.constant 21 : index
    %c0_333 = arith.constant 0 : index
    %367 = vector.load %arg16[%c21_332, %c0_333] : memref<72x128xf32, #tpu.memory_space<vmem>>, vector<1x128xf32>
    %c22_334 = arith.constant 22 : index
    %c0_335 = arith.constant 0 : index
    %368 = vector.load %arg16[%c22_334, %c0_335] : memref<72x128xf32, #tpu.memory_space<vmem>>, vector<1x128xf32>
    %369 = arith.maximumf %367, %368 : vector<1x128xf32>
    %c27 = arith.constant 27 : index
    %c0_336 = arith.constant 0 : index
    %370 = vector.load %arg16[%c27, %c0_336] : memref<72x128xf32, #tpu.memory_space<vmem>>, vector<1x128xf32>
    %c28 = arith.constant 28 : index
    %c0_337 = arith.constant 0 : index
    %371 = vector.load %arg16[%c28, %c0_337] : memref<72x128xf32, #tpu.memory_space<vmem>>, vector<1x128xf32>
    %372 = arith.maximumf %370, %371 : vector<1x128xf32>
    %373 = arith.maximumf %369, %372 : vector<1x128xf32>
    %c0_338 = arith.constant 0 : index
    %c384_339 = arith.constant 384 : index
    %374 = vector.load %arg19[%c0_338, %c384_339] : memref<8x512xf32, #tpu.memory_space<vmem>>, vector<1x128xf32>
    tpu.vector_store %arg19[%c0_338, %c384_339], %373 {strides = array<i32>} : memref<8x512xf32, #tpu.memory_space<vmem>>, vector<1x128xf32>,
    %c43 = arith.constant 43 : index
    %c0_340 = arith.constant 0 : index
    %375 = vector.load %arg16[%c43, %c0_340] : memref<72x128xf32, #tpu.memory_space<vmem>>, vector<1x128xf32>
    %c44 = arith.constant 44 : index
    %c0_341 = arith.constant 0 : index
    %376 = vector.load %arg16[%c44, %c0_341] : memref<72x128xf32, #tpu.memory_space<vmem>>, vector<1x128xf32>
    %377 = arith.maximumf %375, %376 : vector<1x128xf32>
    %c49_342 = arith.constant 49 : index
    %c0_343 = arith.constant 0 : index
    %378 = vector.load %arg16[%c49_342, %c0_343] : memref<72x128xf32, #tpu.memory_space<vmem>>, vector<1x128xf32>
    %c50_344 = arith.constant 50 : index
    %c0_345 = arith.constant 0 : index
    %379 = vector.load %arg16[%c50_344, %c0_345] : memref<72x128xf32, #tpu.memory_space<vmem>>, vector<1x128xf32>
    %380 = arith.maximumf %378, %379 : vector<1x128xf32>
    %381 = arith.maximumf %377, %380 : vector<1x128xf32>
    %c1_346 = arith.constant 1 : index
    %c0_347 = arith.constant 0 : index
    %382 = vector.load %arg19[%c1_346, %c0_347] : memref<8x512xf32, #tpu.memory_space<vmem>>, vector<1x128xf32>
    tpu.vector_store %arg19[%c1_346, %c0_347], %381 {strides = array<i32>} : memref<8x512xf32, #tpu.memory_space<vmem>>, vector<1x128xf32>,
    %c45 = arith.constant 45 : index
    %c0_348 = arith.constant 0 : index
    %383 = vector.load %arg16[%c45, %c0_348] : memref<72x128xf32, #tpu.memory_space<vmem>>, vector<1x128xf32>
    %c46 = arith.constant 46 : index
    %c0_349 = arith.constant 0 : index
    %384 = vector.load %arg16[%c46, %c0_349] : memref<72x128xf32, #tpu.memory_space<vmem>>, vector<1x128xf32>
    %385 = arith.maximumf %383, %384 : vector<1x128xf32>
    %c51_350 = arith.constant 51 : index
    %c0_351 = arith.constant 0 : index
    %386 = vector.load %arg16[%c51_350, %c0_351] : memref<72x128xf32, #tpu.memory_space<vmem>>, vector<1x128xf32>
    %c52_352 = arith.constant 52 : index
    %c0_353 = arith.constant 0 : index
    %387 = vector.load %arg16[%c52_352, %c0_353] : memref<72x128xf32, #tpu.memory_space<vmem>>, vector<1x128xf32>
    %388 = arith.maximumf %386, %387 : vector<1x128xf32>
    %389 = arith.maximumf %385, %388 : vector<1x128xf32>
    %c1_354 = arith.constant 1 : index
    %c128_355 = arith.constant 128 : index
    %390 = vector.load %arg19[%c1_354, %c128_355] : memref<8x512xf32, #tpu.memory_space<vmem>>, vector<1x128xf32>
    tpu.vector_store %arg19[%c1_354, %c128_355], %389 {strides = array<i32>} : memref<8x512xf32, #tpu.memory_space<vmem>>, vector<1x128xf32>,
    %c55 = arith.constant 55 : index
    %c0_356 = arith.constant 0 : index
    %391 = vector.load %arg16[%c55, %c0_356] : memref<72x128xf32, #tpu.memory_space<vmem>>, vector<1x128xf32>
    %c56 = arith.constant 56 : index
    %c0_357 = arith.constant 0 : index
    %392 = vector.load %arg16[%c56, %c0_357] : memref<72x128xf32, #tpu.memory_space<vmem>>, vector<1x128xf32>
    %393 = arith.maximumf %391, %392 : vector<1x128xf32>
    %c61_358 = arith.constant 61 : index
    %c0_359 = arith.constant 0 : index
    %394 = vector.load %arg16[%c61_358, %c0_359] : memref<72x128xf32, #tpu.memory_space<vmem>>, vector<1x128xf32>
    %c62_360 = arith.constant 62 : index
    %c0_361 = arith.constant 0 : index
    %395 = vector.load %arg16[%c62_360, %c0_361] : memref<72x128xf32, #tpu.memory_space<vmem>>, vector<1x128xf32>
    %396 = arith.maximumf %394, %395 : vector<1x128xf32>
    %397 = arith.maximumf %393, %396 : vector<1x128xf32>
    %c1_362 = arith.constant 1 : index
    %c256_363 = arith.constant 256 : index
    %398 = vector.load %arg19[%c1_362, %c256_363] : memref<8x512xf32, #tpu.memory_space<vmem>>, vector<1x128xf32>
    tpu.vector_store %arg19[%c1_362, %c256_363], %397 {strides = array<i32>} : memref<8x512xf32, #tpu.memory_space<vmem>>, vector<1x128xf32>,
    %c57 = arith.constant 57 : index
    %c0_364 = arith.constant 0 : index
    %399 = vector.load %arg16[%c57, %c0_364] : memref<72x128xf32, #tpu.memory_space<vmem>>, vector<1x128xf32>
    %c58 = arith.constant 58 : index
    %c0_365 = arith.constant 0 : index
    %400 = vector.load %arg16[%c58, %c0_365] : memref<72x128xf32, #tpu.memory_space<vmem>>, vector<1x128xf32>
    %401 = arith.maximumf %399, %400 : vector<1x128xf32>
    %c63 = arith.constant 63 : index
    %c0_366 = arith.constant 0 : index
    %402 = vector.load %arg16[%c63, %c0_366] : memref<72x128xf32, #tpu.memory_space<vmem>>, vector<1x128xf32>
    %c64_367 = arith.constant 64 : index
    %c0_368 = arith.constant 0 : index
    %403 = vector.load %arg16[%c64_367, %c0_368] : memref<72x128xf32, #tpu.memory_space<vmem>>, vector<1x128xf32>
    %404 = arith.maximumf %402, %403 : vector<1x128xf32>
    %405 = arith.maximumf %401, %404 : vector<1x128xf32>
    %c1_369 = arith.constant 1 : index
    %c384_370 = arith.constant 384 : index
    %406 = vector.load %arg19[%c1_369, %c384_370] : memref<8x512xf32, #tpu.memory_space<vmem>>, vector<1x128xf32>
    tpu.vector_store %arg19[%c1_369, %c384_370], %405 {strides = array<i32>} : memref<8x512xf32, #tpu.memory_space<vmem>>, vector<1x128xf32>,
    %c0_371 = arith.constant 0 : index
    %c0_372 = arith.constant 0 : index
    %407 = vector.load %arg19[%c0_371, %c0_372] : memref<8x512xf32, #tpu.memory_space<vmem>>, vector<8x512xf32>
    %c0_373 = arith.constant 0 : index
    %c0_374 = arith.constant 0 : index
    %408 = vector.load %arg7[%c0_373, %c0_374] : memref<512x128xf32, #tpu.memory_space<vmem>>, vector<512x128xf32>
    %cst_375 = arith.constant dense<0.000000e+00> : vector<8x128xf32>
    %409 = tpu.matmul %407, %408, %cst_375 {dimension_numbers = #tpu.dot_dimension_numbers<[1], [0], [0], [1], [0, 0, 1, 1], [], []>} : vector<8x512xf32>, vector<512x128xf32>, vector<8x128xf32> -> vector<8x128xf32>
    %c0_376 = arith.constant 0 : index
    %c0_377 = arith.constant 0 : index
    %410 = vector.load %arg8[%c0_376, %c0_377] : memref<1x128xf32, #tpu.memory_space<vmem>>, vector<1x128xf32>
    %411 = vector.broadcast %410 : vector<1x128xf32> to vector<8x128xf32>
    %412 = arith.addf %409, %411 : vector<8x128xf32>
    %c0_378 = arith.constant 0 : index
    %c0_379 = arith.constant 0 : index
    %413 = vector.load %arg9[%c0_378, %c0_379] : memref<128x128xf32, #tpu.memory_space<vmem>>, vector<128x128xf32>
    %cst_380 = arith.constant dense<0.000000e+00> : vector<8x128xf32>
    %414 = tpu.matmul %412, %413, %cst_380 {dimension_numbers = #tpu.dot_dimension_numbers<[1], [0], [0], [1], [0, 0, 1, 1], [], []>} : vector<8x128xf32>, vector<128x128xf32>, vector<8x128xf32> -> vector<8x128xf32>
    %c0_381 = arith.constant 0 : index
    %c0_382 = arith.constant 0 : index
    %415 = vector.load %arg10[%c0_381, %c0_382] : memref<1x128xf32, #tpu.memory_space<vmem>>, vector<1x128xf32>
    %416 = vector.broadcast %415 : vector<1x128xf32> to vector<8x128xf32>
    %417 = arith.addf %414, %416 : vector<8x128xf32>
    %c0_383 = arith.constant 0 : index
    %c0_384 = arith.constant 0 : index
    %418 = vector.load %arg11[%c0_383, %c0_384] : memref<8x128xf32, #tpu.memory_space<vmem>>, vector<8x128xf32>
    tpu.vector_store %arg11[%c0_383, %c0_384], %417 {strides = array<i32>} : memref<8x128xf32, #tpu.memory_space<vmem>>, vector<8x128xf32>,
    return
  }
}

</mosaic_0001>

<llo_original>
// kernel: dogcat_forward.1
$region0: #{dogcat_forward.1}
  #allocation0 [shape = 'u32[]', space=smem, size = 0x4, offset = 0x4, fixed_abs, tag = 'smem constant byte address 0x4 - core index']
  #allocation1 [shape = 'u32[144,128]{1,0:T(1,128)}', space=vmem, size = 0x12000, scoped, tag = 'internal scratch']
  #allocation2 [shape = 'f32[512,32]{1,0:T(8,128)}', space=vmem, size = 0x40000, scoped, tag = 'scratch operand']
  #allocation3 [shape = 'f32[200,32]{1,0:T(8,128)}', space=vmem, size = 0x19000, scoped, tag = 'scratch operand']
  #allocation4 [shape = 'f32[200,64]{1,0:T(8,128)}', space=vmem, size = 0x19000, scoped, tag = 'scratch operand']
  #allocation5 [shape = 'f32[72,64]{1,0:T(8,128)}', space=vmem, size = 0x9000, scoped, tag = 'scratch operand']
  #allocation6 [shape = 'f32[72,128]{1,0:T(8,128)}', space=vmem, size = 0x9000, scoped, tag = 'scratch operand']
  #allocation7 [shape = 'f32[128,288]{1,0:T(8,128)}', space=vmem, size = 0x30000, scoped, tag = 'scratch operand']
  #allocation8 [shape = 'f32[128,576]{1,0:T(8,128)}', space=vmem, size = 0x50000, scoped, tag = 'scratch operand']
  #allocation9 [shape = 'f32[8,512]{1,0:T(8,128)}', space=vmem, size = 0x4000, scoped, tag = 'scratch operand']
  %s0 = inlined_call_operand.vmem [shape: f32[512,27], index: 0, kind: input, shape index: {}]
  %s1 = inlined_call_operand.vmem [shape: f32[27,32], index: 1, kind: input, shape index: {}]
  %s2 = inlined_call_operand.vmem [shape: f32[1,32], index: 2, kind: input, shape index: {}]
  %s3 = inlined_call_operand.vmem [shape: f32[288,64], index: 3, kind: input, shape index: {}]
  %s4 = inlined_call_operand.vmem [shape: f32[1,64], index: 4, kind: input, shape index: {}]
  %s5 = inlined_call_operand.vmem [shape: f32[576,128], index: 5, kind: input, shape index: {}]
  %s6 = inlined_call_operand.vmem [shape: f32[1,128], index: 6, kind: input, shape index: {}]
  %s7 = inlined_call_operand.vmem [shape: f32[512,128], index: 7, kind: input, shape index: {}]
  %s8 = inlined_call_operand.vmem [shape: f32[1,128], index: 8, kind: input, shape index: {}]
  %s9 = inlined_call_operand.vmem [shape: f32[128,128], index: 9, kind: input, shape index: {}]
  %s10 = inlined_call_operand.vmem [shape: f32[1,128], index: 10, kind: input, shape index: {}]
  %s11 = inlined_call_operand.vmem [shape: f32[8,128], index: 11, kind: output, shape index: {}]
  %s12 = sld [smem:[#allocation0]]
  $region54: #{dogcat_forward.1} parent=0
    _
  %s14 = ssub.s32 1, %s12
  %s15 = scalar_select 0, %s14, %s12
  // Predicated region
  $region2: #{dogcat_forward.1} parent=0 // pred_check
    _
  $region3: #{dogcat_forward.1} parent=0 // pred_check_branch
    %17 = sbr.rel (0) target = $region5
  $region4: #{dogcat_forward.1} parent=0 // pred_region
    _
  $region5: #{dogcat_forward.1} parent=0 // pred_fallthru
    _
  // Predicated region
  $region6: #{dogcat_forward.1} parent=0 // pred_check
    _
  $region7: #{dogcat_forward.1} parent=0 // pred_check_branch
    %19 = sbr.rel (0) target = $region9
  $region8: #{dogcat_forward.1} parent=0 // pred_region
    _
  $region9: #{dogcat_forward.1} parent=0 // pred_fallthru
    _
  // Predicated region
  $region10: #{dogcat_forward.1} parent=0 // pred_check
    _
  $region11: #{dogcat_forward.1} parent=0 // pred_check_branch
    %21 = sbr.rel (0) target = $region13
  $region12: #{dogcat_forward.1} parent=0 // pred_region
    _
  $region13: #{dogcat_forward.1} parent=0 // pred_fallthru
    _
  // Predicated region
  $region14: #{dogcat_forward.1} parent=0 // pred_check
    _
  $region15: #{dogcat_forward.1} parent=0 // pred_check_branch
    %23 = sbr.rel (0) target = $region17
  $region16: #{dogcat_forward.1} parent=0 // pred_region
    _
  $region17: #{dogcat_forward.1} parent=0 // pred_fallthru
    _
  // Predicated region
  $region18: #{dogcat_forward.1} parent=0 // pred_check
    _
  $region19: #{dogcat_forward.1} parent=0 // pred_check_branch
    %25 = sbr.rel (0) target = $region21
  $region20: #{dogcat_forward.1} parent=0 // pred_region
    _
  $region21: #{dogcat_forward.1} parent=0 // pred_fallthru
    _
  // Predicated region
  $region22: #{dogcat_forward.1} parent=0 // pred_check
    _
  $region23: #{dogcat_forward.1} parent=0 // pred_check_branch
    %27 = sbr.rel (0) target = $region25
  $region24: #{dogcat_forward.1} parent=0 // pred_region
    _
  $region25: #{dogcat_forward.1} parent=0 // pred_fallthru
    _
  // Predicated region
  $region26: #{dogcat_forward.1} parent=0 // pred_check
    _
  $region27: #{dogcat_forward.1} parent=0 // pred_check_branch
    %29 = sbr.rel (0) target = $region29
  $region28: #{dogcat_forward.1} parent=0 // pred_region
    _
  $region29: #{dogcat_forward.1} parent=0 // pred_fallthru
    _
  // Predicated region
  $region30: #{dogcat_forward.1} parent=0 // pred_check
    _
  $region31: #{dogcat_forward.1} parent=0 // pred_check_branch
    %31 = sbr.rel (0) target = $region33
  $region32: #{dogcat_forward.1} parent=0 // pred_region
    _
  $region33: #{dogcat_forward.1} parent=0 // pred_fallthru
    _
  // Predicated region
  $region34: #{dogcat_forward.1} parent=0 // pred_check
    _
  $region35: #{dogcat_forward.1} parent=0 // pred_check_branch
    %33 = sbr.rel (0) target = $region37
  $region36: #{dogcat_forward.1} parent=0 // pred_region
    _
  $region37: #{dogcat_forward.1} parent=0 // pred_fallthru
    _
  // Predicated region
  $region38: #{dogcat_forward.1} parent=0 // pred_check
    _
  $region39: #{dogcat_forward.1} parent=0 // pred_check_branch
    %35 = sbr.rel (0) target = $region41
  $region40: #{dogcat_forward.1} parent=0 // pred_region
    _
  $region41: #{dogcat_forward.1} parent=0 // pred_fallthru
    _
  // Predicated region
  $region42: #{dogcat_forward.1} parent=0 // pred_check
    _
  $region43: #{dogcat_forward.1} parent=0 // pred_check_branch
    %37 = sbr.rel (0) target = $region45
  $region44: #{dogcat_forward.1} parent=0 // pred_region
    _
  $region45: #{dogcat_forward.1} parent=0 // pred_fallthru
    _
  %v38 = vld [vmem:[%s2] sm:$0x1]
  %v39 = vld [vmem:[%s0] sm:$0xff]
  %v40 = vld [vmem:[%s0 + $0x8] sm:$0xff]
  %v41 = vld [vmem:[%s0 + $0x10] sm:$0xff]
  %v42 = vld [vmem:[%s0 + $0x18] sm:$0xff]
  %v43 = vld [vmem:[%s0 + $0x20] sm:$0xff]
  %v44 = vld [vmem:[%s0 + $0x28] sm:$0xff]
  %v45 = vld [vmem:[%s0 + $0x30] sm:$0xff]
  %v46 = vld [vmem:[%s0 + $0x38] sm:$0xff]
  %v47 = vld [vmem:[%s0 + $0x40] sm:$0xff]
  %v48 = vld [vmem:[%s0 + $0x48] sm:$0xff]
  %v49 = vld [vmem:[%s0 + $0x50] sm:$0xff]
  %v50 = vld [vmem:[%s0 + $0x58] sm:$0xff]
  %v51 = vld [vmem:[%s0 + $0x60] sm:$0xff]
  %v52 = vld [vmem:[%s0 + $0x68] sm:$0xff]
  %v53 = vld [vmem:[%s0 + $0x70] sm:$0xff]
  %v54 = vld [vmem:[%s0 + $0x78] sm:$0xff]
  %v55 = vld [vmem:[%s1] sm:$0xff]
  %v56 = vld [vmem:[%s1 + $0x8] sm:$0xff]
  %v57 = vld [vmem:[%s1 + $0x10] sm:$0xff]
  %v58 = vld [vmem:[%s1 + $0x18] sm:$0x7]
  %v60 = vlaneseq
  %v61 = vshrl.u32 %v60, 7
  %v62 = vsub.s32 0, %v61
  %v63 = vrot.slane %v38, %v62
  %vm65 = vcmask 220160
  %v67 = vsel %vm65, %v39, 0
  %v70 = vsel %vm65, %v40, 0
  %v73 = vsel %vm65, %v41, 0
  %v76 = vsel %vm65, %v42, 0
  %v79 = vsel %vm65, %v43, 0
  %v82 = vsel %vm65, %v44, 0
  %v85 = vsel %vm65, %v45, 0
  %v88 = vsel %vm65, %v46, 0
  %v91 = vsel %vm65, %v47, 0
  %v94 = vsel %vm65, %v48, 0
  %v97 = vsel %vm65, %v49, 0
  %v100 = vsel %vm65, %v50, 0
  %v103 = vsel %vm65, %v51, 0
  %v106 = vsel %vm65, %v52, 0
  %v109 = vsel %vm65, %v53, 0
  %v112 = vsel %vm65, %v54, 0
  %vm114 = vcmask 1042432
  %v116 = vsel %vm114, %v58, 0
  %118 = vmatprep.subr.mxu0 0.0
  %119 = vmatpush1.msra.mxu0 %v55
  %120 = vmatprep.subr.mxu0 0.0
  %121 = vmatpush1.msra.mxu0 %v56
  %122 = vmatprep.subr.mxu0 0.0
  %123 = vmatpush1.msra.mxu0 %v57
  %124 = vmatprep.subr.mxu0 0.0
  %125 = vmatpush1.msra.mxu0 %v116
  %126 = vmatprep.subr.mxu0 0.0
  %127 = vmatpush1.msra.mxu0 0.0
  %128 = vmatprep.subr.mxu0 0.0
  %129 = vmatpush1.msra.mxu0 0.0
  %130 = vmatprep.subr.mxu0 0.0
  %131 = vmatpush1.msra.mxu0 0.0
  %132 = vmatprep.subr.mxu0 0.0
  %133 = vmatpush1.msra.mxu0 0.0
  %134 = vmatprep.subr.mxu0 0.0
  %135 = vmatpush1.msra.mxu0 0.0
  %136 = vmatprep.subr.mxu0 0.0
  %137 = vmatpush1.msra.mxu0 0.0
  %138 = vmatprep.subr.mxu0 0.0
  %139 = vmatpush1.msra.mxu0 0.0
  %140 = vmatprep.subr.mxu0 0.0
  %141 = vmatpush1.msra.mxu0 0.0
  %142 = vmatprep.subr.mxu0 0.0
  %143 = vmatpush1.msra.mxu0 0.0
  %144 = vmatprep.subr.mxu0 0.0
  %145 = vmatpush1.msra.mxu0 0.0
  %146 = vmatprep.subr.mxu0 0.0
  %147 = vmatpush1.msra.mxu0 0.0
  %148 = vmatprep.subr.mxu0 0.0
  %149 = vmatpush1.msra.mxu0 0.0
  %150 = vmatprep.subr.mxu0 0.0
  %151 = vmatpush1.msra.mxu0 0.0
  %152 = vmatprep.subr.mxu0 0.0
  %153 = vmatpush1.msra.mxu0 0.0
  %154 = vmatprep.subr.mxu0 0.0
  %155 = vmatpush1.msra.mxu0 0.0
  %156 = vmatprep.subr.mxu0 0.0
  %157 = vmatpush1.msra.mxu0 0.0
  %158 = vmatprep.subr.mxu0 0.0
  %159 = vmatpush1.msra.mxu0 0.0
  %160 = vmatprep.subr.mxu0 0.0
  %161 = vmatpush1.msra.mxu0 0.0
  %162 = vmatprep.subr.mxu0 0.0
  %163 = vmatpush1.msra.mxu0 0.0
  %164 = vmatprep.subr.mxu0 0.0
  %165 = vmatpush1.msra.mxu0 0.0
  %166 = vmatprep.subr.mxu0 0.0
  %167 = vmatpush1.msra.mxu0 0.0
  %168 = vmatprep.subr.mxu0 0.0
  %169 = vmatpush1.msra.mxu0 0.0
  %170 = vmatprep.subr.mxu0 0.0
  %171 = vmatpush1.msra.mxu0 0.0
  %172 = vmatprep.subr.mxu0 0.0
  %173 = vmatpush1.msra.mxu0 0.0
  %174 = vmatprep.subr.mxu0 0.0
  %175 = vmatpush1.msra.mxu0 0.0
  %176 = vmatprep.subr.mxu0 0.0
  %177 = vmatpush1.msra.mxu0 0.0
  %178 = vmatprep.subr.mxu0 0.0
  %179 = vmatpush1.msra.mxu0 0.0
  %180 = vmatprep.subr.mxu0 0.0
  %181 = vmatpush1.msra.mxu0 0.0
  %182 = vmatprep.mubr.f32.mxu0 0.0
  %183 = vmatmul.mubr.f32.gmra.mrb[0].mxu0 %v67
  %v184 = vpop.f32.mrb[0].mxu0
  %v185 = vadd.f32 %v63, %v184
  %v186 = vpop.f32.mrb[0].mxu0
  %187 = vmatprep.mubr.f32.mxu0 0.0
  %188 = vmatmul.mubr.f32.gmra.mrb[0].mxu0 %v70
  %v189 = vpop.f32.mrb[0].mxu0
  %v190 = vadd.f32 %v63, %v189
  %v191 = vpop.f32.mrb[0].mxu0
  %192 = vmatprep.mubr.f32.mxu0 0.0
  %193 = vmatmul.mubr.f32.gmra.mrb[0].mxu0 %v73
  %v194 = vpop.f32.mrb[0].mxu0
  %v195 = vadd.f32 %v63, %v194
  %v196 = vpop.f32.mrb[0].mxu0
  %197 = vmatprep.mubr.f32.mxu0 0.0
  %198 = vmatmul.mubr.f32.gmra.mrb[0].mxu0 %v76
  %v199 = vpop.f32.mrb[0].mxu0
  %v200 = vadd.f32 %v63, %v199
  %v201 = vpop.f32.mrb[0].mxu0
  %202 = vmatprep.mubr.f32.mxu0 0.0
  %203 = vmatmul.mubr.f32.gmra.mrb[0].mxu0 %v79
  %v204 = vpop.f32.mrb[0].mxu0
  %v205 = vadd.f32 %v63, %v204
  %v206 = vpop.f32.mrb[0].mxu0
  %207 = vmatprep.mubr.f32.mxu0 0.0
  %208 = vmatmul.mubr.f32.gmra.mrb[0].mxu0 %v82
  %v209 = vpop.f32.mrb[0].mxu0
  %v210 = vadd.f32 %v63, %v209
  %v211 = vpop.f32.mrb[0].mxu0
  %212 = vmatprep.mubr.f32.mxu0 0.0
  %213 = vmatmul.mubr.f32.gmra.mrb[0].mxu0 %v85
  %v214 = vpop.f32.mrb[0].mxu0
  %v215 = vadd.f32 %v63, %v214
  %v216 = vpop.f32.mrb[0].mxu0
  %217 = vmatprep.mubr.f32.mxu0 0.0
  %218 = vmatmul.mubr.f32.gmra.mrb[0].mxu0 %v88
  %v219 = vpop.f32.mrb[0].mxu0
  %v220 = vadd.f32 %v63, %v219
  %v221 = vpop.f32.mrb[0].mxu0
  %222 = vmatprep.mubr.f32.mxu0 0.0
  %223 = vmatmul.mubr.f32.gmra.mrb[0].mxu0 %v91
  %v224 = vpop.f32.mrb[0].mxu0
  %v225 = vadd.f32 %v63, %v224
  %v226 = vpop.f32.mrb[0].mxu0
  %227 = vmatprep.mubr.f32.mxu0 0.0
  %228 = vmatmul.mubr.f32.gmra.mrb[0].mxu0 %v94
  %v229 = vpop.f32.mrb[0].mxu0
  %v230 = vadd.f32 %v63, %v229
  %v231 = vpop.f32.mrb[0].mxu0
  %232 = vmatprep.mubr.f32.mxu0 0.0
  %233 = vmatmul.mubr.f32.gmra.mrb[0].mxu0 %v97
  %v234 = vpop.f32.mrb[0].mxu0
  %v235 = vadd.f32 %v63, %v234
  %v236 = vpop.f32.mrb[0].mxu0
  %237 = vmatprep.mubr.f32.mxu0 0.0
  %238 = vmatmul.mubr.f32.gmra.mrb[0].mxu0 %v100
  %v239 = vpop.f32.mrb[0].mxu0
  %v240 = vadd.f32 %v63, %v239
  %v241 = vpop.f32.mrb[0].mxu0
  %242 = vmatprep.mubr.f32.mxu0 0.0
  %243 = vmatmul.mubr.f32.gmra.mrb[0].mxu0 %v103
  %v244 = vpop.f32.mrb[0].mxu0
  %v245 = vadd.f32 %v63, %v244
  %v246 = vpop.f32.mrb[0].mxu0
  %247 = vmatprep.mubr.f32.mxu0 0.0
  %248 = vmatmul.mubr.f32.gmra.mrb[0].mxu0 %v106
  %v249 = vpop.f32.mrb[0].mxu0
  %v250 = vadd.f32 %v63, %v249
  %v251 = vpop.f32.mrb[0].mxu0
  %252 = vmatprep.mubr.f32.mxu0 0.0
  %253 = vmatmul.mubr.f32.gmra.mrb[0].mxu0 %v109
  %v254 = vpop.f32.mrb[0].mxu0
  %v255 = vadd.f32 %v63, %v254
  %v256 = vpop.f32.mrb[0].mxu0
  %257 = vmatprep.mubr.f32.mxu0 0.0
  %258 = vmatmul.mubr.f32.gmra.mrb[0].mxu0 %v112
  %v259 = vpop.f32.mrb[0].mxu0
  %v260 = vadd.f32 %v63, %v259
  %v261 = vpop.f32.mrb[0].mxu0
  %262 = vdwg.mxu0
  %v263 = vmax.f32 %v185, 0.0
  %v264 = vmax.f32 %v190, 0.0
  %v265 = vmax.f32 %v195, 0.0
  %v266 = vmax.f32 %v200, 0.0
  %v267 = vmax.f32 %v205, 0.0
  %v268 = vmax.f32 %v210, 0.0
  %v269 = vmax.f32 %v215, 0.0
  %v270 = vmax.f32 %v220, 0.0
  %v271 = vmax.f32 %v225, 0.0
  %v272 = vmax.f32 %v230, 0.0
  %v273 = vmax.f32 %v235, 0.0
  %v274 = vmax.f32 %v240, 0.0
  %v275 = vmax.f32 %v245, 0.0
  %v276 = vmax.f32 %v250, 0.0
  %v277 = vmax.f32 %v255, 0.0
  %v278 = vmax.f32 %v260, 0.0
  %vm279 = vcmask 261120
  %280 = vst.msk [vmem:[#allocation2] sm:$0xff] %vm279, %v263
  %281 = vst.msk [vmem:[#allocation2 + $0x8] sm:$0xff] %vm279, %v264
  %282 = vst.msk [vmem:[#allocation2 + $0x10] sm:$0xff] %vm279, %v265
  %283 = vst.msk [vmem:[#allocation2 + $0x18] sm:$0xff] %vm279, %v266
  %284 = vst.msk [vmem:[#allocation2 + $0x20] sm:$0xff] %vm279, %v267
  %285 = vst.msk [vmem:[#allocation2 + $0x28] sm:$0xff] %vm279, %v268
  %286 = vst.msk [vmem:[#allocation2 + $0x30] sm:$0xff] %vm279, %v269
  %287 = vst.msk [vmem:[#allocation2 + $0x38] sm:$0xff] %vm279, %v270
  %288 = vst.msk [vmem:[#allocation2 + $0x40] sm:$0xff] %vm279, %v271
  %289 = vst.msk [vmem:[#allocation2 + $0x48] sm:$0xff] %vm279, %v272
  %290 = vst.msk [vmem:[#allocation2 + $0x50] sm:$0xff] %vm279, %v273
  %291 = vst.msk [vmem:[#allocation2 + $0x58] sm:$0xff] %vm279, %v274
  %292 = vst.msk [vmem:[#allocation2 + $0x60] sm:$0xff] %vm279, %v275
  %293 = vst.msk [vmem:[#allocation2 + $0x68] sm:$0xff] %vm279, %v276
  %294 = vst.msk [vmem:[#allocation2 + $0x70] sm:$0xff] %vm279, %v277
  %295 = vst.msk [vmem:[#allocation2 + $0x78] sm:$0xff] %vm279, %v278
  %v296 = vld [vmem:[%s0 + $0x80] sm:$0xff]
  %v297 = vld [vmem:[%s0 + $0x88] sm:$0xff]
  %v298 = vld [vmem:[%s0 + $0x90] sm:$0xff]
  %v299 = vld [vmem:[%s0 + $0x98] sm:$0xff]
  %v300 = vld [vmem:[%s0 + $0xa0] sm:$0xff]
  %v301 = vld [vmem:[%s0 + $0xa8] sm:$0xff]
  %v302 = vld [vmem:[%s0 + $0xb0] sm:$0xff]
  %v303 = vld [vmem:[%s0 + $0xb8] sm:$0xff]
  %v304 = vld [vmem:[%s0 + $0xc0] sm:$0xff]
  %v305 = vld [vmem:[%s0 + $0xc8] sm:$0xff]
  %v306 = vld [vmem:[%s0 + $0xd0] sm:$0xff]
  %v307 = vld [vmem:[%s0 + $0xd8] sm:$0xff]
  %v308 = vld [vmem:[%s0 + $0xe0] sm:$0xff]
  %v309 = vld [vmem:[%s0 + $0xe8] sm:$0xff]
  %v310 = vld [vmem:[%s0 + $0xf0] sm:$0xff]
  %v311 = vld [vmem:[%s0 + $0xf8] sm:$0xff]
  %v312 = vld [vmem:[%s1] sm:$0xff]
  %v313 = vld [vmem:[%s1 + $0x8] sm:$0xff]
  %v314 = vld [vmem:[%s1 + $0x10] sm:$0xff]
  %v315 = vld [vmem:[%s1 + $0x18] sm:$0x7]
  %v317 = vsel %vm65, %v296, 0
  %v320 = vsel %vm65, %v297, 0
  %v323 = vsel %vm65, %v298, 0
  %v326 = vsel %vm65, %v299, 0
  %v329 = vsel %vm65, %v300, 0
  %v332 = vsel %vm65, %v301, 0
  %v335 = vsel %vm65, %v302, 0
  %v338 = vsel %vm65, %v303, 0
  %v341 = vsel %vm65, %v304, 0
  %v344 = vsel %vm65, %v305, 0
  %v347 = vsel %vm65, %v306, 0
  %v350 = vsel %vm65, %v307, 0
  %v353 = vsel %vm65, %v308, 0
  %v356 = vsel %vm65, %v309, 0
  %v359 = vsel %vm65, %v310, 0
  %v362 = vsel %vm65, %v311, 0
  %v365 = vsel %vm114, %v315, 0
  %367 = vmatprep.subr.mxu0 0.0
  %368 = vmatpush1.msra.mxu0 %v312
  %369 = vmatprep.subr.mxu0 0.0
  %370 = vmatpush1.msra.mxu0 %v313
  %371 = vmatprep.subr.mxu0 0.0
  %372 = vmatpush1.msra.mxu0 %v314
  %373 = vmatprep.subr.mxu0 0.0
  %374 = vmatpush1.msra.mxu0 %v365
  %375 = vmatprep.subr.mxu0 0.0
  %376 = vmatpush1.msra.mxu0 0.0
  %377 = vmatprep.subr.mxu0 0.0
  %378 = vmatpush1.msra.mxu0 0.0
  %379 = vmatprep.subr.mxu0 0.0
  %380 = vmatpush1.msra.mxu0 0.0
  %381 = vmatprep.subr.mxu0 0.0
  %382 = vmatpush1.msra.mxu0 0.0
  %383 = vmatprep.subr.mxu0 0.0
  %384 = vmatpush1.msra.mxu0 0.0
  %385 = vmatprep.subr.mxu0 0.0
  %386 = vmatpush1.msra.mxu0 0.0
  %387 = vmatprep.subr.mxu0 0.0
  %388 = vmatpush1.msra.mxu0 0.0
  %389 = vmatprep.subr.mxu0 0.0
  %390 = vmatpush1.msra.mxu0 0.0
  %391 = vmatprep.subr.mxu0 0.0
  %392 = vmatpush1.msra.mxu0 0.0
  %393 = vmatprep.subr.mxu0 0.0
  %394 = vmatpush1.msra.mxu0 0.0
  %395 = vmatprep.subr.mxu0 0.0
  %396 = vmatpush1.msra.mxu0 0.0
  %397 = vmatprep.subr.mxu0 0.0
  %398 = vmatpush1.msra.mxu0 0.0
  %399 = vmatprep.subr.mxu0 0.0
  %400 = vmatpush1.msra.mxu0 0.0
  %401 = vmatprep.subr.mxu0 0.0
  %402 = vmatpush1.msra.mxu0 0.0
  %403 = vmatprep.subr.mxu0 0.0
  %404 = vmatpush1.msra.mxu0 0.0
  %405 = vmatprep.subr.mxu0 0.0
  %406 = vmatpush1.msra.mxu0 0.0
  %407 = vmatprep.subr.mxu0 0.0
  %408 = vmatpush1.msra.mxu0 0.0
  %409 = vmatprep.subr.mxu0 0.0
  %410 = vmatpush1.msra.mxu0 0.0
  %411 = vmatprep.subr.mxu0 0.0
  %412 = vmatpush1.msra.mxu0 0.0
  %413 = vmatprep.subr.mxu0 0.0
  %414 = vmatpush1.msra.mxu0 0.0
  %415 = vmatprep.subr.mxu0 0.0
  %416 = vmatpush1.msra.mxu0 0.0
  %417 = vmatprep.subr.mxu0 0.0
  %418 = vmatpush1.msra.mxu0 0.0
  %419 = vmatprep.subr.mxu0 0.0
  %420 = vmatpush1.msra.mxu0 0.0
  %421 = vmatprep.subr.mxu0 0.0
  %422 = vmatpush1.msra.mxu0 0.0
  %423 = vmatprep.subr.mxu0 0.0
  %424 = vmatpush1.msra.mxu0 0.0
  %425 = vmatprep.subr.mxu0 0.0
  %426 = vmatpush1.msra.mxu0 0.0
  %427 = vmatprep.subr.mxu0 0.0
  %428 = vmatpush1.msra.mxu0 0.0
  %429 = vmatprep.subr.mxu0 0.0
  %430 = vmatpush1.msra.mxu0 0.0
  %431 = vmatprep.mubr.f32.mxu0 0.0
  %432 = vmatmul.mubr.f32.gmra.mrb[0].mxu0 %v317
  %v433 = vpop.f32.mrb[0].mxu0
  %v434 = vadd.f32 %v63, %v433
  %v435 = vpop.f32.mrb[0].mxu0
  %436 = vmatprep.mubr.f32.mxu0 0.0
  %437 = vmatmul.mubr.f32.gmra.mrb[0].mxu0 %v320
  %v438 = vpop.f32.mrb[0].mxu0
  %v439 = vadd.f32 %v63, %v438
  %v440 = vpop.f32.mrb[0].mxu0
  %441 = vmatprep.mubr.f32.mxu0 0.0
  %442 = vmatmul.mubr.f32.gmra.mrb[0].mxu0 %v323
  %v443 = vpop.f32.mrb[0].mxu0
  %v444 = vadd.f32 %v63, %v443
  %v445 = vpop.f32.mrb[0].mxu0
  %446 = vmatprep.mubr.f32.mxu0 0.0
  %447 = vmatmul.mubr.f32.gmra.mrb[0].mxu0 %v326
  %v448 = vpop.f32.mrb[0].mxu0
  %v449 = vadd.f32 %v63, %v448
  %v450 = vpop.f32.mrb[0].mxu0
  %451 = vmatprep.mubr.f32.mxu0 0.0
  %452 = vmatmul.mubr.f32.gmra.mrb[0].mxu0 %v329
  %v453 = vpop.f32.mrb[0].mxu0
  %v454 = vadd.f32 %v63, %v453
  %v455 = vpop.f32.mrb[0].mxu0
  %456 = vmatprep.mubr.f32.mxu0 0.0
  %457 = vmatmul.mubr.f32.gmra.mrb[0].mxu0 %v332
  %v458 = vpop.f32.mrb[0].mxu0
  %v459 = vadd.f32 %v63, %v458
  %v460 = vpop.f32.mrb[0].mxu0
  %461 = vmatprep.mubr.f32.mxu0 0.0
  %462 = vmatmul.mubr.f32.gmra.mrb[0].mxu0 %v335
  %v463 = vpop.f32.mrb[0].mxu0
  %v464 = vadd.f32 %v63, %v463
  %v465 = vpop.f32.mrb[0].mxu0
  %466 = vmatprep.mubr.f32.mxu0 0.0
  %467 = vmatmul.mubr.f32.gmra.mrb[0].mxu0 %v338
  %v468 = vpop.f32.mrb[0].mxu0
  %v469 = vadd.f32 %v63, %v468
  %v470 = vpop.f32.mrb[0].mxu0
  %471 = vmatprep.mubr.f32.mxu0 0.0
  %472 = vmatmul.mubr.f32.gmra.mrb[0].mxu0 %v341
  %v473 = vpop.f32.mrb[0].mxu0
  %v474 = vadd.f32 %v63, %v473
  %v475 = vpop.f32.mrb[0].mxu0
  %476 = vmatprep.mubr.f32.mxu0 0.0
  %477 = vmatmul.mubr.f32.gmra.mrb[0].mxu0 %v344
  %v478 = vpop.f32.mrb[0].mxu0
  %v479 = vadd.f32 %v63, %v478
  %v480 = vpop.f32.mrb[0].mxu0
  %481 = vmatprep.mubr.f32.mxu0 0.0
  %482 = vmatmul.mubr.f32.gmra.mrb[0].mxu0 %v347
  %v483 = vpop.f32.mrb[0].mxu0
  %v484 = vadd.f32 %v63, %v483
  %v485 = vpop.f32.mrb[0].mxu0
  %486 = vmatprep.mubr.f32.mxu0 0.0
  %487 = vmatmul.mubr.f32.gmra.mrb[0].mxu0 %v350
  %v488 = vpop.f32.mrb[0].mxu0
  %v489 = vadd.f32 %v63, %v488
  %v490 = vpop.f32.mrb[0].mxu0
  %491 = vmatprep.mubr.f32.mxu0 0.0
  %492 = vmatmul.mubr.f32.gmra.mrb[0].mxu0 %v353
  %v493 = vpop.f32.mrb[0].mxu0
  %v494 = vadd.f32 %v63, %v493
  %v495 = vpop.f32.mrb[0].mxu0
  %496 = vmatprep.mubr.f32.mxu0 0.0
  %497 = vmatmul.mubr.f32.gmra.mrb[0].mxu0 %v356
  %v498 = vpop.f32.mrb[0].mxu0
  %v499 = vadd.f32 %v63, %v498
  %v500 = vpop.f32.mrb[0].mxu0
  %501 = vmatprep.mubr.f32.mxu0 0.0
  %502 = vmatmul.mubr.f32.gmra.mrb[0].mxu0 %v359
  %v503 = vpop.f32.mrb[0].mxu0
  %v504 = vadd.f32 %v63, %v503
  %v505 = vpop.f32.mrb[0].mxu0
  %506 = vmatprep.mubr.f32.mxu0 0.0
  %507 = vmatmul.mubr.f32.gmra.mrb[0].mxu0 %v362
  %v508 = vpop.f32.mrb[0].mxu0
  %v509 = vadd.f32 %v63, %v508
  %v510 = vpop.f32.mrb[0].mxu0
  %511 = vdwg.mxu0
  %v512 = vmax.f32 %v434, 0.0
  %v513 = vmax.f32 %v439, 0.0
  %v514 = vmax.f32 %v444, 0.0
  %v515 = vmax.f32 %v449, 0.0
  %v516 = vmax.f32 %v454, 0.0
  %v517 = vmax.f32 %v459, 0.0
  %v518 = vmax.f32 %v464, 0.0
  %v519 = vmax.f32 %v469, 0.0
  %v520 = vmax.f32 %v474, 0.0
  %v521 = vmax.f32 %v479, 0.0
  %v522 = vmax.f32 %v484, 0.0
  %v523 = vmax.f32 %v489, 0.0
  %v524 = vmax.f32 %v494, 0.0
  %v525 = vmax.f32 %v499, 0.0
  %v526 = vmax.f32 %v504, 0.0
  %v527 = vmax.f32 %v509, 0.0
  %528 = vst.msk [vmem:[#allocation2 + $0x80] sm:$0xff] %vm279, %v512
  %529 = vst.msk [vmem:[#allocation2 + $0x88] sm:$0xff] %vm279, %v513
  %530 = vst.msk [vmem:[#allocation2 + $0x90] sm:$0xff] %vm279, %v514
  %531 = vst.msk [vmem:[#allocation2 + $0x98] sm:$0xff] %vm279, %v515
  %532 = vst.msk [vmem:[#allocation2 + $0xa0] sm:$0xff] %vm279, %v516
  %533 = vst.msk [vmem:[#allocation2 + $0xa8] sm:$0xff] %vm279, %v517
  %534 = vst.msk [vmem:[#allocation2 + $0xb0] sm:$0xff] %vm279, %v518
  %535 = vst.msk [vmem:[#allocation2 + $0xb8] sm:$0xff] %vm279, %v519
  %536 = vst.msk [vmem:[#allocation2 + $0xc0] sm:$0xff] %vm279, %v520
  %537 = vst.msk [vmem:[#allocation2 + $0xc8] sm:$0xff] %vm279, %v521
  %538 = vst.msk [vmem:[#allocation2 + $0xd0] sm:$0xff] %vm279, %v522
  %539 = vst.msk [vmem:[#allocation2 + $0xd8] sm:$0xff] %vm279, %v523
  %540 = vst.msk [vmem:[#allocation2 + $0xe0] sm:$0xff] %vm279, %v524
  %541 = vst.msk [vmem:[#allocation2 + $0xe8] sm:$0xff] %vm279, %v525
  %542 = vst.msk [vmem:[#allocation2 + $0xf0] sm:$0xff] %vm279, %v526
  %543 = vst.msk [vmem:[#allocation2 + $0xf8] sm:$0xff] %vm279, %v527
  %v544 = vld [vmem:[%s0 + $0x100] sm:$0xff]
  %v545 = vld [vmem:[%s0 + $0x108] sm:$0xff]
  %v546 = vld [vmem:[%s0 + $0x110] sm:$0xff]
  %v547 = vld [vmem:[%s0 + $0x118] sm:$0xff]
  %v548 = vld [vmem:[%s0 + $0x120] sm:$0xff]
  %v549 = vld [vmem:[%s0 + $0x128] sm:$0xff]
  %v550 = vld [vmem:[%s0 + $0x130] sm:$0xff]
  %v551 = vld [vmem:[%s0 + $0x138] sm:$0xff]
  %v552 = vld [vmem:[%s0 + $0x140] sm:$0xff]
  %v553 = vld [vmem:[%s0 + $0x148] sm:$0xff]
  %v554 = vld [vmem:[%s0 + $0x150] sm:$0xff]
  %v555 = vld [vmem:[%s0 + $0x158] sm:$0xff]
  %v556 = vld [vmem:[%s0 + $0x160] sm:$0xff]
  %v557 = vld [vmem:[%s0 + $0x168] sm:$0xff]
  %v558 = vld [vmem:[%s0 + $0x170] sm:$0xff]
  %v559 = vld [vmem:[%s0 + $0x178] sm:$0xff]
  %v560 = vld [vmem:[%s1] sm:$0xff]
  %v561 = vld [vmem:[%s1 + $0x8] sm:$0xff]
  %v562 = vld [vmem:[%s1 + $0x10] sm:$0xff]
  %v563 = vld [vmem:[%s1 + $0x18] sm:$0x7]
  %v565 = vsel %vm65, %v544, 0
  %v568 = vsel %vm65, %v545, 0
  %v571 = vsel %vm65, %v546, 0
  %v574 = vsel %vm65, %v547, 0
  %v577 = vsel %vm65, %v548, 0
  %v580 = vsel %vm65, %v549, 0
  %v583 = vsel %vm65, %v550, 0
  %v586 = vsel %vm65, %v551, 0
  %v589 = vsel %vm65, %v552, 0
  %v592 = vsel %vm65, %v553, 0
  %v595 = vsel %vm65, %v554, 0
  %v598 = vsel %vm65, %v555, 0
  %v601 = vsel %vm65, %v556, 0
  %v604 = vsel %vm65, %v557, 0
  %v607 = vsel %vm65, %v558, 0
  %v610 = vsel %vm65, %v559, 0
  %v613 = vsel %vm114, %v563, 0
  %615 = vmatprep.subr.mxu0 0.0
  %616 = vmatpush1.msra.mxu0 %v560
  %617 = vmatprep.subr.mxu0 0.0
  %618 = vmatpush1.msra.mxu0 %v561
  %619 = vmatprep.subr.mxu0 0.0
  %620 = vmatpush1.msra.mxu0 %v562
  %621 = vmatprep.subr.mxu0 0.0
  %622 = vmatpush1.msra.mxu0 %v613
  %623 = vmatprep.subr.mxu0 0.0
  %624 = vmatpush1.msra.mxu0 0.0
  %625 = vmatprep.subr.mxu0 0.0
  %626 = vmatpush1.msra.mxu0 0.0
  %627 = vmatprep.subr.mxu0 0.0
  %628 = vmatpush1.msra.mxu0 0.0
  %629 = vmatprep.subr.mxu0 0.0
  %630 = vmatpush1.msra.mxu0 0.0
  %631 = vmatprep.subr.mxu0 0.0
  %632 = vmatpush1.msra.mxu0 0.0
  %633 = vmatprep.subr.mxu0 0.0
  %634 = vmatpush1.msra.mxu0 0.0
  %635 = vmatprep.subr.mxu0 0.0
  %636 = vmatpush1.msra.mxu0 0.0
  %637 = vmatprep.subr.mxu0 0.0
  %638 = vmatpush1.msra.mxu0 0.0
  %639 = vmatprep.subr.mxu0 0.0
  %640 = vmatpush1.msra.mxu0 0.0
  %641 = vmatprep.subr.mxu0 0.0
  %642 = vmatpush1.msra.mxu0 0.0
  %643 = vmatprep.subr.mxu0 0.0
  %644 = vmatpush1.msra.mxu0 0.0
  %645 = vmatprep.subr.mxu0 0.0
  %646 = vmatpush1.msra.mxu0 0.0
  %647 = vmatprep.subr.mxu0 0.0
  %648 = vmatpush1.msra.mxu0 0.0
  %649 = vmatprep.subr.mxu0 0.0
  %650 = vmatpush1.msra.mxu0 0.0
  %651 = vmatprep.subr.mxu0 0.0
  %652 = vmatpush1.msra.mxu0 0.0
  %653 = vmatprep.subr.mxu0 0.0
  %654 = vmatpush1.msra.mxu0 0.0
  %655 = vmatprep.subr.mxu0 0.0
  %656 = vmatpush1.msra.mxu0 0.0
  %657 = vmatprep.subr.mxu0 0.0
  %658 = vmatpush1.msra.mxu0 0.0
  %659 = vmatprep.subr.mxu0 0.0
  %660 = vmatpush1.msra.mxu0 0.0
  %661 = vmatprep.subr.mxu0 0.0
  %662 = vmatpush1.msra.mxu0 0.0
  %663 = vmatprep.subr.mxu0 0.0
  %664 = vmatpush1.msra.mxu0 0.0
  %665 = vmatprep.subr.mxu0 0.0
  %666 = vmatpush1.msra.mxu0 0.0
  %667 = vmatprep.subr.mxu0 0.0
  %668 = vmatpush1.msra.mxu0 0.0
  %669 = vmatprep.subr.mxu0 0.0
  %670 = vmatpush1.msra.mxu0 0.0
  %671 = vmatprep.subr.mxu0 0.0
  %672 = vmatpush1.msra.mxu0 0.0
  %673 = vmatprep.subr.mxu0 0.0
  %674 = vmatpush1.msra.mxu0 0.0
  %675 = vmatprep.subr.mxu0 0.0
  %676 = vmatpush1.msra.mxu0 0.0
  %677 = vmatprep.subr.mxu0 0.0
  %678 = vmatpush1.msra.mxu0 0.0
  %679 = vmatprep.mubr.f32.mxu0 0.0
  %680 = vmatmul.mubr.f32.gmra.mrb[0].mxu0 %v565
  %v681 = vpop.f32.mrb[0].mxu0
  %v682 = vadd.f32 %v63, %v681
  %v683 = vpop.f32.mrb[0].mxu0
  %684 = vmatprep.mubr.f32.mxu0 0.0
  %685 = vmatmul.mubr.f32.gmra.mrb[0].mxu0 %v568
  %v686 = vpop.f32.mrb[0].mxu0
  %v687 = vadd.f32 %v63, %v686
  %v688 = vpop.f32.mrb[0].mxu0
  %689 = vmatprep.mubr.f32.mxu0 0.0
  %690 = vmatmul.mubr.f32.gmra.mrb[0].mxu0 %v571
  %v691 = vpop.f32.mrb[0].mxu0
  %v692 = vadd.f32 %v63, %v691
  %v693 = vpop.f32.mrb[0].mxu0
  %694 = vmatprep.mubr.f32.mxu0 0.0
  %695 = vmatmul.mubr.f32.gmra.mrb[0].mxu0 %v574
  %v696 = vpop.f32.mrb[0].mxu0
  %v697 = vadd.f32 %v63, %v696
  %v698 = vpop.f32.mrb[0].mxu0
  %699 = vmatprep.mubr.f32.mxu0 0.0
  %700 = vmatmul.mubr.f32.gmra.mrb[0].mxu0 %v577
  %v701 = vpop.f32.mrb[0].mxu0
  %v702 = vadd.f32 %v63, %v701
  %v703 = vpop.f32.mrb[0].mxu0
  %704 = vmatprep.mubr.f32.mxu0 0.0
  %705 = vmatmul.mubr.f32.gmra.mrb[0].mxu0 %v580
  %v706 = vpop.f32.mrb[0].mxu0
  %v707 = vadd.f32 %v63, %v706
  %v708 = vpop.f32.mrb[0].mxu0
  %709 = vmatprep.mubr.f32.mxu0 0.0
  %710 = vmatmul.mubr.f32.gmra.mrb[0].mxu0 %v583
  %v711 = vpop.f32.mrb[0].mxu0
  %v712 = vadd.f32 %v63, %v711
  %v713 = vpop.f32.mrb[0].mxu0
  %714 = vmatprep.mubr.f32.mxu0 0.0
  %715 = vmatmul.mubr.f32.gmra.mrb[0].mxu0 %v586
  %v716 = vpop.f32.mrb[0].mxu0
  %v717 = vadd.f32 %v63, %v716
  %v718 = vpop.f32.mrb[0].mxu0
  %719 = vmatprep.mubr.f32.mxu0 0.0
  %720 = vmatmul.mubr.f32.gmra.mrb[0].mxu0 %v589
  %v721 = vpop.f32.mrb[0].mxu0
  %v722 = vadd.f32 %v63, %v721
  %v723 = vpop.f32.mrb[0].mxu0
  %724 = vmatprep.mubr.f32.mxu0 0.0
  %725 = vmatmul.mubr.f32.gmra.mrb[0].mxu0 %v592
  %v726 = vpop.f32.mrb[0].mxu0
  %v727 = vadd.f32 %v63, %v726
  %v728 = vpop.f32.mrb[0].mxu0
  %729 = vmatprep.mubr.f32.mxu0 0.0
  %730 = vmatmul.mubr.f32.gmra.mrb[0].mxu0 %v595
  %v731 = vpop.f32.mrb[0].mxu0
  %v732 = vadd.f32 %v63, %v731
  %v733 = vpop.f32.mrb[0].mxu0
  %734 = vmatprep.mubr.f32.mxu0 0.0
  %735 = vmatmul.mubr.f32.gmra.mrb[0].mxu0 %v598
  %v736 = vpop.f32.mrb[0].mxu0
  %v737 = vadd.f32 %v63, %v736
  %v738 = vpop.f32.mrb[0].mxu0
  %739 = vmatprep.mubr.f32.mxu0 0.0
  %740 = vmatmul.mubr.f32.gmra.mrb[0].mxu0 %v601
  %v741 = vpop.f32.mrb[0].mxu0
  %v742 = vadd.f32 %v63, %v741
  %v743 = vpop.f32.mrb[0].mxu0
  %744 = vmatprep.mubr.f32.mxu0 0.0
  %745 = vmatmul.mubr.f32.gmra.mrb[0].mxu0 %v604
  %v746 = vpop.f32.mrb[0].mxu0
  %v747 = vadd.f32 %v63, %v746
  %v748 = vpop.f32.mrb[0].mxu0
  %749 = vmatprep.mubr.f32.mxu0 0.0
  %750 = vmatmul.mubr.f32.gmra.mrb[0].mxu0 %v607
  %v751 = vpop.f32.mrb[0].mxu0
  %v752 = vadd.f32 %v63, %v751
  %v753 = vpop.f32.mrb[0].mxu0
  %754 = vmatprep.mubr.f32.mxu0 0.0
  %755 = vmatmul.mubr.f32.gmra.mrb[0].mxu0 %v610
  %v756 = vpop.f32.mrb[0].mxu0
  %v757 = vadd.f32 %v63, %v756
  %v758 = vpop.f32.mrb[0].mxu0
  %759 = vdwg.mxu0
  %v760 = vmax.f32 %v682, 0.0
  %v761 = vmax.f32 %v687, 0.0
  %v762 = vmax.f32 %v692, 0.0
  %v763 = vmax.f32 %v697, 0.0
  %v764 = vmax.f32 %v702, 0.0
  %v765 = vmax.f32 %v707, 0.0
  %v766 = vmax.f32 %v712, 0.0
  %v767 = vmax.f32 %v717, 0.0
  %v768 = vmax.f32 %v722, 0.0
  %v769 = vmax.f32 %v727, 0.0
  %v770 = vmax.f32 %v732, 0.0
  %v771 = vmax.f32 %v737, 0.0
  %v772 = vmax.f32 %v742, 0.0
  %v773 = vmax.f32 %v747, 0.0
  %v774 = vmax.f32 %v752, 0.0
  %v775 = vmax.f32 %v757, 0.0
  %776 = vst.msk [vmem:[#allocation2 + $0x100] sm:$0xff] %vm279, %v760
  %777 = vst.msk [vmem:[#allocation2 + $0x108] sm:$0xff] %vm279, %v761
  %778 = vst.msk [vmem:[#allocation2 + $0x110] sm:$0xff] %vm279, %v762
  %779 = vst.msk [vmem:[#allocation2 + $0x118] sm:$0xff] %vm279, %v763
  %780 = vst.msk [vmem:[#allocation2 + $0x120] sm:$0xff] %vm279, %v764
  %781 = vst.msk [vmem:[#allocation2 + $0x128] sm:$0xff] %vm279, %v765
  %782 = vst.msk [vmem:[#allocation2 + $0x130] sm:$0xff] %vm279, %v766
  %783 = vst.msk [vmem:[#allocation2 + $0x138] sm:$0xff] %vm279, %v767
  %784 = vst.msk [vmem:[#allocation2 + $0x140] sm:$0xff] %vm279, %v768
  %785 = vst.msk [vmem:[#allocation2 + $0x148] sm:$0xff] %vm279, %v769
  %786 = vst.msk [vmem:[#allocation2 + $0x150] sm:$0xff] %vm279, %v770
  %787 = vst.msk [vmem:[#allocation2 + $0x158] sm:$0xff] %vm279, %v771
  %788 = vst.msk [vmem:[#allocation2 + $0x160] sm:$0xff] %vm279, %v772
  %789 = vst.msk [vmem:[#allocation2 + $0x168] sm:$0xff] %vm279, %v773
  %790 = vst.msk [vmem:[#allocation2 + $0x170] sm:$0xff] %vm279, %v774
  %791 = vst.msk [vmem:[#allocation2 + $0x178] sm:$0xff] %vm279, %v775
  %v792 = vld [vmem:[%s0 + $0x180] sm:$0xff]
  %v793 = vld [vmem:[%s0 + $0x188] sm:$0xff]
  %v794 = vld [vmem:[%s0 + $0x190] sm:$0xff]
  %v795 = vld [vmem:[%s0 + $0x198] sm:$0xff]
  %v796 = vld [vmem:[%s0 + $0x1a0] sm:$0xff]
  %v797 = vld [vmem:[%s0 + $0x1a8] sm:$0xff]
  %v798 = vld [vmem:[%s0 + $0x1b0] sm:$0xff]
  %v799 = vld [vmem:[%s0 + $0x1b8] sm:$0xff]
  %v800 = vld [vmem:[%s0 + $0x1c0] sm:$0xff]
  %v801 = vld [vmem:[%s0 + $0x1c8] sm:$0xff]
  %v802 = vld [vmem:[%s0 + $0x1d0] sm:$0xff]
  %v803 = vld [vmem:[%s0 + $0x1d8] sm:$0xff]
  %v804 = vld [vmem:[%s0 + $0x1e0] sm:$0xff]
  %v805 = vld [vmem:[%s0 + $0x1e8] sm:$0xff]
  %v806 = vld [vmem:[%s0 + $0x1f0] sm:$0xff]
  %v807 = vld [vmem:[%s0 + $0x1f8] sm:$0xff]
  %v808 = vld [vmem:[%s1] sm:$0xff]
  %v809 = vld [vmem:[%s1 + $0x8] sm:$0xff]
  %v810 = vld [vmem:[%s1 + $0x10] sm:$0xff]
  %v811 = vld [vmem:[%s1 + $0x18] sm:$0x7]
  %v813 = vsel %vm65, %v792, 0
  %v816 = vsel %vm65, %v793, 0
  %v819 = vsel %vm65, %v794, 0
  %v822 = vsel %vm65, %v795, 0
  %v825 = vsel %vm65, %v796, 0
  %v828 = vsel %vm65, %v797, 0
  %v831 = vsel %vm65, %v798, 0
  %v834 = vsel %vm65, %v799, 0
  %v837 = vsel %vm65, %v800, 0
  %v840 = vsel %vm65, %v801, 0
  %v843 = vsel %vm65, %v802, 0
  %v846 = vsel %vm65, %v803, 0
  %v849 = vsel %vm65, %v804, 0
  %v852 = vsel %vm65, %v805, 0
  %v855 = vsel %vm65, %v806, 0
  %v858 = vsel %vm65, %v807, 0
  %v861 = vsel %vm114, %v811, 0
  %863 = vmatprep.subr.mxu0 0.0
  %864 = vmatpush1.msra.mxu0 %v808
  %865 = vmatprep.subr.mxu0 0.0
  %866 = vmatpush1.msra.mxu0 %v809
  %867 = vmatprep.subr.mxu0 0.0
  %868 = vmatpush1.msra.mxu0 %v810
  %869 = vmatprep.subr.mxu0 0.0
  %870 = vmatpush1.msra.mxu0 %v861
  %871 = vmatprep.subr.mxu0 0.0
  %872 = vmatpush1.msra.mxu0 0.0
  %873 = vmatprep.subr.mxu0 0.0
  %874 = vmatpush1.msra.mxu0 0.0
  %875 = vmatprep.subr.mxu0 0.0
  %876 = vmatpush1.msra.mxu0 0.0
  %877 = vmatprep.subr.mxu0 0.0
  %878 = vmatpush1.msra.mxu0 0.0
  %879 = vmatprep.subr.mxu0 0.0
  %880 = vmatpush1.msra.mxu0 0.0
  %881 = vmatprep.subr.mxu0 0.0
  %882 = vmatpush1.msra.mxu0 0.0
  %883 = vmatprep.subr.mxu0 0.0
  %884 = vmatpush1.msra.mxu0 0.0
  %885 = vmatprep.subr.mxu0 0.0
  %886 = vmatpush1.msra.mxu0 0.0
  %887 = vmatprep.subr.mxu0 0.0
  %888 = vmatpush1.msra.mxu0 0.0
  %889 = vmatprep.subr.mxu0 0.0
  %890 = vmatpush1.msra.mxu0 0.0
  %891 = vmatprep.subr.mxu0 0.0
  %892 = vmatpush1.msra.mxu0 0.0
  %893 = vmatprep.subr.mxu0 0.0
  %894 = vmatpush1.msra.mxu0 0.0
  %895 = vmatprep.subr.mxu0 0.0
  %896 = vmatpush1.msra.mxu0 0.0
  %897 = vmatprep.subr.mxu0 0.0
  %898 = vmatpush1.msra.mxu0 0.0
  %899 = vmatprep.subr.mxu0 0.0
  %900 = vmatpush1.msra.mxu0 0.0
  %901 = vmatprep.subr.mxu0 0.0
  %902 = vmatpush1.msra.mxu0 0.0
  %903 = vmatprep.subr.mxu0 0.0
  %904 = vmatpush1.msra.mxu0 0.0
  %905 = vmatprep.subr.mxu0 0.0
  %906 = vmatpush1.msra.mxu0 0.0
  %907 = vmatprep.subr.mxu0 0.0
  %908 = vmatpush1.msra.mxu0 0.0
  %909 = vmatprep.subr.mxu0 0.0
  %910 = vmatpush1.msra.mxu0 0.0
  %911 = vmatprep.subr.mxu0 0.0
  %912 = vmatpush1.msra.mxu0 0.0
  %913 = vmatprep.subr.mxu0 0.0
  %914 = vmatpush1.msra.mxu0 0.0
  %915 = vmatprep.subr.mxu0 0.0
  %916 = vmatpush1.msra.mxu0 0.0
  %917 = vmatprep.subr.mxu0 0.0
  %918 = vmatpush1.msra.mxu0 0.0
  %919 = vmatprep.subr.mxu0 0.0
  %920 = vmatpush1.msra.mxu0 0.0
  %921 = vmatprep.subr.mxu0 0.0
  %922 = vmatpush1.msra.mxu0 0.0
  %923 = vmatprep.subr.mxu0 0.0
  %924 = vmatpush1.msra.mxu0 0.0
  %925 = vmatprep.subr.mxu0 0.0
  %926 = vmatpush1.msra.mxu0 0.0
  %927 = vmatprep.mubr.f32.mxu0 0.0
  %928 = vmatmul.mubr.f32.gmra.mrb[0].mxu0 %v813
  %v929 = vpop.f32.mrb[0].mxu0
  %v930 = vadd.f32 %v63, %v929
  %v931 = vpop.f32.mrb[0].mxu0
  %932 = vmatprep.mubr.f32.mxu0 0.0
  %933 = vmatmul.mubr.f32.gmra.mrb[0].mxu0 %v816
  %v934 = vpop.f32.mrb[0].mxu0
  %v935 = vadd.f32 %v63, %v934
  %v936 = vpop.f32.mrb[0].mxu0
  %937 = vmatprep.mubr.f32.mxu0 0.0
  %938 = vmatmul.mubr.f32.gmra.mrb[0].mxu0 %v819
  %v939 = vpop.f32.mrb[0].mxu0
  %v940 = vadd.f32 %v63, %v939
  %v941 = vpop.f32.mrb[0].mxu0
  %942 = vmatprep.mubr.f32.mxu0 0.0
  %943 = vmatmul.mubr.f32.gmra.mrb[0].mxu0 %v822
  %v944 = vpop.f32.mrb[0].mxu0
  %v945 = vadd.f32 %v63, %v944
  %v946 = vpop.f32.mrb[0].mxu0
  %947 = vmatprep.mubr.f32.mxu0 0.0
  %948 = vmatmul.mubr.f32.gmra.mrb[0].mxu0 %v825
  %v949 = vpop.f32.mrb[0].mxu0
  %v950 = vadd.f32 %v63, %v949
  %v951 = vpop.f32.mrb[0].mxu0
  %952 = vmatprep.mubr.f32.mxu0 0.0
  %953 = vmatmul.mubr.f32.gmra.mrb[0].mxu0 %v828
  %v954 = vpop.f32.mrb[0].mxu0
  %v955 = vadd.f32 %v63, %v954
  %v956 = vpop.f32.mrb[0].mxu0
  %957 = vmatprep.mubr.f32.mxu0 0.0
  %958 = vmatmul.mubr.f32.gmra.mrb[0].mxu0 %v831
  %v959 = vpop.f32.mrb[0].mxu0
  %v960 = vadd.f32 %v63, %v959
  %v961 = vpop.f32.mrb[0].mxu0
  %962 = vmatprep.mubr.f32.mxu0 0.0
  %963 = vmatmul.mubr.f32.gmra.mrb[0].mxu0 %v834
  %v964 = vpop.f32.mrb[0].mxu0
  %v965 = vadd.f32 %v63, %v964
  %v966 = vpop.f32.mrb[0].mxu0
  %967 = vmatprep.mubr.f32.mxu0 0.0
  %968 = vmatmul.mubr.f32.gmra.mrb[0].mxu0 %v837
  %v969 = vpop.f32.mrb[0].mxu0
  %v970 = vadd.f32 %v63, %v969
  %v971 = vpop.f32.mrb[0].mxu0
  %972 = vmatprep.mubr.f32.mxu0 0.0
  %973 = vmatmul.mubr.f32.gmra.mrb[0].mxu0 %v840
  %v974 = vpop.f32.mrb[0].mxu0
  %v975 = vadd.f32 %v63, %v974
  %v976 = vpop.f32.mrb[0].mxu0
  %977 = vmatprep.mubr.f32.mxu0 0.0
  %978 = vmatmul.mubr.f32.gmra.mrb[0].mxu0 %v843
  %v979 = vpop.f32.mrb[0].mxu0
  %v980 = vadd.f32 %v63, %v979
  %v981 = vpop.f32.mrb[0].mxu0
  %982 = vmatprep.mubr.f32.mxu0 0.0
  %983 = vmatmul.mubr.f32.gmra.mrb[0].mxu0 %v846
  %v984 = vpop.f32.mrb[0].mxu0
  %v985 = vadd.f32 %v63, %v984
  %v986 = vpop.f32.mrb[0].mxu0
  %987 = vmatprep.mubr.f32.mxu0 0.0
  %988 = vmatmul.mubr.f32.gmra.mrb[0].mxu0 %v849
  %v989 = vpop.f32.mrb[0].mxu0
  %v990 = vadd.f32 %v63, %v989
  %v991 = vpop.f32.mrb[0].mxu0
  %992 = vmatprep.mubr.f32.mxu0 0.0
  %993 = vmatmul.mubr.f32.gmra.mrb[0].mxu0 %v852
  %v994 = vpop.f32.mrb[0].mxu0
  %v995 = vadd.f32 %v63, %v994
  %v996 = vpop.f32.mrb[0].mxu0
  %997 = vmatprep.mubr.f32.mxu0 0.0
  %998 = vmatmul.mubr.f32.gmra.mrb[0].mxu0 %v855
  %v999 = vpop.f32.mrb[0].mxu0
  %v1000 = vadd.f32 %v63, %v999
  %v1001 = vpop.f32.mrb[0].mxu0
  %1002 = vmatprep.mubr.f32.mxu0 0.0
  %1003 = vmatmul.mubr.f32.gmra.mrb[0].mxu0 %v858
  %v1004 = vpop.f32.mrb[0].mxu0
  %v1005 = vadd.f32 %v63, %v1004
  %v1006 = vpop.f32.mrb[0].mxu0
  %1007 = vdwg.mxu0
  %v1008 = vmax.f32 %v930, 0.0
  %v1009 = vmax.f32 %v935, 0.0
  %v1010 = vmax.f32 %v940, 0.0
  %v1011 = vmax.f32 %v945, 0.0
  %v1012 = vmax.f32 %v950, 0.0
  %v1013 = vmax.f32 %v955, 0.0
  %v1014 = vmax.f32 %v960, 0.0
  %v1015 = vmax.f32 %v965, 0.0
  %v1016 = vmax.f32 %v970, 0.0
  %v1017 = vmax.f32 %v975, 0.0
  %v1018 = vmax.f32 %v980, 0.0
  %v1019 = vmax.f32 %v985, 0.0
  %v1020 = vmax.f32 %v990, 0.0
  %v1021 = vmax.f32 %v995, 0.0
  %v1022 = vmax.f32 %v1000, 0.0
  %v1023 = vmax.f32 %v1005, 0.0
  %1024 = vst.msk [vmem:[#allocation2 + $0x180] sm:$0xff] %vm279, %v1008
  %1025 = vst.msk [vmem:[#allocation2 + $0x188] sm:$0xff] %vm279, %v1009
  %1026 = vst.msk [vmem:[#allocation2 + $0x190] sm:$0xff] %vm279, %v1010
  %1027 = vst.msk [vmem:[#allocation2 + $0x198] sm:$0xff] %vm279, %v1011
  %1028 = vst.msk [vmem:[#allocation2 + $0x1a0] sm:$0xff] %vm279, %v1012
  %1029 = vst.msk [vmem:[#allocation2 + $0x1a8] sm:$0xff] %vm279, %v1013
  %1030 = vst.msk [vmem:[#allocation2 + $0x1b0] sm:$0xff] %vm279, %v1014
  %1031 = vst.msk [vmem:[#allocation2 + $0x1b8] sm:$0xff] %vm279, %v1015
  %1032 = vst.msk [vmem:[#allocation2 + $0x1c0] sm:$0xff] %vm279, %v1016
  %1033 = vst.msk [vmem:[#allocation2 + $0x1c8] sm:$0xff] %vm279, %v1017
  %1034 = vst.msk [vmem:[#allocation2 + $0x1d0] sm:$0xff] %vm279, %v1018
  %1035 = vst.msk [vmem:[#allocation2 + $0x1d8] sm:$0xff] %vm279, %v1019
  %1036 = vst.msk [vmem:[#allocation2 + $0x1e0] sm:$0xff] %vm279, %v1020
  %1037 = vst.msk [vmem:[#allocation2 + $0x1e8] sm:$0xff] %vm279, %v1021
  %1038 = vst.msk [vmem:[#allocation2 + $0x1f0] sm:$0xff] %vm279, %v1022
  %1039 = vst.msk [vmem:[#allocation2 + $0x1f8] sm:$0xff] %vm279, %v1023
  %1040 = vst.msk [vmem:[#allocation3] sm:$0xff] %vm279, 0.0
  %vm1041 = vcmask 254976
  %1042 = vst.msk [vmem:[#allocation3 + $0x8] sm:$0x3] %vm1041, 0.0
  %1043 = vst.msk [vmem:[#allocation3 + $0x5a] sm:$0xff] %vm279, 0.0
  %1044 = vst.msk [vmem:[#allocation3 + $0x62] sm:$0x3] %vm1041, 0.0
  %v1045 = vld [vmem:[#allocation2] ss:$2 sm:$0xff]
  %s1046 = scalar_lea.vmem [#allocation2], 1
  %v1047 = vld [vmem:[%s1046] ss:$2 sm:$0xff]
  %v1048 = vmax.f32 %v1045, %v1047
  %s1049 = scalar_lea.vmem [#allocation2], 16
  %v1050 = vld [vmem:[%s1049] ss:$2 sm:$0xff]
  %s1051 = scalar_lea.vmem [#allocation2], 17
  %v1052 = vld [vmem:[%s1051] ss:$2 sm:$0xff]
  %v1053 = vmax.f32 %v1050, %v1052
  %v1054 = vmax.f32 %v1048, %v1053
  %v1056 = vrot.slane %v1054, 7
  %vm1058 = vcmask 1040384
  %v1059 = vsel %vm1058, 0.0, %v1056
  %v1060 = vsel %vm1058, %v1056, 0.0
  %1061 = vst.msk [vmem:[#allocation3 + $0xa] sm:$0xff] %vm279, %v1059
  %1062 = vst.msk [vmem:[#allocation3 + $0x12] sm:$0x3] %vm1041, %v1060
  %s1063 = scalar_lea.vmem [#allocation2], 32
  %v1064 = vld [vmem:[%s1063] ss:$2 sm:$0xff]
  %s1065 = scalar_lea.vmem [#allocation2], 33
  %v1066 = vld [vmem:[%s1065] ss:$2 sm:$0xff]
  %v1067 = vmax.f32 %v1064, %v1066
  %s1068 = scalar_lea.vmem [#allocation2], 48
  %v1069 = vld [vmem:[%s1068] ss:$2 sm:$0xff]
  %s1070 = scalar_lea.vmem [#allocation2], 49
  %v1071 = vld [vmem:[%s1070] ss:$2 sm:$0xff]
  %v1072 = vmax.f32 %v1069, %v1071
  %v1073 = vmax.f32 %v1067, %v1072
  %v1075 = vrot.slane %v1073, 7
  %v1077 = vsel %vm1058, 0.0, %v1075
  %v1078 = vsel %vm1058, %v1075, 0.0
  %1079 = vst.msk [vmem:[#allocation3 + $0x14] sm:$0xff] %vm279, %v1077
  %1080 = vst.msk [vmem:[#allocation3 + $0x1c] sm:$0x3] %vm1041, %v1078
  %s1081 = scalar_lea.vmem [#allocation2], 64
  %v1082 = vld [vmem:[%s1081] ss:$2 sm:$0xff]
  %s1083 = scalar_lea.vmem [#allocation2], 65
  %v1084 = vld [vmem:[%s1083] ss:$2 sm:$0xff]
  %v1085 = vmax.f32 %v1082, %v1084
  %s1086 = scalar_lea.vmem [#allocation2], 80
  %v1087 = vld [vmem:[%s1086] ss:$2 sm:$0xff]
  %s1088 = scalar_lea.vmem [#allocation2], 81
  %v1089 = vld [vmem:[%s1088] ss:$2 sm:$0xff]
  %v1090 = vmax.f32 %v1087, %v1089
  %v1091 = vmax.f32 %v1085, %v1090
  %v1093 = vrot.slane %v1091, 7
  %v1095 = vsel %vm1058, 0.0, %v1093
  %v1096 = vsel %vm1058, %v1093, 0.0
  %1097 = vst.msk [vmem:[#allocation3 + $0x1e] sm:$0xff] %vm279, %v1095
  %1098 = vst.msk [vmem:[#allocation3 + $0x26] sm:$0x3] %vm1041, %v1096
  %s1099 = scalar_lea.vmem [#allocation2], 96
  %v1100 = vld [vmem:[%s1099] ss:$2 sm:$0xff]
  %s1101 = scalar_lea.vmem [#allocation2], 97
  %v1102 = vld [vmem:[%s1101] ss:$2 sm:$0xff]
  %v1103 = vmax.f32 %v1100, %v1102
  %s1104 = scalar_lea.vmem [#allocation2], 112
  %v1105 = vld [vmem:[%s1104] ss:$2 sm:$0xff]
  %s1106 = scalar_lea.vmem [#allocation2], 113
  %v1107 = vld [vmem:[%s1106] ss:$2 sm:$0xff]
  %v1108 = vmax.f32 %v1105, %v1107
  %v1109 = vmax.f32 %v1103, %v1108
  %v1111 = vrot.slane %v1109, 7
  %v1113 = vsel %vm1058, 0.0, %v1111
  %v1114 = vsel %vm1058, %v1111, 0.0
  %1115 = vst.msk [vmem:[#allocation3 + $0x28] sm:$0xff] %vm279, %v1113
  %1116 = vst.msk [vmem:[#allocation3 + $0x30] sm:$0x3] %vm1041, %v1114
  %s1117 = scalar_lea.vmem [#allocation2], 128
  %v1118 = vld [vmem:[%s1117] ss:$2 sm:$0xff]
  %s1119 = scalar_lea.vmem [#allocation2], 129
  %v1120 = vld [vmem:[%s1119] ss:$2 sm:$0xff]
  %v1121 = vmax.f32 %v1118, %v1120
  %s1122 = scalar_lea.vmem [#allocation2], 144
  %v1123 = vld [vmem:[%s1122] ss:$2 sm:$0xff]
  %s1124 = scalar_lea.vmem [#allocation2], 145
  %v1125 = vld [vmem:[%s1124] ss:$2 sm:$0xff]
  %v1126 = vmax.f32 %v1123, %v1125
  %v1127 = vmax.f32 %v1121, %v1126
  %v1129 = vrot.slane %v1127, 7
  %v1131 = vsel %vm1058, 0.0, %v1129
  %v1132 = vsel %vm1058, %v1129, 0.0
  %1133 = vst.msk [vmem:[#allocation3 + $0x32] sm:$0xff] %vm279, %v1131
  %1134 = vst.msk [vmem:[#allocation3 + $0x3a] sm:$0x3] %vm1041, %v1132
  %s1135 = scalar_lea.vmem [#allocation2], 160
  %v1136 = vld [vmem:[%s1135] ss:$2 sm:$0xff]
  %s1137 = scalar_lea.vmem [#allocation2], 161
  %v1138 = vld [vmem:[%s1137] ss:$2 sm:$0xff]
  %v1139 = vmax.f32 %v1136, %v1138
  %s1140 = scalar_lea.vmem [#allocation2], 176
  %v1141 = vld [vmem:[%s1140] ss:$2 sm:$0xff]
  %s1142 = scalar_lea.vmem [#allocation2], 177
  %v1143 = vld [vmem:[%s1142] ss:$2 sm:$0xff]
  %v1144 = vmax.f32 %v1141, %v1143
  %v1145 = vmax.f32 %v1139, %v1144
  %v1147 = vrot.slane %v1145, 7
  %v1149 = vsel %vm1058, 0.0, %v1147
  %v1150 = vsel %vm1058, %v1147, 0.0
  %1151 = vst.msk [vmem:[#allocation3 + $0x3c] sm:$0xff] %vm279, %v1149
  %1152 = vst.msk [vmem:[#allocation3 + $0x44] sm:$0x3] %vm1041, %v1150
  %s1153 = scalar_lea.vmem [#allocation2], 192
  %v1154 = vld [vmem:[%s1153] ss:$2 sm:$0xff]
  %s1155 = scalar_lea.vmem [#allocation2], 193
  %v1156 = vld [vmem:[%s1155] ss:$2 sm:$0xff]
  %v1157 = vmax.f32 %v1154, %v1156
  %s1158 = scalar_lea.vmem [#allocation2], 208
  %v1159 = vld [vmem:[%s1158] ss:$2 sm:$0xff]
  %s1160 = scalar_lea.vmem [#allocation2], 209
  %v1161 = vld [vmem:[%s1160] ss:$2 sm:$0xff]
  %v1162 = vmax.f32 %v1159, %v1161
  %v1163 = vmax.f32 %v1157, %v1162
  %v1165 = vrot.slane %v1163, 7
  %v1167 = vsel %vm1058, 0.0, %v1165
  %v1168 = vsel %vm1058, %v1165, 0.0
  %1169 = vst.msk [vmem:[#allocation3 + $0x46] sm:$0xff] %vm279, %v1167
  %1170 = vst.msk [vmem:[#allocation3 + $0x4e] sm:$0x3] %vm1041, %v1168
  %s1171 = scalar_lea.vmem [#allocation2], 224
  %v1172 = vld [vmem:[%s1171] ss:$2 sm:$0xff]
  %s1173 = scalar_lea.vmem [#allocation2], 225
  %v1174 = vld [vmem:[%s1173] ss:$2 sm:$0xff]
  %v1175 = vmax.f32 %v1172, %v1174
  %s1176 = scalar_lea.vmem [#allocation2], 240
  %v1177 = vld [vmem:[%s1176] ss:$2 sm:$0xff]
  %s1178 = scalar_lea.vmem [#allocation2], 241
  %v1179 = vld [vmem:[%s1178] ss:$2 sm:$0xff]
  %v1180 = vmax.f32 %v1177, %v1179
  %v1181 = vmax.f32 %v1175, %v1180
  %v1183 = vrot.slane %v1181, 7
  %v1185 = vsel %vm1058, 0.0, %v1183
  %v1186 = vsel %vm1058, %v1183, 0.0
  %1187 = vst.msk [vmem:[#allocation3 + $0x50] sm:$0xff] %vm279, %v1185
  %1188 = vst.msk [vmem:[#allocation3 + $0x58] sm:$0x3] %vm1041, %v1186
  %1189 = vst.msk [vmem:[#allocation3 + $0x64] sm:$0xff] %vm279, 0.0
  %1190 = vst.msk [vmem:[#allocation3 + $0x6c] sm:$0x3] %vm1041, 0.0
  %1191 = vst.msk [vmem:[#allocation3 + $0xbe] sm:$0xff] %vm279, 0.0
  %1192 = vst.msk [vmem:[#allocation3 + $0xc6] sm:$0x3] %vm1041, 0.0
  %s1193 = scalar_lea.vmem [#allocation2], 256
  %v1194 = vld [vmem:[%s1193] ss:$2 sm:$0xff]
  %s1195 = scalar_lea.vmem [#allocation2], 257
  %v1196 = vld [vmem:[%s1195] ss:$2 sm:$0xff]
  %v1197 = vmax.f32 %v1194, %v1196
  %s1198 = scalar_lea.vmem [#allocation2], 272
  %v1199 = vld [vmem:[%s1198] ss:$2 sm:$0xff]
  %s1200 = scalar_lea.vmem [#allocation2], 273
  %v1201 = vld [vmem:[%s1200] ss:$2 sm:$0xff]
  %v1202 = vmax.f32 %v1199, %v1201
  %v1203 = vmax.f32 %v1197, %v1202
  %v1205 = vrot.slane %v1203, 7
  %v1207 = vsel %vm1058, 0.0, %v1205
  %v1208 = vsel %vm1058, %v1205, 0.0
  %1209 = vst.msk [vmem:[#allocation3 + $0x6e] sm:$0xff] %vm279, %v1207
  %1210 = vst.msk [vmem:[#allocation3 + $0x76] sm:$0x3] %vm1041, %v1208
  %s1211 = scalar_lea.vmem [#allocation2], 288
  %v1212 = vld [vmem:[%s1211] ss:$2 sm:$0xff]
  %s1213 = scalar_lea.vmem [#allocation2], 289
  %v1214 = vld [vmem:[%s1213] ss:$2 sm:$0xff]
  %v1215 = vmax.f32 %v1212, %v1214
  %s1216 = scalar_lea.vmem [#allocation2], 304
  %v1217 = vld [vmem:[%s1216] ss:$2 sm:$0xff]
  %s1218 = scalar_lea.vmem [#allocation2], 305
  %v1219 = vld [vmem:[%s1218] ss:$2 sm:$0xff]
  %v1220 = vmax.f32 %v1217, %v1219
  %v1221 = vmax.f32 %v1215, %v1220
  %v1223 = vrot.slane %v1221, 7
  %v1225 = vsel %vm1058, 0.0, %v1223
  %v1226 = vsel %vm1058, %v1223, 0.0
  %1227 = vst.msk [vmem:[#allocation3 + $0x78] sm:$0xff] %vm279, %v1225
  %1228 = vst.msk [vmem:[#allocation3 + $0x80] sm:$0x3] %vm1041, %v1226
  %s1229 = scalar_lea.vmem [#allocation2], 320
  %v1230 = vld [vmem:[%s1229] ss:$2 sm:$0xff]
  %s1231 = scalar_lea.vmem [#allocation2], 321
  %v1232 = vld [vmem:[%s1231] ss:$2 sm:$0xff]
  %v1233 = vmax.f32 %v1230, %v1232
  %s1234 = scalar_lea.vmem [#allocation2], 336
  %v1235 = vld [vmem:[%s1234] ss:$2 sm:$0xff]
  %s1236 = scalar_lea.vmem [#allocation2], 337
  %v1237 = vld [vmem:[%s1236] ss:$2 sm:$0xff]
  %v1238 = vmax.f32 %v1235, %v1237
  %v1239 = vmax.f32 %v1233, %v1238
  %v1241 = vrot.slane %v1239, 7
  %v1243 = vsel %vm1058, 0.0, %v1241
  %v1244 = vsel %vm1058, %v1241, 0.0
  %1245 = vst.msk [vmem:[#allocation3 + $0x82] sm:$0xff] %vm279, %v1243
  %1246 = vst.msk [vmem:[#allocation3 + $0x8a] sm:$0x3] %vm1041, %v1244
  %s1247 = scalar_lea.vmem [#allocation2], 352
  %v1248 = vld [vmem:[%s1247] ss:$2 sm:$0xff]
  %s1249 = scalar_lea.vmem [#allocation2], 353
  %v1250 = vld [vmem:[%s1249] ss:$2 sm:$0xff]
  %v1251 = vmax.f32 %v1248, %v1250
  %s1252 = scalar_lea.vmem [#allocation2], 368
  %v1253 = vld [vmem:[%s1252] ss:$2 sm:$0xff]
  %s1254 = scalar_lea.vmem [#allocation2], 369
  %v1255 = vld [vmem:[%s1254] ss:$2 sm:$0xff]
  %v1256 = vmax.f32 %v1253, %v1255
  %v1257 = vmax.f32 %v1251, %v1256
  %v1259 = vrot.slane %v1257, 7
  %v1261 = vsel %vm1058, 0.0, %v1259
  %v1262 = vsel %vm1058, %v1259, 0.0
  %1263 = vst.msk [vmem:[#allocation3 + $0x8c] sm:$0xff] %vm279, %v1261
  %1264 = vst.msk [vmem:[#allocation3 + $0x94] sm:$0x3] %vm1041, %v1262
  %s1265 = scalar_lea.vmem [#allocation2], 384
  %v1266 = vld [vmem:[%s1265] ss:$2 sm:$0xff]
  %s1267 = scalar_lea.vmem [#allocation2], 385
  %v1268 = vld [vmem:[%s1267] ss:$2 sm:$0xff]
  %v1269 = vmax.f32 %v1266, %v1268
  %s1270 = scalar_lea.vmem [#allocation2], 400
  %v1271 = vld [vmem:[%s1270] ss:$2 sm:$0xff]
  %s1272 = scalar_lea.vmem [#allocation2], 401
  %v1273 = vld [vmem:[%s1272] ss:$2 sm:$0xff]
  %v1274 = vmax.f32 %v1271, %v1273
  %v1275 = vmax.f32 %v1269, %v1274
  %v1277 = vrot.slane %v1275, 7
  %v1279 = vsel %vm1058, 0.0, %v1277
  %v1280 = vsel %vm1058, %v1277, 0.0
  %1281 = vst.msk [vmem:[#allocation3 + $0x96] sm:$0xff] %vm279, %v1279
  %1282 = vst.msk [vmem:[#allocation3 + $0x9e] sm:$0x3] %vm1041, %v1280
  %s1283 = scalar_lea.vmem [#allocation2], 416
  %v1284 = vld [vmem:[%s1283] ss:$2 sm:$0xff]
  %s1285 = scalar_lea.vmem [#allocation2], 417
  %v1286 = vld [vmem:[%s1285] ss:$2 sm:$0xff]
  %v1287 = vmax.f32 %v1284, %v1286
  %s1288 = scalar_lea.vmem [#allocation2], 432
  %v1289 = vld [vmem:[%s1288] ss:$2 sm:$0xff]
  %s1290 = scalar_lea.vmem [#allocation2], 433
  %v1291 = vld [vmem:[%s1290] ss:$2 sm:$0xff]
  %v1292 = vmax.f32 %v1289, %v1291
  %v1293 = vmax.f32 %v1287, %v1292
  %v1295 = vrot.slane %v1293, 7
  %v1297 = vsel %vm1058, 0.0, %v1295
  %v1298 = vsel %vm1058, %v1295, 0.0
  %1299 = vst.msk [vmem:[#allocation3 + $0xa0] sm:$0xff] %vm279, %v1297
  %1300 = vst.msk [vmem:[#allocation3 + $0xa8] sm:$0x3] %vm1041, %v1298
  %s1301 = scalar_lea.vmem [#allocation2], 448
  %v1302 = vld [vmem:[%s1301] ss:$2 sm:$0xff]
  %s1303 = scalar_lea.vmem [#allocation2], 449
  %v1304 = vld [vmem:[%s1303] ss:$2 sm:$0xff]
  %v1305 = vmax.f32 %v1302, %v1304
  %s1306 = scalar_lea.vmem [#allocation2], 464
  %v1307 = vld [vmem:[%s1306] ss:$2 sm:$0xff]
  %s1308 = scalar_lea.vmem [#allocation2], 465
  %v1309 = vld [vmem:[%s1308] ss:$2 sm:$0xff]
  %v1310 = vmax.f32 %v1307, %v1309
  %v1311 = vmax.f32 %v1305, %v1310
  %v1313 = vrot.slane %v1311, 7
  %v1315 = vsel %vm1058, 0.0, %v1313
  %v1316 = vsel %vm1058, %v1313, 0.0
  %1317 = vst.msk [vmem:[#allocation3 + $0xaa] sm:$0xff] %vm279, %v1315
  %1318 = vst.msk [vmem:[#allocation3 + $0xb2] sm:$0x3] %vm1041, %v1316
  %s1319 = scalar_lea.vmem [#allocation2], 480
  %v1320 = vld [vmem:[%s1319] ss:$2 sm:$0xff]
  %s1321 = scalar_lea.vmem [#allocation2], 481
  %v1322 = vld [vmem:[%s1321] ss:$2 sm:$0xff]
  %v1323 = vmax.f32 %v1320, %v1322
  %s1324 = scalar_lea.vmem [#allocation2], 496
  %v1325 = vld [vmem:[%s1324] ss:$2 sm:$0xff]
  %s1326 = scalar_lea.vmem [#allocation2], 497
  %v1327 = vld [vmem:[%s1326] ss:$2 sm:$0xff]
  %v1328 = vmax.f32 %v1325, %v1327
  %v1329 = vmax.f32 %v1323, %v1328
  %v1331 = vrot.slane %v1329, 7
  %v1333 = vsel %vm1058, 0.0, %v1331
  %v1334 = vsel %vm1058, %v1331, 0.0
  %1335 = vst.msk [vmem:[#allocation3 + $0xb4] sm:$0xff] %vm279, %v1333
  %1336 = vst.msk [vmem:[#allocation3 + $0xbc] sm:$0x3] %vm1041, %v1334
  %v1337 = vld [vmem:[%s4] sm:$0x1]
  %v1338 = vld [vmem:[#allocation3] sm:$0xff]
  %v1339 = vld [vmem:[#allocation3 + $0x8] sm:$0xff]
  %v1340 = vld [vmem:[#allocation3 + $0x10] sm:$0xff]
  %v1341 = vld [vmem:[#allocation3 + $0x18] sm:$0xff]
  %v1342 = vld [vmem:[#allocation3 + $0x20] sm:$0xff]
  %v1343 = vld [vmem:[#allocation3 + $0x28] sm:$0xff]
  %v1344 = vld [vmem:[#allocation3 + $0x30] sm:$0xff]
  %v1345 = vld [vmem:[#allocation3 + $0x38] sm:$0xff]
  %v1346 = vld [vmem:[#allocation3 + $0x40] sm:$0xff]
  %v1347 = vld [vmem:[#allocation3 + $0x48] sm:$0xff]
  %v1348 = vld [vmem:[#allocation3 + $0x50] sm:$0xff]
  %v1349 = vld [vmem:[#allocation3 + $0x58] sm:$0xff]
  %v1350 = vld [vmem:[#allocation3 + $0x60] sm:$0xff]
  %v1351 = vld [vmem:[#allocation3 + $0x68] sm:$0xff]
  %v1352 = vld [vmem:[#allocation3 + $0x70] sm:$0xff]
  %v1353 = vld [vmem:[#allocation3 + $0x78] sm:$0xff]
  %1354 = vst.msk [vmem:[#allocation7] sm:$0xff] %vm279, %v1338
  %1355 = vst.msk [vmem:[#allocation7 + $0x18] sm:$0xff] %vm279, %v1339
  %1356 = vst.msk [vmem:[#allocation7 + $0x30] sm:$0xff] %vm279, %v1340
  %1357 = vst.msk [vmem:[#allocation7 + $0x48] sm:$0xff] %vm279, %v1341
  %1358 = vst.msk [vmem:[#allocation7 + $0x60] sm:$0xff] %vm279, %v1342
  %1359 = vst.msk [vmem:[#allocation7 + $0x78] sm:$0xff] %vm279, %v1343
  %1360 = vst.msk [vmem:[#allocation7 + $0x90] sm:$0xff] %vm279, %v1344
  %1361 = vst.msk [vmem:[#allocation7 + $0xa8] sm:$0xff] %vm279, %v1345
  %1362 = vst.msk [vmem:[#allocation7 + $0xc0] sm:$0xff] %vm279, %v1346
  %1363 = vst.msk [vmem:[#allocation7 + $0xd8] sm:$0xff] %vm279, %v1347
  %1364 = vst.msk [vmem:[#allocation7 + $0xf0] sm:$0xff] %vm279, %v1348
  %1365 = vst.msk [vmem:[#allocation7 + $0x108] sm:$0xff] %vm279, %v1349
  %1366 = vst.msk [vmem:[#allocation7 + $0x120] sm:$0xff] %vm279, %v1350
  %1367 = vst.msk [vmem:[#allocation7 + $0x138] sm:$0xff] %vm279, %v1351
  %1368 = vst.msk [vmem:[#allocation7 + $0x150] sm:$0xff] %vm279, %v1352
  %1369 = vst.msk [vmem:[#allocation7 + $0x168] sm:$0xff] %vm279, %v1353
  %v1370 = vld [vmem:[#allocation3 + $0x1] sm:$0xff]
  %v1371 = vld [vmem:[#allocation3 + $0x9] sm:$0xff]
  %v1372 = vld [vmem:[#allocation3 + $0x11] sm:$0xff]
  %v1373 = vld [vmem:[#allocation3 + $0x19] sm:$0xff]
  %v1374 = vld [vmem:[#allocation3 + $0x21] sm:$0xff]
  %v1375 = vld [vmem:[#allocation3 + $0x29] sm:$0xff]
  %v1376 = vld [vmem:[#allocation3 + $0x31] sm:$0xff]
  %v1377 = vld [vmem:[#allocation3 + $0x39] sm:$0xff]
  %v1378 = vld [vmem:[#allocation3 + $0x41] sm:$0xff]
  %v1379 = vld [vmem:[#allocation3 + $0x49] sm:$0xff]
  %v1380 = vld [vmem:[#allocation3 + $0x51] sm:$0xff]
  %v1381 = vld [vmem:[#allocation3 + $0x59] sm:$0xff]
  %v1382 = vld [vmem:[#allocation3 + $0x61] sm:$0xff]
  %v1383 = vld [vmem:[#allocation3 + $0x69] sm:$0xff]
  %v1384 = vld [vmem:[#allocation3 + $0x71] sm:$0xff]
  %v1385 = vld [vmem:[#allocation3 + $0x79] sm:$0xff]
  %1402 = vrot.lane.b32.xlu0 %v1370, 32
  %v1403 = vpop.permute.xlu0 %1402
  %1404 = vrot.lane.b32.xlu0 %v1371, 32
  %v1405 = vpop.permute.xlu0 %1404
  %1406 = vrot.lane.b32.xlu0 %v1372, 32
  %v1407 = vpop.permute.xlu0 %1406
  %1408 = vrot.lane.b32.xlu0 %v1373, 32
  %v1409 = vpop.permute.xlu0 %1408
  %1410 = vrot.lane.b32.xlu0 %v1374, 32
  %v1411 = vpop.permute.xlu0 %1410
  %1412 = vrot.lane.b32.xlu0 %v1375, 32
  %v1413 = vpop.permute.xlu0 %1412
  %1414 = vrot.lane.b32.xlu0 %v1376, 32
  %v1415 = vpop.permute.xlu0 %1414
  %1416 = vrot.lane.b32.xlu0 %v1377, 32
  %v1417 = vpop.permute.xlu0 %1416
  %1418 = vrot.lane.b32.xlu0 %v1378, 32
  %v1419 = vpop.permute.xlu0 %1418
  %1420 = vrot.lane.b32.xlu0 %v1379, 32
  %v1421 = vpop.permute.xlu0 %1420
  %1422 = vrot.lane.b32.xlu0 %v1380, 32
  %v1423 = vpop.permute.xlu0 %1422
  %1424 = vrot.lane.b32.xlu0 %v1381, 32
  %v1425 = vpop.permute.xlu0 %1424
  %1426 = vrot.lane.b32.xlu0 %v1382, 32
  %v1427 = vpop.permute.xlu0 %1426
  %1428 = vrot.lane.b32.xlu0 %v1383, 32
  %v1429 = vpop.permute.xlu0 %1428
  %1430 = vrot.lane.b32.xlu0 %v1384, 32
  %v1431 = vpop.permute.xlu0 %1430
  %1432 = vrot.lane.b32.xlu0 %v1385, 32
  %v1433 = vpop.permute.xlu0 %1432
  %vm1450 = vcmask 523520
  %1451 = vst.msk [vmem:[#allocation7] sm:$0xff] %vm1450, %v1403
  %1452 = vst.msk [vmem:[#allocation7 + $0x18] sm:$0xff] %vm1450, %v1405
  %1453 = vst.msk [vmem:[#allocation7 + $0x30] sm:$0xff] %vm1450, %v1407
  %1454 = vst.msk [vmem:[#allocation7 + $0x48] sm:$0xff] %vm1450, %v1409
  %1455 = vst.msk [vmem:[#allocation7 + $0x60] sm:$0xff] %vm1450, %v1411
  %1456 = vst.msk [vmem:[#allocation7 + $0x78] sm:$0xff] %vm1450, %v1413
  %1457 = vst.msk [vmem:[#allocation7 + $0x90] sm:$0xff] %vm1450, %v1415
  %1458 = vst.msk [vmem:[#allocation7 + $0xa8] sm:$0xff] %vm1450, %v1417
  %1459 = vst.msk [vmem:[#allocation7 + $0xc0] sm:$0xff] %vm1450, %v1419
  %1460 = vst.msk [vmem:[#allocation7 + $0xd8] sm:$0xff] %vm1450, %v1421
  %1461 = vst.msk [vmem:[#allocation7 + $0xf0] sm:$0xff] %vm1450, %v1423
  %1462 = vst.msk [vmem:[#allocation7 + $0x108] sm:$0xff] %vm1450, %v1425
  %1463 = vst.msk [vmem:[#allocation7 + $0x120] sm:$0xff] %vm1450, %v1427
  %1464 = vst.msk [vmem:[#allocation7 + $0x138] sm:$0xff] %vm1450, %v1429
  %1465 = vst.msk [vmem:[#allocation7 + $0x150] sm:$0xff] %vm1450, %v1431
  %1466 = vst.msk [vmem:[#allocation7 + $0x168] sm:$0xff] %vm1450, %v1433
  %v1467 = vld [vmem:[#allocation3 + $0x2] sm:$0xff]
  %v1468 = vld [vmem:[#allocation3 + $0xa] sm:$0xff]
  %v1469 = vld [vmem:[#allocation3 + $0x12] sm:$0xff]
  %v1470 = vld [vmem:[#allocation3 + $0x1a] sm:$0xff]
  %v1471 = vld [vmem:[#allocation3 + $0x22] sm:$0xff]
  %v1472 = vld [vmem:[#allocation3 + $0x2a] sm:$0xff]
  %v1473 = vld [vmem:[#allocation3 + $0x32] sm:$0xff]
  %v1474 = vld [vmem:[#allocation3 + $0x3a] sm:$0xff]
  %v1475 = vld [vmem:[#allocation3 + $0x42] sm:$0xff]
  %v1476 = vld [vmem:[#allocation3 + $0x4a] sm:$0xff]
  %v1477 = vld [vmem:[#allocation3 + $0x52] sm:$0xff]
  %v1478 = vld [vmem:[#allocation3 + $0x5a] sm:$0xff]
  %v1479 = vld [vmem:[#allocation3 + $0x62] sm:$0xff]
  %v1480 = vld [vmem:[#allocation3 + $0x6a] sm:$0xff]
  %v1481 = vld [vmem:[#allocation3 + $0x72] sm:$0xff]
  %v1482 = vld [vmem:[#allocation3 + $0x7a] sm:$0xff]
  %1499 = vrot.lane.b32.xlu0 %v1467, 64
  %v1500 = vpop.permute.xlu0 %1499
  %1501 = vrot.lane.b32.xlu0 %v1468, 64
  %v1502 = vpop.permute.xlu0 %1501
  %1503 = vrot.lane.b32.xlu0 %v1469, 64
  %v1504 = vpop.permute.xlu0 %1503
  %1505 = vrot.lane.b32.xlu0 %v1470, 64
  %v1506 = vpop.permute.xlu0 %1505
  %1507 = vrot.lane.b32.xlu0 %v1471, 64
  %v1508 = vpop.permute.xlu0 %1507
  %1509 = vrot.lane.b32.xlu0 %v1472, 64
  %v1510 = vpop.permute.xlu0 %1509
  %1511 = vrot.lane.b32.xlu0 %v1473, 64
  %v1512 = vpop.permute.xlu0 %1511
  %1513 = vrot.lane.b32.xlu0 %v1474, 64
  %v1514 = vpop.permute.xlu0 %1513
  %1515 = vrot.lane.b32.xlu0 %v1475, 64
  %v1516 = vpop.permute.xlu0 %1515
  %1517 = vrot.lane.b32.xlu0 %v1476, 64
  %v1518 = vpop.permute.xlu0 %1517
  %1519 = vrot.lane.b32.xlu0 %v1477, 64
  %v1520 = vpop.permute.xlu0 %1519
  %1521 = vrot.lane.b32.xlu0 %v1478, 64
  %v1522 = vpop.permute.xlu0 %1521
  %1523 = vrot.lane.b32.xlu0 %v1479, 64
  %v1524 = vpop.permute.xlu0 %1523
  %1525 = vrot.lane.b32.xlu0 %v1480, 64
  %v1526 = vpop.permute.xlu0 %1525
  %1527 = vrot.lane.b32.xlu0 %v1481, 64
  %v1528 = vpop.permute.xlu0 %1527
  %1529 = vrot.lane.b32.xlu0 %v1482, 64
  %v1530 = vpop.permute.xlu0 %1529
  %vm1547 = vcmask 785920
  %1548 = vst.msk [vmem:[#allocation7] sm:$0xff] %vm1547, %v1500
  %1549 = vst.msk [vmem:[#allocation7 + $0x18] sm:$0xff] %vm1547, %v1502
  %1550 = vst.msk [vmem:[#allocation7 + $0x30] sm:$0xff] %vm1547, %v1504
  %1551 = vst.msk [vmem:[#allocation7 + $0x48] sm:$0xff] %vm1547, %v1506
  %1552 = vst.msk [vmem:[#allocation7 + $0x60] sm:$0xff] %vm1547, %v1508
  %1553 = vst.msk [vmem:[#allocation7 + $0x78] sm:$0xff] %vm1547, %v1510
  %1554 = vst.msk [vmem:[#allocation7 + $0x90] sm:$0xff] %vm1547, %v1512
  %1555 = vst.msk [vmem:[#allocation7 + $0xa8] sm:$0xff] %vm1547, %v1514
  %1556 = vst.msk [vmem:[#allocation7 + $0xc0] sm:$0xff] %vm1547, %v1516
  %1557 = vst.msk [vmem:[#allocation7 + $0xd8] sm:$0xff] %vm1547, %v1518
  %1558 = vst.msk [vmem:[#allocation7 + $0xf0] sm:$0xff] %vm1547, %v1520
  %1559 = vst.msk [vmem:[#allocation7 + $0x108] sm:$0xff] %vm1547, %v1522
  %1560 = vst.msk [vmem:[#allocation7 + $0x120] sm:$0xff] %vm1547, %v1524
  %1561 = vst.msk [vmem:[#allocation7 + $0x138] sm:$0xff] %vm1547, %v1526
  %1562 = vst.msk [vmem:[#allocation7 + $0x150] sm:$0xff] %vm1547, %v1528
  %1563 = vst.msk [vmem:[#allocation7 + $0x168] sm:$0xff] %vm1547, %v1530
  %v1564 = vld [vmem:[#allocation3 + $0xa] sm:$0xff]
  %v1565 = vld [vmem:[#allocation3 + $0x12] sm:$0xff]
  %v1566 = vld [vmem:[#allocation3 + $0x1a] sm:$0xff]
  %v1567 = vld [vmem:[#allocation3 + $0x22] sm:$0xff]
  %v1568 = vld [vmem:[#allocation3 + $0x2a] sm:$0xff]
  %v1569 = vld [vmem:[#allocation3 + $0x32] sm:$0xff]
  %v1570 = vld [vmem:[#allocation3 + $0x3a] sm:$0xff]
  %v1571 = vld [vmem:[#allocation3 + $0x42] sm:$0xff]
  %v1572 = vld [vmem:[#allocation3 + $0x4a] sm:$0xff]
  %v1573 = vld [vmem:[#allocation3 + $0x52] sm:$0xff]
  %v1574 = vld [vmem:[#allocation3 + $0x5a] sm:$0xff]
  %v1575 = vld [vmem:[#allocation3 + $0x62] sm:$0xff]
  %v1576 = vld [vmem:[#allocation3 + $0x6a] sm:$0xff]
  %v1577 = vld [vmem:[#allocation3 + $0x72] sm:$0xff]
  %v1578 = vld [vmem:[#allocation3 + $0x7a] sm:$0xff]
  %v1579 = vld [vmem:[#allocation3 + $0x82] sm:$0xff]
  %1596 = vrot.lane.b32.xlu0 %v1564, 96
  %v1597 = vpop.permute.xlu0 %1596
  %1598 = vrot.lane.b32.xlu0 %v1565, 96
  %v1599 = vpop.permute.xlu0 %1598
  %1600 = vrot.lane.b32.xlu0 %v1566, 96
  %v1601 = vpop.permute.xlu0 %1600
  %1602 = vrot.lane.b32.xlu0 %v1567, 96
  %v1603 = vpop.permute.xlu0 %1602
  %1604 = vrot.lane.b32.xlu0 %v1568, 96
  %v1605 = vpop.permute.xlu0 %1604
  %1606 = vrot.lane.b32.xlu0 %v1569, 96
  %v1607 = vpop.permute.xlu0 %1606
  %1608 = vrot.lane.b32.xlu0 %v1570, 96
  %v1609 = vpop.permute.xlu0 %1608
  %1610 = vrot.lane.b32.xlu0 %v1571, 96
  %v1611 = vpop.permute.xlu0 %1610
  %1612 = vrot.lane.b32.xlu0 %v1572, 96
  %v1613 = vpop.permute.xlu0 %1612
  %1614 = vrot.lane.b32.xlu0 %v1573, 96
  %v1615 = vpop.permute.xlu0 %1614
  %1616 = vrot.lane.b32.xlu0 %v1574, 96
  %v1617 = vpop.permute.xlu0 %1616
  %1618 = vrot.lane.b32.xlu0 %v1575, 96
  %v1619 = vpop.permute.xlu0 %1618
  %1620 = vrot.lane.b32.xlu0 %v1576, 96
  %v1621 = vpop.permute.xlu0 %1620
  %1622 = vrot.lane.b32.xlu0 %v1577, 96
  %v1623 = vpop.permute.xlu0 %1622
  %1624 = vrot.lane.b32.xlu0 %v1578, 96
  %v1625 = vpop.permute.xlu0 %1624
  %1626 = vrot.lane.b32.xlu0 %v1579, 96
  %v1627 = vpop.permute.xlu0 %1626
  %vm1644 = vcmask 1048320
  %1645 = vst.msk [vmem:[#allocation7] sm:$0xff] %vm1644, %v1597
  %1646 = vst.msk [vmem:[#allocation7 + $0x18] sm:$0xff] %vm1644, %v1599
  %1647 = vst.msk [vmem:[#allocation7 + $0x30] sm:$0xff] %vm1644, %v1601
  %1648 = vst.msk [vmem:[#allocation7 + $0x48] sm:$0xff] %vm1644, %v1603
  %1649 = vst.msk [vmem:[#allocation7 + $0x60] sm:$0xff] %vm1644, %v1605
  %1650 = vst.msk [vmem:[#allocation7 + $0x78] sm:$0xff] %vm1644, %v1607
  %1651 = vst.msk [vmem:[#allocation7 + $0x90] sm:$0xff] %vm1644, %v1609
  %1652 = vst.msk [vmem:[#allocation7 + $0xa8] sm:$0xff] %vm1644, %v1611
  %1653 = vst.msk [vmem:[#allocation7 + $0xc0] sm:$0xff] %vm1644, %v1613
  %1654 = vst.msk [vmem:[#allocation7 + $0xd8] sm:$0xff] %vm1644, %v1615
  %1655 = vst.msk [vmem:[#allocation7 + $0xf0] sm:$0xff] %vm1644, %v1617
  %1656 = vst.msk [vmem:[#allocation7 + $0x108] sm:$0xff] %vm1644, %v1619
  %1657 = vst.msk [vmem:[#allocation7 + $0x120] sm:$0xff] %vm1644, %v1621
  %1658 = vst.msk [vmem:[#allocation7 + $0x138] sm:$0xff] %vm1644, %v1623
  %1659 = vst.msk [vmem:[#allocation7 + $0x150] sm:$0xff] %vm1644, %v1625
  %1660 = vst.msk [vmem:[#allocation7 + $0x168] sm:$0xff] %vm1644, %v1627
  %v1661 = vld [vmem:[#allocation3 + $0xb] sm:$0xff]
  %v1662 = vld [vmem:[#allocation3 + $0x13] sm:$0xff]
  %v1663 = vld [vmem:[#allocation3 + $0x1b] sm:$0xff]
  %v1664 = vld [vmem:[#allocation3 + $0x23] sm:$0xff]
  %v1665 = vld [vmem:[#allocation3 + $0x2b] sm:$0xff]
  %v1666 = vld [vmem:[#allocation3 + $0x33] sm:$0xff]
  %v1667 = vld [vmem:[#allocation3 + $0x3b] sm:$0xff]
  %v1668 = vld [vmem:[#allocation3 + $0x43] sm:$0xff]
  %v1669 = vld [vmem:[#allocation3 + $0x4b] sm:$0xff]
  %v1670 = vld [vmem:[#allocation3 + $0x53] sm:$0xff]
  %v1671 = vld [vmem:[#allocation3 + $0x5b] sm:$0xff]
  %v1672 = vld [vmem:[#allocation3 + $0x63] sm:$0xff]
  %v1673 = vld [vmem:[#allocation3 + $0x6b] sm:$0xff]
  %v1674 = vld [vmem:[#allocation3 + $0x73] sm:$0xff]
  %v1675 = vld [vmem:[#allocation3 + $0x7b] sm:$0xff]
  %v1676 = vld [vmem:[#allocation3 + $0x83] sm:$0xff]
  %1677 = vst.msk [vmem:[#allocation7 + $0x8] sm:$0xff] %vm279, %v1661
  %1678 = vst.msk [vmem:[#allocation7 + $0x20] sm:$0xff] %vm279, %v1662
  %1679 = vst.msk [vmem:[#allocation7 + $0x38] sm:$0xff] %vm279, %v1663
  %1680 = vst.msk [vmem:[#allocation7 + $0x50] sm:$0xff] %vm279, %v1664
  %1681 = vst.msk [vmem:[#allocation7 + $0x68] sm:$0xff] %vm279, %v1665
  %1682 = vst.msk [vmem:[#allocation7 + $0x80] sm:$0xff] %vm279, %v1666
  %1683 = vst.msk [vmem:[#allocation7 + $0x98] sm:$0xff] %vm279, %v1667
  %1684 = vst.msk [vmem:[#allocation7 + $0xb0] sm:$0xff] %vm279, %v1668
  %1685 = vst.msk [vmem:[#allocation7 + $0xc8] sm:$0xff] %vm279, %v1669
  %1686 = vst.msk [vmem:[#allocation7 + $0xe0] sm:$0xff] %vm279, %v1670
  %1687 = vst.msk [vmem:[#allocation7 + $0xf8] sm:$0xff] %vm279, %v1671
  %1688 = vst.msk [vmem:[#allocation7 + $0x110] sm:$0xff] %vm279, %v1672
  %1689 = vst.msk [vmem:[#allocation7 + $0x128] sm:$0xff] %vm279, %v1673
  %1690 = vst.msk [vmem:[#allocation7 + $0x140] sm:$0xff] %vm279, %v1674
  %1691 = vst.msk [vmem:[#allocation7 + $0x158] sm:$0xff] %vm279, %v1675
  %1692 = vst.msk [vmem:[#allocation7 + $0x170] sm:$0xff] %vm279, %v1676
  %v1693 = vld [vmem:[#allocation3 + $0xc] sm:$0xff]
  %v1694 = vld [vmem:[#allocation3 + $0x14] sm:$0xff]
  %v1695 = vld [vmem:[#allocation3 + $0x1c] sm:$0xff]
  %v1696 = vld [vmem:[#allocation3 + $0x24] sm:$0xff]
  %v1697 = vld [vmem:[#allocation3 + $0x2c] sm:$0xff]
  %v1698 = vld [vmem:[#allocation3 + $0x34] sm:$0xff]
  %v1699 = vld [vmem:[#allocation3 + $0x3c] sm:$0xff]
  %v1700 = vld [vmem:[#allocation3 + $0x44] sm:$0xff]
  %v1701 = vld [vmem:[#allocation3 + $0x4c] sm:$0xff]
  %v1702 = vld [vmem:[#allocation3 + $0x54] sm:$0xff]
  %v1703 = vld [vmem:[#allocation3 + $0x5c] sm:$0xff]
  %v1704 = vld [vmem:[#allocation3 + $0x64] sm:$0xff]
  %v1705 = vld [vmem:[#allocation3 + $0x6c] sm:$0xff]
  %v1706 = vld [vmem:[#allocation3 + $0x74] sm:$0xff]
  %v1707 = vld [vmem:[#allocation3 + $0x7c] sm:$0xff]
  %v1708 = vld [vmem:[#allocation3 + $0x84] sm:$0xff]
  %1725 = vrot.lane.b32.xlu0 %v1693, 32
  %v1726 = vpop.permute.xlu0 %1725
  %1727 = vrot.lane.b32.xlu0 %v1694, 32
  %v1728 = vpop.permute.xlu0 %1727
  %1729 = vrot.lane.b32.xlu0 %v1695, 32
  %v1730 = vpop.permute.xlu0 %1729
  %1731 = vrot.lane.b32.xlu0 %v1696, 32
  %v1732 = vpop.permute.xlu0 %1731
  %1733 = vrot.lane.b32.xlu0 %v1697, 32
  %v1734 = vpop.permute.xlu0 %1733
  %1735 = vrot.lane.b32.xlu0 %v1698, 32
  %v1736 = vpop.permute.xlu0 %1735
  %1737 = vrot.lane.b32.xlu0 %v1699, 32
  %v1738 = vpop.permute.xlu0 %1737
  %1739 = vrot.lane.b32.xlu0 %v1700, 32
  %v1740 = vpop.permute.xlu0 %1739
  %1741 = vrot.lane.b32.xlu0 %v1701, 32
  %v1742 = vpop.permute.xlu0 %1741
  %1743 = vrot.lane.b32.xlu0 %v1702, 32
  %v1744 = vpop.permute.xlu0 %1743
  %1745 = vrot.lane.b32.xlu0 %v1703, 32
  %v1746 = vpop.permute.xlu0 %1745
  %1747 = vrot.lane.b32.xlu0 %v1704, 32
  %v1748 = vpop.permute.xlu0 %1747
  %1749 = vrot.lane.b32.xlu0 %v1705, 32
  %v1750 = vpop.permute.xlu0 %1749
  %1751 = vrot.lane.b32.xlu0 %v1706, 32
  %v1752 = vpop.permute.xlu0 %1751
  %1753 = vrot.lane.b32.xlu0 %v1707, 32
  %v1754 = vpop.permute.xlu0 %1753
  %1755 = vrot.lane.b32.xlu0 %v1708, 32
  %v1756 = vpop.permute.xlu0 %1755
  %1773 = vst.msk [vmem:[#allocation7 + $0x8] sm:$0xff] %vm1450, %v1726
  %1774 = vst.msk [vmem:[#allocation7 + $0x20] sm:$0xff] %vm1450, %v1728
  %1775 = vst.msk [vmem:[#allocation7 + $0x38] sm:$0xff] %vm1450, %v1730
  %1776 = vst.msk [vmem:[#allocation7 + $0x50] sm:$0xff] %vm1450, %v1732
  %1777 = vst.msk [vmem:[#allocation7 + $0x68] sm:$0xff] %vm1450, %v1734
  %1778 = vst.msk [vmem:[#allocation7 + $0x80] sm:$0xff] %vm1450, %v1736
  %1779 = vst.msk [vmem:[#allocation7 + $0x98] sm:$0xff] %vm1450, %v1738
  %1780 = vst.msk [vmem:[#allocation7 + $0xb0] sm:$0xff] %vm1450, %v1740
  %1781 = vst.msk [vmem:[#allocation7 + $0xc8] sm:$0xff] %vm1450, %v1742
  %1782 = vst.msk [vmem:[#allocation7 + $0xe0] sm:$0xff] %vm1450, %v1744
  %1783 = vst.msk [vmem:[#allocation7 + $0xf8] sm:$0xff] %vm1450, %v1746
  %1784 = vst.msk [vmem:[#allocation7 + $0x110] sm:$0xff] %vm1450, %v1748
  %1785 = vst.msk [vmem:[#allocation7 + $0x128] sm:$0xff] %vm1450, %v1750
  %1786 = vst.msk [vmem:[#allocation7 + $0x140] sm:$0xff] %vm1450, %v1752
  %1787 = vst.msk [vmem:[#allocation7 + $0x158] sm:$0xff] %vm1450, %v1754
  %1788 = vst.msk [vmem:[#allocation7 + $0x170] sm:$0xff] %vm1450, %v1756
  %v1789 = vld [vmem:[#allocation3 + $0x14] sm:$0xff]
  %v1790 = vld [vmem:[#allocation3 + $0x1c] sm:$0xff]
  %v1791 = vld [vmem:[#allocation3 + $0x24] sm:$0xff]
  %v1792 = vld [vmem:[#allocation3 + $0x2c] sm:$0xff]
  %v1793 = vld [vmem:[#allocation3 + $0x34] sm:$0xff]
  %v1794 = vld [vmem:[#allocation3 + $0x3c] sm:$0xff]
  %v1795 = vld [vmem:[#allocation3 + $0x44] sm:$0xff]
  %v1796 = vld [vmem:[#allocation3 + $0x4c] sm:$0xff]
  %v1797 = vld [vmem:[#allocation3 + $0x54] sm:$0xff]
  %v1798 = vld [vmem:[#allocation3 + $0x5c] sm:$0xff]
  %v1799 = vld [vmem:[#allocation3 + $0x64] sm:$0xff]
  %v1800 = vld [vmem:[#allocation3 + $0x6c] sm:$0xff]
  %v1801 = vld [vmem:[#allocation3 + $0x74] sm:$0xff]
  %v1802 = vld [vmem:[#allocation3 + $0x7c] sm:$0xff]
  %v1803 = vld [vmem:[#allocation3 + $0x84] sm:$0xff]
  %v1804 = vld [vmem:[#allocation3 + $0x8c] sm:$0xff]
  %1821 = vrot.lane.b32.xlu0 %v1789, 64
  %v1822 = vpop.permute.xlu0 %1821
  %1823 = vrot.lane.b32.xlu0 %v1790, 64
  %v1824 = vpop.permute.xlu0 %1823
  %1825 = vrot.lane.b32.xlu0 %v1791, 64
  %v1826 = vpop.permute.xlu0 %1825
  %1827 = vrot.lane.b32.xlu0 %v1792, 64
  %v1828 = vpop.permute.xlu0 %1827
  %1829 = vrot.lane.b32.xlu0 %v1793, 64
  %v1830 = vpop.permute.xlu0 %1829
  %1831 = vrot.lane.b32.xlu0 %v1794, 64
  %v1832 = vpop.permute.xlu0 %1831
  %1833 = vrot.lane.b32.xlu0 %v1795, 64
  %v1834 = vpop.permute.xlu0 %1833
  %1835 = vrot.lane.b32.xlu0 %v1796, 64
  %v1836 = vpop.permute.xlu0 %1835
  %1837 = vrot.lane.b32.xlu0 %v1797, 64
  %v1838 = vpop.permute.xlu0 %1837
  %1839 = vrot.lane.b32.xlu0 %v1798, 64
  %v1840 = vpop.permute.xlu0 %1839
  %1841 = vrot.lane.b32.xlu0 %v1799, 64
  %v1842 = vpop.permute.xlu0 %1841
  %1843 = vrot.lane.b32.xlu0 %v1800, 64
  %v1844 = vpop.permute.xlu0 %1843
  %1845 = vrot.lane.b32.xlu0 %v1801, 64
  %v1846 = vpop.permute.xlu0 %1845
  %1847 = vrot.lane.b32.xlu0 %v1802, 64
  %v1848 = vpop.permute.xlu0 %1847
  %1849 = vrot.lane.b32.xlu0 %v1803, 64
  %v1850 = vpop.permute.xlu0 %1849
  %1851 = vrot.lane.b32.xlu0 %v1804, 64
  %v1852 = vpop.permute.xlu0 %1851
  %1869 = vst.msk [vmem:[#allocation7 + $0x8] sm:$0xff] %vm1547, %v1822
  %1870 = vst.msk [vmem:[#allocation7 + $0x20] sm:$0xff] %vm1547, %v1824
  %1871 = vst.msk [vmem:[#allocation7 + $0x38] sm:$0xff] %vm1547, %v1826
  %1872 = vst.msk [vmem:[#allocation7 + $0x50] sm:$0xff] %vm1547, %v1828
  %1873 = vst.msk [vmem:[#allocation7 + $0x68] sm:$0xff] %vm1547, %v1830
  %1874 = vst.msk [vmem:[#allocation7 + $0x80] sm:$0xff] %vm1547, %v1832
  %1875 = vst.msk [vmem:[#allocation7 + $0x98] sm:$0xff] %vm1547, %v1834
  %1876 = vst.msk [vmem:[#allocation7 + $0xb0] sm:$0xff] %vm1547, %v1836
  %1877 = vst.msk [vmem:[#allocation7 + $0xc8] sm:$0xff] %vm1547, %v1838
  %1878 = vst.msk [vmem:[#allocation7 + $0xe0] sm:$0xff] %vm1547, %v1840
  %1879 = vst.msk [vmem:[#allocation7 + $0xf8] sm:$0xff] %vm1547, %v1842
  %1880 = vst.msk [vmem:[#allocation7 + $0x110] sm:$0xff] %vm1547, %v1844
  %1881 = vst.msk [vmem:[#allocation7 + $0x128] sm:$0xff] %vm1547, %v1846
  %1882 = vst.msk [vmem:[#allocation7 + $0x140] sm:$0xff] %vm1547, %v1848
  %1883 = vst.msk [vmem:[#allocation7 + $0x158] sm:$0xff] %vm1547, %v1850
  %1884 = vst.msk [vmem:[#allocation7 + $0x170] sm:$0xff] %vm1547, %v1852
  %v1885 = vld [vmem:[#allocation3 + $0x15] sm:$0xff]
  %v1886 = vld [vmem:[#allocation3 + $0x1d] sm:$0xff]
  %v1887 = vld [vmem:[#allocation3 + $0x25] sm:$0xff]
  %v1888 = vld [vmem:[#allocation3 + $0x2d] sm:$0xff]
  %v1889 = vld [vmem:[#allocation3 + $0x35] sm:$0xff]
  %v1890 = vld [vmem:[#allocation3 + $0x3d] sm:$0xff]
  %v1891 = vld [vmem:[#allocation3 + $0x45] sm:$0xff]
  %v1892 = vld [vmem:[#allocation3 + $0x4d] sm:$0xff]
  %v1893 = vld [vmem:[#allocation3 + $0x55] sm:$0xff]
  %v1894 = vld [vmem:[#allocation3 + $0x5d] sm:$0xff]
  %v1895 = vld [vmem:[#allocation3 + $0x65] sm:$0xff]
  %v1896 = vld [vmem:[#allocation3 + $0x6d] sm:$0xff]
  %v1897 = vld [vmem:[#allocation3 + $0x75] sm:$0xff]
  %v1898 = vld [vmem:[#allocation3 + $0x7d] sm:$0xff]
  %v1899 = vld [vmem:[#allocation3 + $0x85] sm:$0xff]
  %v1900 = vld [vmem:[#allocation3 + $0x8d] sm:$0xff]
  %1917 = vrot.lane.b32.xlu0 %v1885, 96
  %v1918 = vpop.permute.xlu0 %1917
  %1919 = vrot.lane.b32.xlu0 %v1886, 96
  %v1920 = vpop.permute.xlu0 %1919
  %1921 = vrot.lane.b32.xlu0 %v1887, 96
  %v1922 = vpop.permute.xlu0 %1921
  %1923 = vrot.lane.b32.xlu0 %v1888, 96
  %v1924 = vpop.permute.xlu0 %1923
  %1925 = vrot.lane.b32.xlu0 %v1889, 96
  %v1926 = vpop.permute.xlu0 %1925
  %1927 = vrot.lane.b32.xlu0 %v1890, 96
  %v1928 = vpop.permute.xlu0 %1927
  %1929 = vrot.lane.b32.xlu0 %v1891, 96
  %v1930 = vpop.permute.xlu0 %1929
  %1931 = vrot.lane.b32.xlu0 %v1892, 96
  %v1932 = vpop.permute.xlu0 %1931
  %1933 = vrot.lane.b32.xlu0 %v1893, 96
  %v1934 = vpop.permute.xlu0 %1933
  %1935 = vrot.lane.b32.xlu0 %v1894, 96
  %v1936 = vpop.permute.xlu0 %1935
  %1937 = vrot.lane.b32.xlu0 %v1895, 96
  %v1938 = vpop.permute.xlu0 %1937
  %1939 = vrot.lane.b32.xlu0 %v1896, 96
  %v1940 = vpop.permute.xlu0 %1939
  %1941 = vrot.lane.b32.xlu0 %v1897, 96
  %v1942 = vpop.permute.xlu0 %1941
  %1943 = vrot.lane.b32.xlu0 %v1898, 96
  %v1944 = vpop.permute.xlu0 %1943
  %1945 = vrot.lane.b32.xlu0 %v1899, 96
  %v1946 = vpop.permute.xlu0 %1945
  %1947 = vrot.lane.b32.xlu0 %v1900, 96
  %v1948 = vpop.permute.xlu0 %1947
  %1965 = vst.msk [vmem:[#allocation7 + $0x8] sm:$0xff] %vm1644, %v1918
  %1966 = vst.msk [vmem:[#allocation7 + $0x20] sm:$0xff] %vm1644, %v1920
  %1967 = vst.msk [vmem:[#allocation7 + $0x38] sm:$0xff] %vm1644, %v1922
  %1968 = vst.msk [vmem:[#allocation7 + $0x50] sm:$0xff] %vm1644, %v1924
  %1969 = vst.msk [vmem:[#allocation7 + $0x68] sm:$0xff] %vm1644, %v1926
  %1970 = vst.msk [vmem:[#allocation7 + $0x80] sm:$0xff] %vm1644, %v1928
  %1971 = vst.msk [vmem:[#allocation7 + $0x98] sm:$0xff] %vm1644, %v1930
  %1972 = vst.msk [vmem:[#allocation7 + $0xb0] sm:$0xff] %vm1644, %v1932
  %1973 = vst.msk [vmem:[#allocation7 + $0xc8] sm:$0xff] %vm1644, %v1934
  %1974 = vst.msk [vmem:[#allocation7 + $0xe0] sm:$0xff] %vm1644, %v1936
  %1975 = vst.msk [vmem:[#allocation7 + $0xf8] sm:$0xff] %vm1644, %v1938
  %1976 = vst.msk [vmem:[#allocation7 + $0x110] sm:$0xff] %vm1644, %v1940
  %1977 = vst.msk [vmem:[#allocation7 + $0x128] sm:$0xff] %vm1644, %v1942
  %1978 = vst.msk [vmem:[#allocation7 + $0x140] sm:$0xff] %vm1644, %v1944
  %1979 = vst.msk [vmem:[#allocation7 + $0x158] sm:$0xff] %vm1644, %v1946
  %1980 = vst.msk [vmem:[#allocation7 + $0x170] sm:$0xff] %vm1644, %v1948
  %v1981 = vld [vmem:[#allocation3 + $0x16] sm:$0xff]
  %v1982 = vld [vmem:[#allocation3 + $0x1e] sm:$0xff]
  %v1983 = vld [vmem:[#allocation3 + $0x26] sm:$0xff]
  %v1984 = vld [vmem:[#allocation3 + $0x2e] sm:$0xff]
  %v1985 = vld [vmem:[#allocation3 + $0x36] sm:$0xff]
  %v1986 = vld [vmem:[#allocation3 + $0x3e] sm:$0xff]
  %v1987 = vld [vmem:[#allocation3 + $0x46] sm:$0xff]
  %v1988 = vld [vmem:[#allocation3 + $0x4e] sm:$0xff]
  %v1989 = vld [vmem:[#allocation3 + $0x56] sm:$0xff]
  %v1990 = vld [vmem:[#allocation3 + $0x5e] sm:$0xff]
  %v1991 = vld [vmem:[#allocation3 + $0x66] sm:$0xff]
  %v1992 = vld [vmem:[#allocation3 + $0x6e] sm:$0xff]
  %v1993 = vld [vmem:[#allocation3 + $0x76] sm:$0xff]
  %v1994 = vld [vmem:[#allocation3 + $0x7e] sm:$0xff]
  %v1995 = vld [vmem:[#allocation3 + $0x86] sm:$0xff]
  %v1996 = vld [vmem:[#allocation3 + $0x8e] sm:$0xff]
  %1997 = vst.msk [vmem:[#allocation7 + $0x10] sm:$0xff] %vm279, %v1981
  %1998 = vst.msk [vmem:[#allocation7 + $0x28] sm:$0xff] %vm279, %v1982
  %1999 = vst.msk [vmem:[#allocation7 + $0x40] sm:$0xff] %vm279, %v1983
  %2000 = vst.msk [vmem:[#allocation7 + $0x58] sm:$0xff] %vm279, %v1984
  %2001 = vst.msk [vmem:[#allocation7 + $0x70] sm:$0xff] %vm279, %v1985
  %2002 = vst.msk [vmem:[#allocation7 + $0x88] sm:$0xff] %vm279, %v1986
  %2003 = vst.msk [vmem:[#allocation7 + $0xa0] sm:$0xff] %vm279, %v1987
  %2004 = vst.msk [vmem:[#allocation7 + $0xb8] sm:$0xff] %vm279, %v1988
  %2005 = vst.msk [vmem:[#allocation7 + $0xd0] sm:$0xff] %vm279, %v1989
  %2006 = vst.msk [vmem:[#allocation7 + $0xe8] sm:$0xff] %vm279, %v1990
  %2007 = vst.msk [vmem:[#allocation7 + $0x100] sm:$0xff] %vm279, %v1991
  %2008 = vst.msk [vmem:[#allocation7 + $0x118] sm:$0xff] %vm279, %v1992
  %2009 = vst.msk [vmem:[#allocation7 + $0x130] sm:$0xff] %vm279, %v1993
  %2010 = vst.msk [vmem:[#allocation7 + $0x148] sm:$0xff] %vm279, %v1994
  %2011 = vst.msk [vmem:[#allocation7 + $0x160] sm:$0xff] %vm279, %v1995
  %2012 = vst.msk [vmem:[#allocation7 + $0x178] sm:$0xff] %vm279, %v1996
  %v2013 = vld [vmem:[#allocation7] sm:$0xff]
  %v2014 = vld [vmem:[#allocation7 + $0x8] sm:$0xff]
  %v2015 = vld [vmem:[#allocation7 + $0x10] sm:$0xff]
  %v2016 = vld [vmem:[#allocation7 + $0x18] sm:$0xff]
  %v2017 = vld [vmem:[#allocation7 + $0x20] sm:$0xff]
  %v2018 = vld [vmem:[#allocation7 + $0x28] sm:$0xff]
  %v2019 = vld [vmem:[#allocation7 + $0x30] sm:$0xff]
  %v2020 = vld [vmem:[#allocation7 + $0x38] sm:$0xff]
  %v2021 = vld [vmem:[#allocation7 + $0x40] sm:$0xff]
  %v2022 = vld [vmem:[#allocation7 + $0x48] sm:$0xff]
  %v2023 = vld [vmem:[#allocation7 + $0x50] sm:$0xff]
  %v2024 = vld [vmem:[#allocation7 + $0x58] sm:$0xff]
  %v2025 = vld [vmem:[#allocation7 + $0x60] sm:$0xff]
  %v2026 = vld [vmem:[#allocation7 + $0x68] sm:$0xff]
  %v2027 = vld [vmem:[#allocation7 + $0x70] sm:$0xff]
  %v2028 = vld [vmem:[#allocation7 + $0x78] sm:$0xff]
  %v2029 = vld [vmem:[#allocation7 + $0x80] sm:$0xff]
  %v2030 = vld [vmem:[#allocation7 + $0x88] sm:$0xff]
  %v2031 = vld [vmem:[#allocation7 + $0x90] sm:$0xff]
  %v2032 = vld [vmem:[#allocation7 + $0x98] sm:$0xff]
  %v2033 = vld [vmem:[#allocation7 + $0xa0] sm:$0xff]
  %v2034 = vld [vmem:[#allocation7 + $0xa8] sm:$0xff]
  %v2035 = vld [vmem:[#allocation7 + $0xb0] sm:$0xff]
  %v2036 = vld [vmem:[#allocation7 + $0xb8] sm:$0xff]
  %v2037 = vld [vmem:[#allocation7 + $0xc0] sm:$0xff]
  %v2038 = vld [vmem:[#allocation7 + $0xc8] sm:$0xff]
  %v2039 = vld [vmem:[#allocation7 + $0xd0] sm:$0xff]
  %v2040 = vld [vmem:[#allocation7 + $0xd8] sm:$0xff]
  %v2041 = vld [vmem:[#allocation7 + $0xe0] sm:$0xff]
  %v2042 = vld [vmem:[#allocation7 + $0xe8] sm:$0xff]
  %v2043 = vld [vmem:[#allocation7 + $0xf0] sm:$0xff]
  %v2044 = vld [vmem:[#allocation7 + $0xf8] sm:$0xff]
  %v2045 = vld [vmem:[#allocation7 + $0x100] sm:$0xff]
  %v2046 = vld [vmem:[#allocation7 + $0x108] sm:$0xff]
  %v2047 = vld [vmem:[#allocation7 + $0x110] sm:$0xff]
  %v2048 = vld [vmem:[#allocation7 + $0x118] sm:$0xff]
  %v2049 = vld [vmem:[#allocation7 + $0x120] sm:$0xff]
  %v2050 = vld [vmem:[#allocation7 + $0x128] sm:$0xff]
  %v2051 = vld [vmem:[#allocation7 + $0x130] sm:$0xff]
  %v2052 = vld [vmem:[#allocation7 + $0x138] sm:$0xff]
  %v2053 = vld [vmem:[#allocation7 + $0x140] sm:$0xff]
  %v2054 = vld [vmem:[#allocation7 + $0x148] sm:$0xff]
  %v2055 = vld [vmem:[#allocation7 + $0x150] sm:$0xff]
  %v2056 = vld [vmem:[#allocation7 + $0x158] sm:$0xff]
  %v2057 = vld [vmem:[#allocation7 + $0x160] sm:$0xff]
  %v2058 = vld [vmem:[#allocation7 + $0x168] sm:$0xff]
  %v2059 = vld [vmem:[#allocation7 + $0x170] sm:$0xff]
  %v2060 = vld [vmem:[#allocation7 + $0x178] sm:$0xff]
  %v2061 = vld [vmem:[%s3] sm:$0xff]
  %v2062 = vld [vmem:[%s3 + $0x8] sm:$0xff]
  %v2063 = vld [vmem:[%s3 + $0x10] sm:$0xff]
  %v2064 = vld [vmem:[%s3 + $0x18] sm:$0xff]
  %v2065 = vld [vmem:[%s3 + $0x20] sm:$0xff]
  %v2066 = vld [vmem:[%s3 + $0x28] sm:$0xff]
  %v2067 = vld [vmem:[%s3 + $0x30] sm:$0xff]
  %v2068 = vld [vmem:[%s3 + $0x38] sm:$0xff]
  %v2069 = vld [vmem:[%s3 + $0x40] sm:$0xff]
  %v2070 = vld [vmem:[%s3 + $0x48] sm:$0xff]
  %v2071 = vld [vmem:[%s3 + $0x50] sm:$0xff]
  %v2072 = vld [vmem:[%s3 + $0x58] sm:$0xff]
  %v2073 = vld [vmem:[%s3 + $0x60] sm:$0xff]
  %v2074 = vld [vmem:[%s3 + $0x68] sm:$0xff]
  %v2075 = vld [vmem:[%s3 + $0x70] sm:$0xff]
  %v2076 = vld [vmem:[%s3 + $0x78] sm:$0xff]
  %v2077 = vld [vmem:[%s3 + $0x80] sm:$0xff]
  %v2078 = vld [vmem:[%s3 + $0x88] sm:$0xff]
  %v2079 = vld [vmem:[%s3 + $0x90] sm:$0xff]
  %v2080 = vld [vmem:[%s3 + $0x98] sm:$0xff]
  %v2081 = vld [vmem:[%s3 + $0xa0] sm:$0xff]
  %v2082 = vld [vmem:[%s3 + $0xa8] sm:$0xff]
  %v2083 = vld [vmem:[%s3 + $0xb0] sm:$0xff]
  %v2084 = vld [vmem:[%s3 + $0xb8] sm:$0xff]
  %v2085 = vld [vmem:[%s3 + $0xc0] sm:$0xff]
  %v2086 = vld [vmem:[%s3 + $0xc8] sm:$0xff]
  %v2087 = vld [vmem:[%s3 + $0xd0] sm:$0xff]
  %v2088 = vld [vmem:[%s3 + $0xd8] sm:$0xff]
  %v2089 = vld [vmem:[%s3 + $0xe0] sm:$0xff]
  %v2090 = vld [vmem:[%s3 + $0xe8] sm:$0xff]
  %v2091 = vld [vmem:[%s3 + $0xf0] sm:$0xff]
  %v2092 = vld [vmem:[%s3 + $0xf8] sm:$0xff]
  %v2093 = vld [vmem:[%s3 + $0x100] sm:$0xff]
  %v2094 = vld [vmem:[%s3 + $0x108] sm:$0xff]
  %v2095 = vld [vmem:[%s3 + $0x110] sm:$0xff]
  %v2096 = vld [vmem:[%s3 + $0x118] sm:$0xff]
  %v2098 = vlaneseq
  %v2099 = vshrl.u32 %v2098, 7
  %v2100 = vsub.s32 0, %v2099
  %v2101 = vrot.slane %v1337, %v2100
  %v2104 = vsel %vm279, %v2015, 0
  %v2107 = vsel %vm279, %v2018, 0
  %v2110 = vsel %vm279, %v2021, 0
  %v2113 = vsel %vm279, %v2024, 0
  %v2116 = vsel %vm279, %v2027, 0
  %v2119 = vsel %vm279, %v2030, 0
  %v2122 = vsel %vm279, %v2033, 0
  %v2125 = vsel %vm279, %v2036, 0
  %v2128 = vsel %vm279, %v2039, 0
  %v2131 = vsel %vm279, %v2042, 0
  %v2134 = vsel %vm279, %v2045, 0
  %v2137 = vsel %vm279, %v2048, 0
  %v2140 = vsel %vm279, %v2051, 0
  %v2143 = vsel %vm279, %v2054, 0
  %v2146 = vsel %vm279, %v2057, 0
  %v2149 = vsel %vm279, %v2060, 0
  %2151 = vmatprep.subr.mxu0 0.0
  %2152 = vmatpush1.msra.mxu0 %v2061
  %2153 = vmatprep.subr.mxu0 0.0
  %2154 = vmatpush1.msra.mxu0 %v2062
  %2155 = vmatprep.subr.mxu0 0.0
  %2156 = vmatpush1.msra.mxu0 %v2063
  %2157 = vmatprep.subr.mxu0 0.0
  %2158 = vmatpush1.msra.mxu0 %v2064
  %2159 = vmatprep.subr.mxu0 0.0
  %2160 = vmatpush1.msra.mxu0 %v2065
  %2161 = vmatprep.subr.mxu0 0.0
  %2162 = vmatpush1.msra.mxu0 %v2066
  %2163 = vmatprep.subr.mxu0 0.0
  %2164 = vmatpush1.msra.mxu0 %v2067
  %2165 = vmatprep.subr.mxu0 0.0
  %2166 = vmatpush1.msra.mxu0 %v2068
  %2167 = vmatprep.subr.mxu0 0.0
  %2168 = vmatpush1.msra.mxu0 %v2069
  %2169 = vmatprep.subr.mxu0 0.0
  %2170 = vmatpush1.msra.mxu0 %v2070
  %2171 = vmatprep.subr.mxu0 0.0
  %2172 = vmatpush1.msra.mxu0 %v2071
  %2173 = vmatprep.subr.mxu0 0.0
  %2174 = vmatpush1.msra.mxu0 %v2072
  %2175 = vmatprep.subr.mxu0 0.0
  %2176 = vmatpush1.msra.mxu0 %v2073
  %2177 = vmatprep.subr.mxu0 0.0
  %2178 = vmatpush1.msra.mxu0 %v2074
  %2179 = vmatprep.subr.mxu0 0.0
  %2180 = vmatpush1.msra.mxu0 %v2075
  %2181 = vmatprep.subr.mxu0 0.0
  %2182 = vmatpush1.msra.mxu0 %v2076
  %2183 = vmatprep.subr.mxu0 0.0
  %2184 = vmatpush1.msra.mxu0 %v2077
  %2185 = vmatprep.subr.mxu0 0.0
  %2186 = vmatpush1.msra.mxu0 %v2078
  %2187 = vmatprep.subr.mxu0 0.0
  %2188 = vmatpush1.msra.mxu0 %v2079
  %2189 = vmatprep.subr.mxu0 0.0
  %2190 = vmatpush1.msra.mxu0 %v2080
  %2191 = vmatprep.subr.mxu0 0.0
  %2192 = vmatpush1.msra.mxu0 %v2081
  %2193 = vmatprep.subr.mxu0 0.0
  %2194 = vmatpush1.msra.mxu0 %v2082
  %2195 = vmatprep.subr.mxu0 0.0
  %2196 = vmatpush1.msra.mxu0 %v2083
  %2197 = vmatprep.subr.mxu0 0.0
  %2198 = vmatpush1.msra.mxu0 %v2084
  %2199 = vmatprep.subr.mxu0 0.0
  %2200 = vmatpush1.msra.mxu0 %v2085
  %2201 = vmatprep.subr.mxu0 0.0
  %2202 = vmatpush1.msra.mxu0 %v2086
  %2203 = vmatprep.subr.mxu0 0.0
  %2204 = vmatpush1.msra.mxu0 %v2087
  %2205 = vmatprep.subr.mxu0 0.0
  %2206 = vmatpush1.msra.mxu0 %v2088
  %2207 = vmatprep.subr.mxu0 0.0
  %2208 = vmatpush1.msra.mxu0 %v2089
  %2209 = vmatprep.subr.mxu0 0.0
  %2210 = vmatpush1.msra.mxu0 %v2090
  %2211 = vmatprep.subr.mxu0 0.0
  %2212 = vmatpush1.msra.mxu0 %v2091
  %2213 = vmatprep.subr.mxu0 0.0
  %2214 = vmatpush1.msra.mxu0 %v2092
  %2215 = vmatprep.mubr.f32.mxu0 %v2014
  %2216 = vmatmul.mubr.f32.gmra.mrb[0].mxu0 %v2013
  %v2217 = vpop.f32.mrb[0].mxu0
  %v2218 = vadd.f32 %v2101, %v2217
  %v2219 = vpop.f32.mrb[0].mxu0
  %2220 = vmatprep.mubr.f32.mxu0 %v2017
  %2221 = vmatmul.mubr.f32.gmra.mrb[0].mxu0 %v2016
  %v2222 = vpop.f32.mrb[0].mxu0
  %v2223 = vadd.f32 %v2101, %v2222
  %v2224 = vpop.f32.mrb[0].mxu0
  %2225 = vmatprep.mubr.f32.mxu0 %v2020
  %2226 = vmatmul.mubr.f32.gmra.mrb[0].mxu0 %v2019
  %v2227 = vpop.f32.mrb[0].mxu0
  %v2228 = vadd.f32 %v2101, %v2227
  %v2229 = vpop.f32.mrb[0].mxu0
  %2230 = vmatprep.mubr.f32.mxu0 %v2023
  %2231 = vmatmul.mubr.f32.gmra.mrb[0].mxu0 %v2022
  %v2232 = vpop.f32.mrb[0].mxu0
  %v2233 = vadd.f32 %v2101, %v2232
  %v2234 = vpop.f32.mrb[0].mxu0
  %2235 = vmatprep.mubr.f32.mxu0 %v2026
  %2236 = vmatmul.mubr.f32.gmra.mrb[0].mxu0 %v2025
  %v2237 = vpop.f32.mrb[0].mxu0
  %v2238 = vadd.f32 %v2101, %v2237
  %v2239 = vpop.f32.mrb[0].mxu0
  %2240 = vmatprep.mubr.f32.mxu0 %v2029
  %2241 = vmatmul.mubr.f32.gmra.mrb[0].mxu0 %v2028
  %v2242 = vpop.f32.mrb[0].mxu0
  %v2243 = vadd.f32 %v2101, %v2242
  %v2244 = vpop.f32.mrb[0].mxu0
  %2245 = vmatprep.mubr.f32.mxu0 %v2032
  %2246 = vmatmul.mubr.f32.gmra.mrb[0].mxu0 %v2031
  %v2247 = vpop.f32.mrb[0].mxu0
  %v2248 = vadd.f32 %v2101, %v2247
  %v2249 = vpop.f32.mrb[0].mxu0
  %2250 = vmatprep.mubr.f32.mxu0 %v2035
  %2251 = vmatmul.mubr.f32.gmra.mrb[0].mxu0 %v2034
  %v2252 = vpop.f32.mrb[0].mxu0
  %v2253 = vadd.f32 %v2101, %v2252
  %v2254 = vpop.f32.mrb[0].mxu0
  %2255 = vmatprep.mubr.f32.mxu0 %v2038
  %2256 = vmatmul.mubr.f32.gmra.mrb[0].mxu0 %v2037
  %v2257 = vpop.f32.mrb[0].mxu0
  %v2258 = vadd.f32 %v2101, %v2257
  %v2259 = vpop.f32.mrb[0].mxu0
  %2260 = vmatprep.mubr.f32.mxu0 %v2041
  %2261 = vmatmul.mubr.f32.gmra.mrb[0].mxu0 %v2040
  %v2262 = vpop.f32.mrb[0].mxu0
  %v2263 = vadd.f32 %v2101, %v2262
  %v2264 = vpop.f32.mrb[0].mxu0
  %2265 = vmatprep.mubr.f32.mxu0 %v2044
  %2266 = vmatmul.mubr.f32.gmra.mrb[0].mxu0 %v2043
  %v2267 = vpop.f32.mrb[0].mxu0
  %v2268 = vadd.f32 %v2101, %v2267
  %v2269 = vpop.f32.mrb[0].mxu0
  %2270 = vmatprep.mubr.f32.mxu0 %v2047
  %2271 = vmatmul.mubr.f32.gmra.mrb[0].mxu0 %v2046
  %v2272 = vpop.f32.mrb[0].mxu0
  %v2273 = vadd.f32 %v2101, %v2272
  %v2274 = vpop.f32.mrb[0].mxu0
  %2275 = vmatprep.mubr.f32.mxu0 %v2050
  %2276 = vmatmul.mubr.f32.gmra.mrb[0].mxu0 %v2049
  %v2277 = vpop.f32.mrb[0].mxu0
  %v2278 = vadd.f32 %v2101, %v2277
  %v2279 = vpop.f32.mrb[0].mxu0
  %2280 = vmatprep.mubr.f32.mxu0 %v2053
  %2281 = vmatmul.mubr.f32.gmra.mrb[0].mxu0 %v2052
  %v2282 = vpop.f32.mrb[0].mxu0
  %v2283 = vadd.f32 %v2101, %v2282
  %v2284 = vpop.f32.mrb[0].mxu0
  %2285 = vmatprep.mubr.f32.mxu0 %v2056
  %2286 = vmatmul.mubr.f32.gmra.mrb[0].mxu0 %v2055
  %v2287 = vpop.f32.mrb[0].mxu0
  %v2288 = vadd.f32 %v2101, %v2287
  %v2289 = vpop.f32.mrb[0].mxu0
  %2290 = vmatprep.mubr.f32.mxu0 %v2059
  %2291 = vmatmul.mubr.f32.gmra.mrb[0].mxu0 %v2058
  %v2292 = vpop.f32.mrb[0].mxu0
  %v2293 = vadd.f32 %v2101, %v2292
  %v2294 = vpop.f32.mrb[0].mxu0
  %2295 = vdwg.mxu0
  %2296 = vmatprep.subr.mxu0 0.0
  %2297 = vmatpush1.msra.mxu0 %v2093
  %2298 = vmatprep.subr.mxu0 0.0
  %2299 = vmatpush1.msra.mxu0 %v2094
  %2300 = vmatprep.subr.mxu0 0.0
  %2301 = vmatpush1.msra.mxu0 %v2095
  %2302 = vmatprep.subr.mxu0 0.0
  %2303 = vmatpush1.msra.mxu0 %v2096
  %2304 = vmatprep.subr.mxu0 0.0
  %2305 = vmatpush1.msra.mxu0 0.0
  %2306 = vmatprep.subr.mxu0 0.0
  %2307 = vmatpush1.msra.mxu0 0.0
  %2308 = vmatprep.subr.mxu0 0.0
  %2309 = vmatpush1.msra.mxu0 0.0
  %2310 = vmatprep.subr.mxu0 0.0
  %2311 = vmatpush1.msra.mxu0 0.0
  %2312 = vmatprep.subr.mxu0 0.0
  %2313 = vmatpush1.msra.mxu0 0.0
  %2314 = vmatprep.subr.mxu0 0.0
  %2315 = vmatpush1.msra.mxu0 0.0
  %2316 = vmatprep.subr.mxu0 0.0
  %2317 = vmatpush1.msra.mxu0 0.0
  %2318 = vmatprep.subr.mxu0 0.0
  %2319 = vmatpush1.msra.mxu0 0.0
  %2320 = vmatprep.subr.mxu0 0.0
  %2321 = vmatpush1.msra.mxu0 0.0
  %2322 = vmatprep.subr.mxu0 0.0
  %2323 = vmatpush1.msra.mxu0 0.0
  %2324 = vmatprep.subr.mxu0 0.0
  %2325 = vmatpush1.msra.mxu0 0.0
  %2326 = vmatprep.subr.mxu0 0.0
  %2327 = vmatpush1.msra.mxu0 0.0
  %2328 = vmatprep.subr.mxu0 0.0
  %2329 = vmatpush1.msra.mxu0 0.0
  %2330 = vmatprep.subr.mxu0 0.0
  %2331 = vmatpush1.msra.mxu0 0.0
  %2332 = vmatprep.subr.mxu0 0.0
  %2333 = vmatpush1.msra.mxu0 0.0
  %2334 = vmatprep.subr.mxu0 0.0
  %2335 = vmatpush1.msra.mxu0 0.0
  %2336 = vmatprep.subr.mxu0 0.0
  %2337 = vmatpush1.msra.mxu0 0.0
  %2338 = vmatprep.subr.mxu0 0.0
  %2339 = vmatpush1.msra.mxu0 0.0
  %2340 = vmatprep.subr.mxu0 0.0
  %2341 = vmatpush1.msra.mxu0 0.0
  %2342 = vmatprep.subr.mxu0 0.0
  %2343 = vmatpush1.msra.mxu0 0.0
  %2344 = vmatprep.subr.mxu0 0.0
  %2345 = vmatpush1.msra.mxu0 0.0
  %2346 = vmatprep.subr.mxu0 0.0
  %2347 = vmatpush1.msra.mxu0 0.0
  %2348 = vmatprep.subr.mxu0 0.0
  %2349 = vmatpush1.msra.mxu0 0.0
  %2350 = vmatprep.subr.mxu0 0.0
  %2351 = vmatpush1.msra.mxu0 0.0
  %2352 = vmatprep.subr.mxu0 0.0
  %2353 = vmatpush1.msra.mxu0 0.0
  %2354 = vmatprep.subr.mxu0 0.0
  %2355 = vmatpush1.msra.mxu0 0.0
  %2356 = vmatprep.subr.mxu0 0.0
  %2357 = vmatpush1.msra.mxu0 0.0
  %2358 = vmatprep.subr.mxu0 0.0
  %2359 = vmatpush1.msra.mxu0 0.0
  %2360 = vmatprep.mubr.f32.mxu0 0.0
  %2361 = vmatmul.mubr.f32.gmra.mrb[0].mxu0 %v2104
  %v2362 = vpop.f32.mrb[0].mxu0
  %v2363 = vadd.f32 %v2218, %v2362
  %v2364 = vpop.f32.mrb[0].mxu0
  %2365 = vmatprep.mubr.f32.mxu0 0.0
  %2366 = vmatmul.mubr.f32.gmra.mrb[0].mxu0 %v2107
  %v2367 = vpop.f32.mrb[0].mxu0
  %v2368 = vadd.f32 %v2223, %v2367
  %v2369 = vpop.f32.mrb[0].mxu0
  %2370 = vmatprep.mubr.f32.mxu0 0.0
  %2371 = vmatmul.mubr.f32.gmra.mrb[0].mxu0 %v2110
  %v2372 = vpop.f32.mrb[0].mxu0
  %v2373 = vadd.f32 %v2228, %v2372
  %v2374 = vpop.f32.mrb[0].mxu0
  %2375 = vmatprep.mubr.f32.mxu0 0.0
  %2376 = vmatmul.mubr.f32.gmra.mrb[0].mxu0 %v2113
  %v2377 = vpop.f32.mrb[0].mxu0
  %v2378 = vadd.f32 %v2233, %v2377
  %v2379 = vpop.f32.mrb[0].mxu0
  %2380 = vmatprep.mubr.f32.mxu0 0.0
  %2381 = vmatmul.mubr.f32.gmra.mrb[0].mxu0 %v2116
  %v2382 = vpop.f32.mrb[0].mxu0
  %v2383 = vadd.f32 %v2238, %v2382
  %v2384 = vpop.f32.mrb[0].mxu0
  %2385 = vmatprep.mubr.f32.mxu0 0.0
  %2386 = vmatmul.mubr.f32.gmra.mrb[0].mxu0 %v2119
  %v2387 = vpop.f32.mrb[0].mxu0
  %v2388 = vadd.f32 %v2243, %v2387
  %v2389 = vpop.f32.mrb[0].mxu0
  %2390 = vmatprep.mubr.f32.mxu0 0.0
  %2391 = vmatmul.mubr.f32.gmra.mrb[0].mxu0 %v2122
  %v2392 = vpop.f32.mrb[0].mxu0
  %v2393 = vadd.f32 %v2248, %v2392
  %v2394 = vpop.f32.mrb[0].mxu0
  %2395 = vmatprep.mubr.f32.mxu0 0.0
  %2396 = vmatmul.mubr.f32.gmra.mrb[0].mxu0 %v2125
  %v2397 = vpop.f32.mrb[0].mxu0
  %v2398 = vadd.f32 %v2253, %v2397
  %v2399 = vpop.f32.mrb[0].mxu0
  %2400 = vmatprep.mubr.f32.mxu0 0.0
  %2401 = vmatmul.mubr.f32.gmra.mrb[0].mxu0 %v2128
  %v2402 = vpop.f32.mrb[0].mxu0
  %v2403 = vadd.f32 %v2258, %v2402
  %v2404 = vpop.f32.mrb[0].mxu0
  %2405 = vmatprep.mubr.f32.mxu0 0.0
  %2406 = vmatmul.mubr.f32.gmra.mrb[0].mxu0 %v2131
  %v2407 = vpop.f32.mrb[0].mxu0
  %v2408 = vadd.f32 %v2263, %v2407
  %v2409 = vpop.f32.mrb[0].mxu0
  %2410 = vmatprep.mubr.f32.mxu0 0.0
  %2411 = vmatmul.mubr.f32.gmra.mrb[0].mxu0 %v2134
  %v2412 = vpop.f32.mrb[0].mxu0
  %v2413 = vadd.f32 %v2268, %v2412
  %v2414 = vpop.f32.mrb[0].mxu0
  %2415 = vmatprep.mubr.f32.mxu0 0.0
  %2416 = vmatmul.mubr.f32.gmra.mrb[0].mxu0 %v2137
  %v2417 = vpop.f32.mrb[0].mxu0
  %v2418 = vadd.f32 %v2273, %v2417
  %v2419 = vpop.f32.mrb[0].mxu0
  %2420 = vmatprep.mubr.f32.mxu0 0.0
  %2421 = vmatmul.mubr.f32.gmra.mrb[0].mxu0 %v2140
  %v2422 = vpop.f32.mrb[0].mxu0
  %v2423 = vadd.f32 %v2278, %v2422
  %v2424 = vpop.f32.mrb[0].mxu0
  %2425 = vmatprep.mubr.f32.mxu0 0.0
  %2426 = vmatmul.mubr.f32.gmra.mrb[0].mxu0 %v2143
  %v2427 = vpop.f32.mrb[0].mxu0
  %v2428 = vadd.f32 %v2283, %v2427
  %v2429 = vpop.f32.mrb[0].mxu0
  %2430 = vmatprep.mubr.f32.mxu0 0.0
  %2431 = vmatmul.mubr.f32.gmra.mrb[0].mxu0 %v2146
  %v2432 = vpop.f32.mrb[0].mxu0
  %v2433 = vadd.f32 %v2288, %v2432
  %v2434 = vpop.f32.mrb[0].mxu0
  %2435 = vmatprep.mubr.f32.mxu0 0.0
  %2436 = vmatmul.mubr.f32.gmra.mrb[0].mxu0 %v2149
  %v2437 = vpop.f32.mrb[0].mxu0
  %v2438 = vadd.f32 %v2293, %v2437
  %v2439 = vpop.f32.mrb[0].mxu0
  %2440 = vdwg.mxu0
  %v2441 = vmax.f32 %v2363, 0.0
  %v2442 = vmax.f32 %v2368, 0.0
  %v2443 = vmax.f32 %v2373, 0.0
  %v2444 = vmax.f32 %v2378, 0.0
  %v2445 = vmax.f32 %v2383, 0.0
  %v2446 = vmax.f32 %v2388, 0.0
  %v2447 = vmax.f32 %v2393, 0.0
  %v2448 = vmax.f32 %v2398, 0.0
  %v2449 = vmax.f32 %v2403, 0.0
  %v2450 = vmax.f32 %v2408, 0.0
  %v2451 = vmax.f32 %v2413, 0.0
  %v2452 = vmax.f32 %v2418, 0.0
  %v2453 = vmax.f32 %v2423, 0.0
  %v2454 = vmax.f32 %v2428, 0.0
  %v2455 = vmax.f32 %v2433, 0.0
  %v2456 = vmax.f32 %v2438, 0.0
  %vm2457 = vcmask 523264
  %2458 = vst.msk [vmem:[#allocation4 + $0xb] sm:$0xff] %vm2457, %v2441
  %2459 = vst.msk [vmem:[#allocation4 + $0x13] sm:$0xff] %vm2457, %v2442
  %2460 = vst.msk [vmem:[#allocation4 + $0x1b] sm:$0xff] %vm2457, %v2443
  %2461 = vst.msk [vmem:[#allocation4 + $0x23] sm:$0xff] %vm2457, %v2444
  %2462 = vst.msk [vmem:[#allocation4 + $0x2b] sm:$0xff] %vm2457, %v2445
  %2463 = vst.msk [vmem:[#allocation4 + $0x33] sm:$0xff] %vm2457, %v2446
  %2464 = vst.msk [vmem:[#allocation4 + $0x3b] sm:$0xff] %vm2457, %v2447
  %2465 = vst.msk [vmem:[#allocation4 + $0x43] sm:$0xff] %vm2457, %v2448
  %2466 = vst.msk [vmem:[#allocation4 + $0x4b] sm:$0xff] %vm2457, %v2449
  %2467 = vst.msk [vmem:[#allocation4 + $0x53] sm:$0xff] %vm2457, %v2450
  %2468 = vst.msk [vmem:[#allocation4 + $0x5b] sm:$0xff] %vm2457, %v2451
  %2469 = vst.msk [vmem:[#allocation4 + $0x63] sm:$0xff] %vm2457, %v2452
  %2470 = vst.msk [vmem:[#allocation4 + $0x6b] sm:$0xff] %vm2457, %v2453
  %2471 = vst.msk [vmem:[#allocation4 + $0x73] sm:$0xff] %vm2457, %v2454
  %2472 = vst.msk [vmem:[#allocation4 + $0x7b] sm:$0xff] %vm2457, %v2455
  %2473 = vst.msk [vmem:[#allocation4 + $0x83] sm:$0xff] %vm2457, %v2456
  %v2474 = vld [vmem:[#allocation3 + $0x80] sm:$0xff]
  %v2475 = vld [vmem:[#allocation3 + $0x88] sm:$0xff]
  %v2476 = vld [vmem:[#allocation3 + $0x90] sm:$0xff]
  %v2477 = vld [vmem:[#allocation3 + $0x98] sm:$0xff]
  %v2478 = vld [vmem:[#allocation3 + $0xa0] sm:$0xff]
  %v2479 = vld [vmem:[#allocation3 + $0xa8] sm:$0xff]
  %v2480 = vld [vmem:[#allocation3 + $0xb0] sm:$0x3]
  %2481 = vst.msk [vmem:[#allocation7] sm:$0xff] %vm279, %v2474
  %2482 = vst.msk [vmem:[#allocation7 + $0x18] sm:$0xff] %vm279, %v2475
  %2483 = vst.msk [vmem:[#allocation7 + $0x30] sm:$0xff] %vm279, %v2476
  %2484 = vst.msk [vmem:[#allocation7 + $0x48] sm:$0xff] %vm279, %v2477
  %2485 = vst.msk [vmem:[#allocation7 + $0x60] sm:$0xff] %vm279, %v2478
  %2486 = vst.msk [vmem:[#allocation7 + $0x78] sm:$0xff] %vm279, %v2479
  %2487 = vst.msk [vmem:[#allocation7 + $0x90] sm:$0x3] %vm1041, %v2480
  %v2488 = vld [vmem:[#allocation3 + $0x81] sm:$0xff]
  %v2489 = vld [vmem:[#allocation3 + $0x89] sm:$0xff]
  %v2490 = vld [vmem:[#allocation3 + $0x91] sm:$0xff]
  %v2491 = vld [vmem:[#allocation3 + $0x99] sm:$0xff]
  %v2492 = vld [vmem:[#allocation3 + $0xa1] sm:$0xff]
  %v2493 = vld [vmem:[#allocation3 + $0xa9] sm:$0xff]
  %v2494 = vld [vmem:[#allocation3 + $0xb1] sm:$0x3]
  %2502 = vrot.lane.b32.xlu0 %v2488, 32
  %v2503 = vpop.permute.xlu0 %2502
  %2504 = vrot.lane.b32.xlu0 %v2489, 32
  %v2505 = vpop.permute.xlu0 %2504
  %2506 = vrot.lane.b32.xlu0 %v2490, 32
  %v2507 = vpop.permute.xlu0 %2506
  %2508 = vrot.lane.b32.xlu0 %v2491, 32
  %v2509 = vpop.permute.xlu0 %2508
  %2510 = vrot.lane.b32.xlu0 %v2492, 32
  %v2511 = vpop.permute.xlu0 %2510
  %2512 = vrot.lane.b32.xlu0 %v2493, 32
  %v2513 = vpop.permute.xlu0 %2512
  %2514 = vrot.lane.b32.xlu0 %v2494, 32
  %v2515 = vpop.permute.xlu0 %2514
  %2523 = vst.msk [vmem:[#allocation7] sm:$0xff] %vm1450, %v2503
  %2524 = vst.msk [vmem:[#allocation7 + $0x18] sm:$0xff] %vm1450, %v2505
  %2525 = vst.msk [vmem:[#allocation7 + $0x30] sm:$0xff] %vm1450, %v2507
  %2526 = vst.msk [vmem:[#allocation7 + $0x48] sm:$0xff] %vm1450, %v2509
  %2527 = vst.msk [vmem:[#allocation7 + $0x60] sm:$0xff] %vm1450, %v2511
  %2528 = vst.msk [vmem:[#allocation7 + $0x78] sm:$0xff] %vm1450, %v2513
  %vm2529 = vcmask 517376
  %2530 = vst.msk [vmem:[#allocation7 + $0x90] sm:$0x3] %vm2529, %v2515
  %v2531 = vld [vmem:[#allocation3 + $0x82] sm:$0xff]
  %v2532 = vld [vmem:[#allocation3 + $0x8a] sm:$0xff]
  %v2533 = vld [vmem:[#allocation3 + $0x92] sm:$0xff]
  %v2534 = vld [vmem:[#allocation3 + $0x9a] sm:$0xff]
  %v2535 = vld [vmem:[#allocation3 + $0xa2] sm:$0xff]
  %v2536 = vld [vmem:[#allocation3 + $0xaa] sm:$0xff]
  %v2537 = vld [vmem:[#allocation3 + $0xb2] sm:$0x3]
  %2545 = vrot.lane.b32.xlu0 %v2531, 64
  %v2546 = vpop.permute.xlu0 %2545
  %2547 = vrot.lane.b32.xlu0 %v2532, 64
  %v2548 = vpop.permute.xlu0 %2547
  %2549 = vrot.lane.b32.xlu0 %v2533, 64
  %v2550 = vpop.permute.xlu0 %2549
  %2551 = vrot.lane.b32.xlu0 %v2534, 64
  %v2552 = vpop.permute.xlu0 %2551
  %2553 = vrot.lane.b32.xlu0 %v2535, 64
  %v2554 = vpop.permute.xlu0 %2553
  %2555 = vrot.lane.b32.xlu0 %v2536, 64
  %v2556 = vpop.permute.xlu0 %2555
  %2557 = vrot.lane.b32.xlu0 %v2537, 64
  %v2558 = vpop.permute.xlu0 %2557
  %2566 = vst.msk [vmem:[#allocation7] sm:$0xff] %vm1547, %v2546
  %2567 = vst.msk [vmem:[#allocation7 + $0x18] sm:$0xff] %vm1547, %v2548
  %2568 = vst.msk [vmem:[#allocation7 + $0x30] sm:$0xff] %vm1547, %v2550
  %2569 = vst.msk [vmem:[#allocation7 + $0x48] sm:$0xff] %vm1547, %v2552
  %2570 = vst.msk [vmem:[#allocation7 + $0x60] sm:$0xff] %vm1547, %v2554
  %2571 = vst.msk [vmem:[#allocation7 + $0x78] sm:$0xff] %vm1547, %v2556
  %vm2572 = vcmask 779776
  %2573 = vst.msk [vmem:[#allocation7 + $0x90] sm:$0x3] %vm2572, %v2558
  %v2574 = vld [vmem:[#allocation3 + $0x8a] sm:$0xff]
  %v2575 = vld [vmem:[#allocation3 + $0x92] sm:$0xff]
  %v2576 = vld [vmem:[#allocation3 + $0x9a] sm:$0xff]
  %v2577 = vld [vmem:[#allocation3 + $0xa2] sm:$0xff]
  %v2578 = vld [vmem:[#allocation3 + $0xaa] sm:$0xff]
  %v2579 = vld [vmem:[#allocation3 + $0xb2] sm:$0xff]
  %v2580 = vld [vmem:[#allocation3 + $0xba] sm:$0x3]
  %2588 = vrot.lane.b32.xlu0 %v2574, 96
  %v2589 = vpop.permute.xlu0 %2588
  %2590 = vrot.lane.b32.xlu0 %v2575, 96
  %v2591 = vpop.permute.xlu0 %2590
  %2592 = vrot.lane.b32.xlu0 %v2576, 96
  %v2593 = vpop.permute.xlu0 %2592
  %2594 = vrot.lane.b32.xlu0 %v2577, 96
  %v2595 = vpop.permute.xlu0 %2594
  %2596 = vrot.lane.b32.xlu0 %v2578, 96
  %v2597 = vpop.permute.xlu0 %2596
  %2598 = vrot.lane.b32.xlu0 %v2579, 96
  %v2599 = vpop.permute.xlu0 %2598
  %2600 = vrot.lane.b32.xlu0 %v2580, 96
  %v2601 = vpop.permute.xlu0 %2600
  %2609 = vst.msk [vmem:[#allocation7] sm:$0xff] %vm1644, %v2589
  %2610 = vst.msk [vmem:[#allocation7 + $0x18] sm:$0xff] %vm1644, %v2591
  %2611 = vst.msk [vmem:[#allocation7 + $0x30] sm:$0xff] %vm1644, %v2593
  %2612 = vst.msk [vmem:[#allocation7 + $0x48] sm:$0xff] %vm1644, %v2595
  %2613 = vst.msk [vmem:[#allocation7 + $0x60] sm:$0xff] %vm1644, %v2597
  %2614 = vst.msk [vmem:[#allocation7 + $0x78] sm:$0xff] %vm1644, %v2599
  %vm2615 = vcmask 1042176
  %2616 = vst.msk [vmem:[#allocation7 + $0x90] sm:$0x3] %vm2615, %v2601
  %v2617 = vld [vmem:[#allocation3 + $0x8b] sm:$0xff]
  %v2618 = vld [vmem:[#allocation3 + $0x93] sm:$0xff]
  %v2619 = vld [vmem:[#allocation3 + $0x9b] sm:$0xff]
  %v2620 = vld [vmem:[#allocation3 + $0xa3] sm:$0xff]
  %v2621 = vld [vmem:[#allocation3 + $0xab] sm:$0xff]
  %v2622 = vld [vmem:[#allocation3 + $0xb3] sm:$0xff]
  %v2623 = vld [vmem:[#allocation3 + $0xbb] sm:$0x3]
  %2624 = vst.msk [vmem:[#allocation7 + $0x8] sm:$0xff] %vm279, %v2617
  %2625 = vst.msk [vmem:[#allocation7 + $0x20] sm:$0xff] %vm279, %v2618
  %2626 = vst.msk [vmem:[#allocation7 + $0x38] sm:$0xff] %vm279, %v2619
  %2627 = vst.msk [vmem:[#allocation7 + $0x50] sm:$0xff] %vm279, %v2620
  %2628 = vst.msk [vmem:[#allocation7 + $0x68] sm:$0xff] %vm279, %v2621
  %2629 = vst.msk [vmem:[#allocation7 + $0x80] sm:$0xff] %vm279, %v2622
  %2630 = vst.msk [vmem:[#allocation7 + $0x98] sm:$0x3] %vm1041, %v2623
  %v2631 = vld [vmem:[#allocation3 + $0x8c] sm:$0xff]
  %v2632 = vld [vmem:[#allocation3 + $0x94] sm:$0xff]
  %v2633 = vld [vmem:[#allocation3 + $0x9c] sm:$0xff]
  %v2634 = vld [vmem:[#allocation3 + $0xa4] sm:$0xff]
  %v2635 = vld [vmem:[#allocation3 + $0xac] sm:$0xff]
  %v2636 = vld [vmem:[#allocation3 + $0xb4] sm:$0xff]
  %v2637 = vld [vmem:[#allocation3 + $0xbc] sm:$0x3]
  %2645 = vrot.lane.b32.xlu0 %v2631, 32
  %v2646 = vpop.permute.xlu0 %2645
  %2647 = vrot.lane.b32.xlu0 %v2632, 32
  %v2648 = vpop.permute.xlu0 %2647
  %2649 = vrot.lane.b32.xlu0 %v2633, 32
  %v2650 = vpop.permute.xlu0 %2649
  %2651 = vrot.lane.b32.xlu0 %v2634, 32
  %v2652 = vpop.permute.xlu0 %2651
  %2653 = vrot.lane.b32.xlu0 %v2635, 32
  %v2654 = vpop.permute.xlu0 %2653
  %2655 = vrot.lane.b32.xlu0 %v2636, 32
  %v2656 = vpop.permute.xlu0 %2655
  %2657 = vrot.lane.b32.xlu0 %v2637, 32
  %v2658 = vpop.permute.xlu0 %2657
  %2666 = vst.msk [vmem:[#allocation7 + $0x8] sm:$0xff] %vm1450, %v2646
  %2667 = vst.msk [vmem:[#allocation7 + $0x20] sm:$0xff] %vm1450, %v2648
  %2668 = vst.msk [vmem:[#allocation7 + $0x38] sm:$0xff] %vm1450, %v2650
  %2669 = vst.msk [vmem:[#allocation7 + $0x50] sm:$0xff] %vm1450, %v2652
  %2670 = vst.msk [vmem:[#allocation7 + $0x68] sm:$0xff] %vm1450, %v2654
  %2671 = vst.msk [vmem:[#allocation7 + $0x80] sm:$0xff] %vm1450, %v2656
  %2672 = vst.msk [vmem:[#allocation7 + $0x98] sm:$0x3] %vm2529, %v2658
  %v2673 = vld [vmem:[#allocation3 + $0x94] sm:$0xff]
  %v2674 = vld [vmem:[#allocation3 + $0x9c] sm:$0xff]
  %v2675 = vld [vmem:[#allocation3 + $0xa4] sm:$0xff]
  %v2676 = vld [vmem:[#allocation3 + $0xac] sm:$0xff]
  %v2677 = vld [vmem:[#allocation3 + $0xb4] sm:$0xff]
  %v2678 = vld [vmem:[#allocation3 + $0xbc] sm:$0xff]
  %v2679 = vld [vmem:[#allocation3 + $0xc4] sm:$0x3]
  %2687 = vrot.lane.b32.xlu0 %v2673, 64
  %v2688 = vpop.permute.xlu0 %2687
  %2689 = vrot.lane.b32.xlu0 %v2674, 64
  %v2690 = vpop.permute.xlu0 %2689
  %2691 = vrot.lane.b32.xlu0 %v2675, 64
  %v2692 = vpop.permute.xlu0 %2691
  %2693 = vrot.lane.b32.xlu0 %v2676, 64
  %v2694 = vpop.permute.xlu0 %2693
  %2695 = vrot.lane.b32.xlu0 %v2677, 64
  %v2696 = vpop.permute.xlu0 %2695
  %2697 = vrot.lane.b32.xlu0 %v2678, 64
  %v2698 = vpop.permute.xlu0 %2697
  %2699 = vrot.lane.b32.xlu0 %v2679, 64
  %v2700 = vpop.permute.xlu0 %2699
  %2708 = vst.msk [vmem:[#allocation7 + $0x8] sm:$0xff] %vm1547, %v2688
  %2709 = vst.msk [vmem:[#allocation7 + $0x20] sm:$0xff] %vm1547, %v2690
  %2710 = vst.msk [vmem:[#allocation7 + $0x38] sm:$0xff] %vm1547, %v2692
  %2711 = vst.msk [vmem:[#allocation7 + $0x50] sm:$0xff] %vm1547, %v2694
  %2712 = vst.msk [vmem:[#allocation7 + $0x68] sm:$0xff] %vm1547, %v2696
  %2713 = vst.msk [vmem:[#allocation7 + $0x80] sm:$0xff] %vm1547, %v2698
  %2714 = vst.msk [vmem:[#allocation7 + $0x98] sm:$0x3] %vm2572, %v2700
  %v2715 = vld [vmem:[#allocation3 + $0x95] sm:$0xff]
  %v2716 = vld [vmem:[#allocation3 + $0x9d] sm:$0xff]
  %v2717 = vld [vmem:[#allocation3 + $0xa5] sm:$0xff]
  %v2718 = vld [vmem:[#allocation3 + $0xad] sm:$0xff]
  %v2719 = vld [vmem:[#allocation3 + $0xb5] sm:$0xff]
  %v2720 = vld [vmem:[#allocation3 + $0xbd] sm:$0xff]
  %v2721 = vld [vmem:[#allocation3 + $0xc5] sm:$0x3]
  %2729 = vrot.lane.b32.xlu0 %v2715, 96
  %v2730 = vpop.permute.xlu0 %2729
  %2731 = vrot.lane.b32.xlu0 %v2716, 96
  %v2732 = vpop.permute.xlu0 %2731
  %2733 = vrot.lane.b32.xlu0 %v2717, 96
  %v2734 = vpop.permute.xlu0 %2733
  %2735 = vrot.lane.b32.xlu0 %v2718, 96
  %v2736 = vpop.permute.xlu0 %2735
  %2737 = vrot.lane.b32.xlu0 %v2719, 96
  %v2738 = vpop.permute.xlu0 %2737
  %2739 = vrot.lane.b32.xlu0 %v2720, 96
  %v2740 = vpop.permute.xlu0 %2739
  %2741 = vrot.lane.b32.xlu0 %v2721, 96
  %v2742 = vpop.permute.xlu0 %2741
  %2750 = vst.msk [vmem:[#allocation7 + $0x8] sm:$0xff] %vm1644, %v2730
  %2751 = vst.msk [vmem:[#allocation7 + $0x20] sm:$0xff] %vm1644, %v2732
  %2752 = vst.msk [vmem:[#allocation7 + $0x38] sm:$0xff] %vm1644, %v2734
  %2753 = vst.msk [vmem:[#allocation7 + $0x50] sm:$0xff] %vm1644, %v2736
  %2754 = vst.msk [vmem:[#allocation7 + $0x68] sm:$0xff] %vm1644, %v2738
  %2755 = vst.msk [vmem:[#allocation7 + $0x80] sm:$0xff] %vm1644, %v2740
  %2756 = vst.msk [vmem:[#allocation7 + $0x98] sm:$0x3] %vm2615, %v2742
  %v2757 = vld [vmem:[#allocation3 + $0x96] sm:$0xff]
  %v2758 = vld [vmem:[#allocation3 + $0x9e] sm:$0xff]
  %v2759 = vld [vmem:[#allocation3 + $0xa6] sm:$0xff]
  %v2760 = vld [vmem:[#allocation3 + $0xae] sm:$0xff]
  %v2761 = vld [vmem:[#allocation3 + $0xb6] sm:$0xff]
  %v2762 = vld [vmem:[#allocation3 + $0xbe] sm:$0xff]
  %v2763 = vld [vmem:[#allocation3 + $0xc6] sm:$0x3]
  %2764 = vst.msk [vmem:[#allocation7 + $0x10] sm:$0xff] %vm279, %v2757
  %2765 = vst.msk [vmem:[#allocation7 + $0x28] sm:$0xff] %vm279, %v2758
  %2766 = vst.msk [vmem:[#allocation7 + $0x40] sm:$0xff] %vm279, %v2759
  %2767 = vst.msk [vmem:[#allocation7 + $0x58] sm:$0xff] %vm279, %v2760
  %2768 = vst.msk [vmem:[#allocation7 + $0x70] sm:$0xff] %vm279, %v2761
  %2769 = vst.msk [vmem:[#allocation7 + $0x88] sm:$0xff] %vm279, %v2762
  %2770 = vst.msk [vmem:[#allocation7 + $0xa0] sm:$0x3] %vm1041, %v2763
  %v2771 = vld [vmem:[#allocation7] sm:$0xff]
  %v2772 = vld [vmem:[#allocation7 + $0x8] sm:$0xff]
  %v2773 = vld [vmem:[#allocation7 + $0x10] sm:$0xff]
  %v2774 = vld [vmem:[#allocation7 + $0x18] sm:$0xff]
  %v2775 = vld [vmem:[#allocation7 + $0x20] sm:$0xff]
  %v2776 = vld [vmem:[#allocation7 + $0x28] sm:$0xff]
  %v2777 = vld [vmem:[#allocation7 + $0x30] sm:$0xff]
  %v2778 = vld [vmem:[#allocation7 + $0x38] sm:$0xff]
  %v2779 = vld [vmem:[#allocation7 + $0x40] sm:$0xff]
  %v2780 = vld [vmem:[#allocation7 + $0x48] sm:$0xff]
  %v2781 = vld [vmem:[#allocation7 + $0x50] sm:$0xff]
  %v2782 = vld [vmem:[#allocation7 + $0x58] sm:$0xff]
  %v2783 = vld [vmem:[#allocation7 + $0x60] sm:$0xff]
  %v2784 = vld [vmem:[#allocation7 + $0x68] sm:$0xff]
  %v2785 = vld [vmem:[#allocation7 + $0x70] sm:$0xff]
  %v2786 = vld [vmem:[#allocation7 + $0x78] sm:$0xff]
  %v2787 = vld [vmem:[#allocation7 + $0x80] sm:$0xff]
  %v2788 = vld [vmem:[#allocation7 + $0x88] sm:$0xff]
  %v2789 = vld [vmem:[#allocation7 + $0x90] sm:$0x3]
  %v2790 = vld [vmem:[#allocation7 + $0x98] sm:$0x3]
  %v2791 = vld [vmem:[#allocation7 + $0xa0] sm:$0x3]
  %v2792 = vld [vmem:[%s3] sm:$0xff]
  %v2793 = vld [vmem:[%s3 + $0x8] sm:$0xff]
  %v2794 = vld [vmem:[%s3 + $0x10] sm:$0xff]
  %v2795 = vld [vmem:[%s3 + $0x18] sm:$0xff]
  %v2796 = vld [vmem:[%s3 + $0x20] sm:$0xff]
  %v2797 = vld [vmem:[%s3 + $0x28] sm:$0xff]
  %v2798 = vld [vmem:[%s3 + $0x30] sm:$0xff]
  %v2799 = vld [vmem:[%s3 + $0x38] sm:$0xff]
  %v2800 = vld [vmem:[%s3 + $0x40] sm:$0xff]
  %v2801 = vld [vmem:[%s3 + $0x48] sm:$0xff]
  %v2802 = vld [vmem:[%s3 + $0x50] sm:$0xff]
  %v2803 = vld [vmem:[%s3 + $0x58] sm:$0xff]
  %v2804 = vld [vmem:[%s3 + $0x60] sm:$0xff]
  %v2805 = vld [vmem:[%s3 + $0x68] sm:$0xff]
  %v2806 = vld [vmem:[%s3 + $0x70] sm:$0xff]
  %v2807 = vld [vmem:[%s3 + $0x78] sm:$0xff]
  %v2808 = vld [vmem:[%s3 + $0x80] sm:$0xff]
  %v2809 = vld [vmem:[%s3 + $0x88] sm:$0xff]
  %v2810 = vld [vmem:[%s3 + $0x90] sm:$0xff]
  %v2811 = vld [vmem:[%s3 + $0x98] sm:$0xff]
  %v2812 = vld [vmem:[%s3 + $0xa0] sm:$0xff]
  %v2813 = vld [vmem:[%s3 + $0xa8] sm:$0xff]
  %v2814 = vld [vmem:[%s3 + $0xb0] sm:$0xff]
  %v2815 = vld [vmem:[%s3 + $0xb8] sm:$0xff]
  %v2816 = vld [vmem:[%s3 + $0xc0] sm:$0xff]
  %v2817 = vld [vmem:[%s3 + $0xc8] sm:$0xff]
  %v2818 = vld [vmem:[%s3 + $0xd0] sm:$0xff]
  %v2819 = vld [vmem:[%s3 + $0xd8] sm:$0xff]
  %v2820 = vld [vmem:[%s3 + $0xe0] sm:$0xff]
  %v2821 = vld [vmem:[%s3 + $0xe8] sm:$0xff]
  %v2822 = vld [vmem:[%s3 + $0xf0] sm:$0xff]
  %v2823 = vld [vmem:[%s3 + $0xf8] sm:$0xff]
  %v2824 = vld [vmem:[%s3 + $0x100] sm:$0xff]
  %v2825 = vld [vmem:[%s3 + $0x108] sm:$0xff]
  %v2826 = vld [vmem:[%s3 + $0x110] sm:$0xff]
  %v2827 = vld [vmem:[%s3 + $0x118] sm:$0xff]
  %v2829 = vsel %vm279, %v2773, 0
  %v2832 = vsel %vm279, %v2776, 0
  %v2835 = vsel %vm279, %v2779, 0
  %v2838 = vsel %vm279, %v2782, 0
  %v2841 = vsel %vm279, %v2785, 0
  %v2844 = vsel %vm279, %v2788, 0
  %v2847 = vsel %vm279, %v2791, 0
  %2849 = vmatprep.subr.mxu0 0.0
  %2850 = vmatpush1.msra.mxu0 %v2792
  %2851 = vmatprep.subr.mxu0 0.0
  %2852 = vmatpush1.msra.mxu0 %v2793
  %2853 = vmatprep.subr.mxu0 0.0
  %2854 = vmatpush1.msra.mxu0 %v2794
  %2855 = vmatprep.subr.mxu0 0.0
  %2856 = vmatpush1.msra.mxu0 %v2795
  %2857 = vmatprep.subr.mxu0 0.0
  %2858 = vmatpush1.msra.mxu0 %v2796
  %2859 = vmatprep.subr.mxu0 0.0
  %2860 = vmatpush1.msra.mxu0 %v2797
  %2861 = vmatprep.subr.mxu0 0.0
  %2862 = vmatpush1.msra.mxu0 %v2798
  %2863 = vmatprep.subr.mxu0 0.0
  %2864 = vmatpush1.msra.mxu0 %v2799
  %2865 = vmatprep.subr.mxu0 0.0
  %2866 = vmatpush1.msra.mxu0 %v2800
  %2867 = vmatprep.subr.mxu0 0.0
  %2868 = vmatpush1.msra.mxu0 %v2801
  %2869 = vmatprep.subr.mxu0 0.0
  %2870 = vmatpush1.msra.mxu0 %v2802
  %2871 = vmatprep.subr.mxu0 0.0
  %2872 = vmatpush1.msra.mxu0 %v2803
  %2873 = vmatprep.subr.mxu0 0.0
  %2874 = vmatpush1.msra.mxu0 %v2804
  %2875 = vmatprep.subr.mxu0 0.0
  %2876 = vmatpush1.msra.mxu0 %v2805
  %2877 = vmatprep.subr.mxu0 0.0
  %2878 = vmatpush1.msra.mxu0 %v2806
  %2879 = vmatprep.subr.mxu0 0.0
  %2880 = vmatpush1.msra.mxu0 %v2807
  %2881 = vmatprep.subr.mxu0 0.0
  %2882 = vmatpush1.msra.mxu0 %v2808
  %2883 = vmatprep.subr.mxu0 0.0
  %2884 = vmatpush1.msra.mxu0 %v2809
  %2885 = vmatprep.subr.mxu0 0.0
  %2886 = vmatpush1.msra.mxu0 %v2810
  %2887 = vmatprep.subr.mxu0 0.0
  %2888 = vmatpush1.msra.mxu0 %v2811
  %2889 = vmatprep.subr.mxu0 0.0
  %2890 = vmatpush1.msra.mxu0 %v2812
  %2891 = vmatprep.subr.mxu0 0.0
  %2892 = vmatpush1.msra.mxu0 %v2813
  %2893 = vmatprep.subr.mxu0 0.0
  %2894 = vmatpush1.msra.mxu0 %v2814
  %2895 = vmatprep.subr.mxu0 0.0
  %2896 = vmatpush1.msra.mxu0 %v2815
  %2897 = vmatprep.subr.mxu0 0.0
  %2898 = vmatpush1.msra.mxu0 %v2816
  %2899 = vmatprep.subr.mxu0 0.0
  %2900 = vmatpush1.msra.mxu0 %v2817
  %2901 = vmatprep.subr.mxu0 0.0
  %2902 = vmatpush1.msra.mxu0 %v2818
  %2903 = vmatprep.subr.mxu0 0.0
  %2904 = vmatpush1.msra.mxu0 %v2819
  %2905 = vmatprep.subr.mxu0 0.0
  %2906 = vmatpush1.msra.mxu0 %v2820
  %2907 = vmatprep.subr.mxu0 0.0
  %2908 = vmatpush1.msra.mxu0 %v2821
  %2909 = vmatprep.subr.mxu0 0.0
  %2910 = vmatpush1.msra.mxu0 %v2822
  %2911 = vmatprep.subr.mxu0 0.0
  %2912 = vmatpush1.msra.mxu0 %v2823
  %2913 = vmatprep.mubr.f32.mxu0 %v2772
  %2914 = vmatmul.mubr.f32.gmra.mrb[0].mxu0 %v2771
  %v2915 = vpop.f32.mrb[0].mxu0
  %v2916 = vadd.f32 %v2101, %v2915
  %v2917 = vpop.f32.mrb[0].mxu0
  %2918 = vmatprep.mubr.f32.mxu0 %v2775
  %2919 = vmatmul.mubr.f32.gmra.mrb[0].mxu0 %v2774
  %v2920 = vpop.f32.mrb[0].mxu0
  %v2921 = vadd.f32 %v2101, %v2920
  %v2922 = vpop.f32.mrb[0].mxu0
  %2923 = vmatprep.mubr.f32.mxu0 %v2778
  %2924 = vmatmul.mubr.f32.gmra.mrb[0].mxu0 %v2777
  %v2925 = vpop.f32.mrb[0].mxu0
  %v2926 = vadd.f32 %v2101, %v2925
  %v2927 = vpop.f32.mrb[0].mxu0
  %2928 = vmatprep.mubr.f32.mxu0 %v2781
  %2929 = vmatmul.mubr.f32.gmra.mrb[0].mxu0 %v2780
  %v2930 = vpop.f32.mrb[0].mxu0
  %v2931 = vadd.f32 %v2101, %v2930
  %v2932 = vpop.f32.mrb[0].mxu0
  %2933 = vmatprep.mubr.f32.mxu0 %v2784
  %2934 = vmatmul.mubr.f32.gmra.mrb[0].mxu0 %v2783
  %v2935 = vpop.f32.mrb[0].mxu0
  %v2936 = vadd.f32 %v2101, %v2935
  %v2937 = vpop.f32.mrb[0].mxu0
  %2938 = vmatprep.mubr.f32.mxu0 %v2787
  %2939 = vmatmul.mubr.f32.gmra.mrb[0].mxu0 %v2786
  %v2940 = vpop.f32.mrb[0].mxu0
  %v2941 = vadd.f32 %v2101, %v2940
  %v2942 = vpop.f32.mrb[0].mxu0
  %2943 = vmatprep.mubr.f32.mxu0 %v2790
  %2944 = vmatmul.mubr.f32.gmra.mrb[0].mxu0 %v2789
  %v2945 = vpop.f32.mrb[0].mxu0
  %v2946 = vadd.f32 %v2101, %v2945
  %v2947 = vpop.f32.mrb[0].mxu0
  %2948 = vdwg.mxu0
  %2949 = vmatprep.subr.mxu0 0.0
  %2950 = vmatpush1.msra.mxu0 %v2824
  %2951 = vmatprep.subr.mxu0 0.0
  %2952 = vmatpush1.msra.mxu0 %v2825
  %2953 = vmatprep.subr.mxu0 0.0
  %2954 = vmatpush1.msra.mxu0 %v2826
  %2955 = vmatprep.subr.mxu0 0.0
  %2956 = vmatpush1.msra.mxu0 %v2827
  %2957 = vmatprep.subr.mxu0 0.0
  %2958 = vmatpush1.msra.mxu0 0.0
  %2959 = vmatprep.subr.mxu0 0.0
  %2960 = vmatpush1.msra.mxu0 0.0
  %2961 = vmatprep.subr.mxu0 0.0
  %2962 = vmatpush1.msra.mxu0 0.0
  %2963 = vmatprep.subr.mxu0 0.0
  %2964 = vmatpush1.msra.mxu0 0.0
  %2965 = vmatprep.subr.mxu0 0.0
  %2966 = vmatpush1.msra.mxu0 0.0
  %2967 = vmatprep.subr.mxu0 0.0
  %2968 = vmatpush1.msra.mxu0 0.0
  %2969 = vmatprep.subr.mxu0 0.0
  %2970 = vmatpush1.msra.mxu0 0.0
  %2971 = vmatprep.subr.mxu0 0.0
  %2972 = vmatpush1.msra.mxu0 0.0
  %2973 = vmatprep.subr.mxu0 0.0
  %2974 = vmatpush1.msra.mxu0 0.0
  %2975 = vmatprep.subr.mxu0 0.0
  %2976 = vmatpush1.msra.mxu0 0.0
  %2977 = vmatprep.subr.mxu0 0.0
  %2978 = vmatpush1.msra.mxu0 0.0
  %2979 = vmatprep.subr.mxu0 0.0
  %2980 = vmatpush1.msra.mxu0 0.0
  %2981 = vmatprep.subr.mxu0 0.0
  %2982 = vmatpush1.msra.mxu0 0.0
  %2983 = vmatprep.subr.mxu0 0.0
  %2984 = vmatpush1.msra.mxu0 0.0
  %2985 = vmatprep.subr.mxu0 0.0
  %2986 = vmatpush1.msra.mxu0 0.0
  %2987 = vmatprep.subr.mxu0 0.0
  %2988 = vmatpush1.msra.mxu0 0.0
  %2989 = vmatprep.subr.mxu0 0.0
  %2990 = vmatpush1.msra.mxu0 0.0
  %2991 = vmatprep.subr.mxu0 0.0
  %2992 = vmatpush1.msra.mxu0 0.0
  %2993 = vmatprep.subr.mxu0 0.0
  %2994 = vmatpush1.msra.mxu0 0.0
  %2995 = vmatprep.subr.mxu0 0.0
  %2996 = vmatpush1.msra.mxu0 0.0
  %2997 = vmatprep.subr.mxu0 0.0
  %2998 = vmatpush1.msra.mxu0 0.0
  %2999 = vmatprep.subr.mxu0 0.0
  %3000 = vmatpush1.msra.mxu0 0.0
  %3001 = vmatprep.subr.mxu0 0.0
  %3002 = vmatpush1.msra.mxu0 0.0
  %3003 = vmatprep.subr.mxu0 0.0
  %3004 = vmatpush1.msra.mxu0 0.0
  %3005 = vmatprep.subr.mxu0 0.0
  %3006 = vmatpush1.msra.mxu0 0.0
  %3007 = vmatprep.subr.mxu0 0.0
  %3008 = vmatpush1.msra.mxu0 0.0
  %3009 = vmatprep.subr.mxu0 0.0
  %3010 = vmatpush1.msra.mxu0 0.0
  %3011 = vmatprep.subr.mxu0 0.0
  %3012 = vmatpush1.msra.mxu0 0.0
  %3013 = vmatprep.mubr.f32.mxu0 0.0
  %3014 = vmatmul.mubr.f32.gmra.mrb[0].mxu0 %v2829
  %v3015 = vpop.f32.mrb[0].mxu0
  %v3016 = vadd.f32 %v2916, %v3015
  %v3017 = vpop.f32.mrb[0].mxu0
  %3018 = vmatprep.mubr.f32.mxu0 0.0
  %3019 = vmatmul.mubr.f32.gmra.mrb[0].mxu0 %v2832
  %v3020 = vpop.f32.mrb[0].mxu0
  %v3021 = vadd.f32 %v2921, %v3020
  %v3022 = vpop.f32.mrb[0].mxu0
  %3023 = vmatprep.mubr.f32.mxu0 0.0
  %3024 = vmatmul.mubr.f32.gmra.mrb[0].mxu0 %v2835
  %v3025 = vpop.f32.mrb[0].mxu0
  %v3026 = vadd.f32 %v2926, %v3025
  %v3027 = vpop.f32.mrb[0].mxu0
  %3028 = vmatprep.mubr.f32.mxu0 0.0
  %3029 = vmatmul.mubr.f32.gmra.mrb[0].mxu0 %v2838
  %v3030 = vpop.f32.mrb[0].mxu0
  %v3031 = vadd.f32 %v2931, %v3030
  %v3032 = vpop.f32.mrb[0].mxu0
  %3033 = vmatprep.mubr.f32.mxu0 0.0
  %3034 = vmatmul.mubr.f32.gmra.mrb[0].mxu0 %v2841
  %v3035 = vpop.f32.mrb[0].mxu0
  %v3036 = vadd.f32 %v2936, %v3035
  %v3037 = vpop.f32.mrb[0].mxu0
  %3038 = vmatprep.mubr.f32.mxu0 0.0
  %3039 = vmatmul.mubr.f32.gmra.mrb[0].mxu0 %v2844
  %v3040 = vpop.f32.mrb[0].mxu0
  %v3041 = vadd.f32 %v2941, %v3040
  %v3042 = vpop.f32.mrb[0].mxu0
  %3043 = vmatprep.mubr.f32.mxu0 0.0
  %3044 = vmatmul.mubr.f32.gmra.mrb[0].mxu0 %v2847
  %v3045 = vpop.f32.mrb[0].mxu0
  %v3046 = vadd.f32 %v2946, %v3045
  %v3047 = vpop.f32.mrb[0].mxu0
  %3048 = vdwg.mxu0
  %v3049 = vmax.f32 %v3016, 0.0
  %v3050 = vmax.f32 %v3021, 0.0
  %v3051 = vmax.f32 %v3026, 0.0
  %v3052 = vmax.f32 %v3031, 0.0
  %v3053 = vmax.f32 %v3036, 0.0
  %v3054 = vmax.f32 %v3041, 0.0
  %v3055 = vmax.f32 %v3046, 0.0
  %3056 = vst.msk [vmem:[#allocation4 + $0x8b] sm:$0xff] %vm2457, %v3049
  %3057 = vst.msk [vmem:[#allocation4 + $0x93] sm:$0xff] %vm2457, %v3050
  %3058 = vst.msk [vmem:[#allocation4 + $0x9b] sm:$0xff] %vm2457, %v3051
  %3059 = vst.msk [vmem:[#allocation4 + $0xa3] sm:$0xff] %vm2457, %v3052
  %3060 = vst.msk [vmem:[#allocation4 + $0xab] sm:$0xff] %vm2457, %v3053
  %3061 = vst.msk [vmem:[#allocation4 + $0xb3] sm:$0xff] %vm2457, %v3054
  %vm3062 = vcmask 517120
  %3063 = vst.msk [vmem:[#allocation4 + $0xbb] sm:$0x3] %vm3062, %v3055
  %vm3064 = vcmask 521216
  %3065 = vst.msk [vmem:[#allocation5] sm:$0x3f] %vm3064, 0.0
  %3066 = vst.msk [vmem:[#allocation5 + $0x1e] sm:$0x3f] %vm3064, 0.0
  %s3067 = scalar_lea.vmem [#allocation4], 11
  %v3068 = vld [vmem:[%s3067] ss:$2 sm:$0xf]
  %s3069 = scalar_lea.vmem [#allocation4], 12
  %v3070 = vld [vmem:[%s3069] ss:$2 sm:$0xf]
  %v3071 = vmax.f32 %v3068, %v3070
  %s3072 = scalar_lea.vmem [#allocation4], 21
  %v3073 = vld [vmem:[%s3072] ss:$2 sm:$0xf]
  %s3074 = scalar_lea.vmem [#allocation4], 22
  %v3075 = vld [vmem:[%s3074] ss:$2 sm:$0xf]
  %v3076 = vmax.f32 %v3073, %v3075
  %v3077 = vmax.f32 %v3071, %v3076
  %v3079 = vrot.slane %v3077, 7
  %v3081 = vsel %vm1058, 0.0, %v3079
  %vm3082 = vcmask 1044480
  %v3083 = vsel %vm3082, %v3081, 0.0
  %3084 = vst.msk [vmem:[#allocation5 + $0x6] sm:$0x3f] %vm3064, %v3083
  %s3085 = scalar_lea.vmem [#allocation4], 31
  %v3086 = vld [vmem:[%s3085] ss:$2 sm:$0xf]
  %s3087 = scalar_lea.vmem [#allocation4], 32
  %v3088 = vld [vmem:[%s3087] ss:$2 sm:$0xf]
  %v3089 = vmax.f32 %v3086, %v3088
  %s3090 = scalar_lea.vmem [#allocation4], 41
  %v3091 = vld [vmem:[%s3090] ss:$2 sm:$0xf]
  %s3092 = scalar_lea.vmem [#allocation4], 42
  %v3093 = vld [vmem:[%s3092] ss:$2 sm:$0xf]
  %v3094 = vmax.f32 %v3091, %v3093
  %v3095 = vmax.f32 %v3089, %v3094
  %v3097 = vrot.slane %v3095, 7
  %v3099 = vsel %vm1058, 0.0, %v3097
  %v3100 = vsel %vm3082, %v3099, 0.0
  %3101 = vst.msk [vmem:[#allocation5 + $0xc] sm:$0x3f] %vm3064, %v3100
  %s3102 = scalar_lea.vmem [#allocation4], 51
  %v3103 = vld [vmem:[%s3102] ss:$2 sm:$0xf]
  %s3104 = scalar_lea.vmem [#allocation4], 52
  %v3105 = vld [vmem:[%s3104] ss:$2 sm:$0xf]
  %v3106 = vmax.f32 %v3103, %v3105
  %s3107 = scalar_lea.vmem [#allocation4], 61
  %v3108 = vld [vmem:[%s3107] ss:$2 sm:$0xf]
  %s3109 = scalar_lea.vmem [#allocation4], 62
  %v3110 = vld [vmem:[%s3109] ss:$2 sm:$0xf]
  %v3111 = vmax.f32 %v3108, %v3110
  %v3112 = vmax.f32 %v3106, %v3111
  %v3114 = vrot.slane %v3112, 7
  %v3116 = vsel %vm1058, 0.0, %v3114
  %v3117 = vsel %vm3082, %v3116, 0.0
  %3118 = vst.msk [vmem:[#allocation5 + $0x12] sm:$0x3f] %vm3064, %v3117
  %s3119 = scalar_lea.vmem [#allocation4], 71
  %v3120 = vld [vmem:[%s3119] ss:$2 sm:$0xf]
  %s3121 = scalar_lea.vmem [#allocation4], 72
  %v3122 = vld [vmem:[%s3121] ss:$2 sm:$0xf]
  %v3123 = vmax.f32 %v3120, %v3122
  %s3124 = scalar_lea.vmem [#allocation4], 81
  %v3125 = vld [vmem:[%s3124] ss:$2 sm:$0xf]
  %s3126 = scalar_lea.vmem [#allocation4], 82
  %v3127 = vld [vmem:[%s3126] ss:$2 sm:$0xf]
  %v3128 = vmax.f32 %v3125, %v3127
  %v3129 = vmax.f32 %v3123, %v3128
  %v3131 = vrot.slane %v3129, 7
  %v3133 = vsel %vm1058, 0.0, %v3131
  %v3134 = vsel %vm3082, %v3133, 0.0
  %3135 = vst.msk [vmem:[#allocation5 + $0x18] sm:$0x3f] %vm3064, %v3134
  %3136 = vst.msk [vmem:[#allocation5 + $0x24] sm:$0x3f] %vm3064, 0.0
  %3137 = vst.msk [vmem:[#allocation5 + $0x42] sm:$0x3f] %vm3064, 0.0
  %s3138 = scalar_lea.vmem [#allocation4], 111
  %v3139 = vld [vmem:[%s3138] ss:$2 sm:$0xf]
  %s3140 = scalar_lea.vmem [#allocation4], 112
  %v3141 = vld [vmem:[%s3140] ss:$2 sm:$0xf]
  %v3142 = vmax.f32 %v3139, %v3141
  %s3143 = scalar_lea.vmem [#allocation4], 121
  %v3144 = vld [vmem:[%s3143] ss:$2 sm:$0xf]
  %s3145 = scalar_lea.vmem [#allocation4], 122
  %v3146 = vld [vmem:[%s3145] ss:$2 sm:$0xf]
  %v3147 = vmax.f32 %v3144, %v3146
  %v3148 = vmax.f32 %v3142, %v3147
  %v3150 = vrot.slane %v3148, 7
  %v3152 = vsel %vm1058, 0.0, %v3150
  %v3153 = vsel %vm3082, %v3152, 0.0
  %3154 = vst.msk [vmem:[#allocation5 + $0x2a] sm:$0x3f] %vm3064, %v3153
  %s3155 = scalar_lea.vmem [#allocation4], 131
  %v3156 = vld [vmem:[%s3155] ss:$2 sm:$0xf]
  %s3157 = scalar_lea.vmem [#allocation4], 132
  %v3158 = vld [vmem:[%s3157] ss:$2 sm:$0xf]
  %v3159 = vmax.f32 %v3156, %v3158
  %s3160 = scalar_lea.vmem [#allocation4], 141
  %v3161 = vld [vmem:[%s3160] ss:$2 sm:$0xf]
  %s3162 = scalar_lea.vmem [#allocation4], 142
  %v3163 = vld [vmem:[%s3162] ss:$2 sm:$0xf]
  %v3164 = vmax.f32 %v3161, %v3163
  %v3165 = vmax.f32 %v3159, %v3164
  %v3167 = vrot.slane %v3165, 7
  %v3169 = vsel %vm1058, 0.0, %v3167
  %v3170 = vsel %vm3082, %v3169, 0.0
  %3171 = vst.msk [vmem:[#allocation5 + $0x30] sm:$0x3f] %vm3064, %v3170
  %s3172 = scalar_lea.vmem [#allocation4], 151
  %v3173 = vld [vmem:[%s3172] ss:$2 sm:$0xf]
  %s3174 = scalar_lea.vmem [#allocation4], 152
  %v3175 = vld [vmem:[%s3174] ss:$2 sm:$0xf]
  %v3176 = vmax.f32 %v3173, %v3175
  %s3177 = scalar_lea.vmem [#allocation4], 161
  %v3178 = vld [vmem:[%s3177] ss:$2 sm:$0xf]
  %s3179 = scalar_lea.vmem [#allocation4], 162
  %v3180 = vld [vmem:[%s3179] ss:$2 sm:$0xf]
  %v3181 = vmax.f32 %v3178, %v3180
  %v3182 = vmax.f32 %v3176, %v3181
  %v3184 = vrot.slane %v3182, 7
  %v3186 = vsel %vm1058, 0.0, %v3184
  %v3187 = vsel %vm3082, %v3186, 0.0
  %3188 = vst.msk [vmem:[#allocation5 + $0x36] sm:$0x3f] %vm3064, %v3187
  %s3189 = scalar_lea.vmem [#allocation4], 171
  %v3190 = vld [vmem:[%s3189] ss:$2 sm:$0xf]
  %s3191 = scalar_lea.vmem [#allocation4], 172
  %v3192 = vld [vmem:[%s3191] ss:$2 sm:$0xf]
  %v3193 = vmax.f32 %v3190, %v3192
  %s3194 = scalar_lea.vmem [#allocation4], 181
  %v3195 = vld [vmem:[%s3194] ss:$2 sm:$0xf]
  %s3196 = scalar_lea.vmem [#allocation4], 182
  %v3197 = vld [vmem:[%s3196] ss:$2 sm:$0xf]
  %v3198 = vmax.f32 %v3195, %v3197
  %v3199 = vmax.f32 %v3193, %v3198
  %v3201 = vrot.slane %v3199, 7
  %v3203 = vsel %vm1058, 0.0, %v3201
  %v3204 = vsel %vm3082, %v3203, 0.0
  %3205 = vst.msk [vmem:[#allocation5 + $0x3c] sm:$0x3f] %vm3064, %v3204
  %v3206 = vld [vmem:[%s6] sm:$0x1]
  %v3207 = vld [vmem:[#allocation5] sm:$0xff]
  %v3208 = vld [vmem:[#allocation5 + $0x8] sm:$0xff]
  %v3209 = vld [vmem:[#allocation5 + $0x10] sm:$0xff]
  %v3210 = vld [vmem:[#allocation5 + $0x18] sm:$0xff]
  %v3211 = vld [vmem:[#allocation5 + $0x20] sm:$0xff]
  %v3212 = vld [vmem:[#allocation5 + $0x28] sm:$0xff]
  %v3213 = vld [vmem:[#allocation5 + $0x30] sm:$0xff]
  %v3214 = vld [vmem:[#allocation5 + $0x38] sm:$0x3]
  %3215 = vst.msk [vmem:[#allocation8] sm:$0xff] %vm2457, %v3207
  %3216 = vst.msk [vmem:[#allocation8 + $0x28] sm:$0xff] %vm2457, %v3208
  %3217 = vst.msk [vmem:[#allocation8 + $0x50] sm:$0xff] %vm2457, %v3209
  %3218 = vst.msk [vmem:[#allocation8 + $0x78] sm:$0xff] %vm2457, %v3210
  %3219 = vst.msk [vmem:[#allocation8 + $0xa0] sm:$0xff] %vm2457, %v3211
  %3220 = vst.msk [vmem:[#allocation8 + $0xc8] sm:$0xff] %vm2457, %v3212
  %3221 = vst.msk [vmem:[#allocation8 + $0xf0] sm:$0xff] %vm2457, %v3213
  %3222 = vst.msk [vmem:[#allocation8 + $0x118] sm:$0x3] %vm3062, %v3214
  %v3223 = vld [vmem:[#allocation5 + $0x1] sm:$0xff]
  %v3224 = vld [vmem:[#allocation5 + $0x9] sm:$0xff]
  %v3225 = vld [vmem:[#allocation5 + $0x11] sm:$0xff]
  %v3226 = vld [vmem:[#allocation5 + $0x19] sm:$0xff]
  %v3227 = vld [vmem:[#allocation5 + $0x21] sm:$0xff]
  %v3228 = vld [vmem:[#allocation5 + $0x29] sm:$0xff]
  %v3229 = vld [vmem:[#allocation5 + $0x31] sm:$0xff]
  %v3230 = vld [vmem:[#allocation5 + $0x39] sm:$0x3]
  %3239 = vrot.lane.b32.xlu0 %v3223, 64
  %v3240 = vpop.permute.xlu0 %3239
  %3241 = vrot.lane.b32.xlu0 %v3224, 64
  %v3242 = vpop.permute.xlu0 %3241
  %3243 = vrot.lane.b32.xlu0 %v3225, 64
  %v3244 = vpop.permute.xlu0 %3243
  %3245 = vrot.lane.b32.xlu0 %v3226, 64
  %v3246 = vpop.permute.xlu0 %3245
  %3247 = vrot.lane.b32.xlu0 %v3227, 64
  %v3248 = vpop.permute.xlu0 %3247
  %3249 = vrot.lane.b32.xlu0 %v3228, 64
  %v3250 = vpop.permute.xlu0 %3249
  %3251 = vrot.lane.b32.xlu0 %v3229, 64
  %v3252 = vpop.permute.xlu0 %3251
  %3253 = vrot.lane.b32.xlu0 %v3230, 64
  %v3254 = vpop.permute.xlu0 %3253
  %vm3263 = vcmask 1048064
  %3264 = vst.msk [vmem:[#allocation8] sm:$0xff] %vm3263, %v3240
  %3265 = vst.msk [vmem:[#allocation8 + $0x28] sm:$0xff] %vm3263, %v3242
  %3266 = vst.msk [vmem:[#allocation8 + $0x50] sm:$0xff] %vm3263, %v3244
  %3267 = vst.msk [vmem:[#allocation8 + $0x78] sm:$0xff] %vm3263, %v3246
  %3268 = vst.msk [vmem:[#allocation8 + $0xa0] sm:$0xff] %vm3263, %v3248
  %3269 = vst.msk [vmem:[#allocation8 + $0xc8] sm:$0xff] %vm3263, %v3250
  %3270 = vst.msk [vmem:[#allocation8 + $0xf0] sm:$0xff] %vm3263, %v3252
  %vm3271 = vcmask 1041920
  %3272 = vst.msk [vmem:[#allocation8 + $0x118] sm:$0x3] %vm3271, %v3254
  %v3273 = vld [vmem:[#allocation5 + $0x2] sm:$0xff]
  %v3274 = vld [vmem:[#allocation5 + $0xa] sm:$0xff]
  %v3275 = vld [vmem:[#allocation5 + $0x12] sm:$0xff]
  %v3276 = vld [vmem:[#allocation5 + $0x1a] sm:$0xff]
  %v3277 = vld [vmem:[#allocation5 + $0x22] sm:$0xff]
  %v3278 = vld [vmem:[#allocation5 + $0x2a] sm:$0xff]
  %v3279 = vld [vmem:[#allocation5 + $0x32] sm:$0xff]
  %v3280 = vld [vmem:[#allocation5 + $0x3a] sm:$0x3]
  %3281 = vst.msk [vmem:[#allocation8 + $0x8] sm:$0xff] %vm2457, %v3273
  %3282 = vst.msk [vmem:[#allocation8 + $0x30] sm:$0xff] %vm2457, %v3274
  %3283 = vst.msk [vmem:[#allocation8 + $0x58] sm:$0xff] %vm2457, %v3275
  %3284 = vst.msk [vmem:[#allocation8 + $0x80] sm:$0xff] %vm2457, %v3276
  %3285 = vst.msk [vmem:[#allocation8 + $0xa8] sm:$0xff] %vm2457, %v3277
  %3286 = vst.msk [vmem:[#allocation8 + $0xd0] sm:$0xff] %vm2457, %v3278
  %3287 = vst.msk [vmem:[#allocation8 + $0xf8] sm:$0xff] %vm2457, %v3279
  %3288 = vst.msk [vmem:[#allocation8 + $0x120] sm:$0x3] %vm3062, %v3280
  %v3289 = vld [vmem:[#allocation5 + $0x6] sm:$0xff]
  %v3290 = vld [vmem:[#allocation5 + $0xe] sm:$0xff]
  %v3291 = vld [vmem:[#allocation5 + $0x16] sm:$0xff]
  %v3292 = vld [vmem:[#allocation5 + $0x1e] sm:$0xff]
  %v3293 = vld [vmem:[#allocation5 + $0x26] sm:$0xff]
  %v3294 = vld [vmem:[#allocation5 + $0x2e] sm:$0xff]
  %v3295 = vld [vmem:[#allocation5 + $0x36] sm:$0xff]
  %v3296 = vld [vmem:[#allocation5 + $0x3e] sm:$0x3]
  %3305 = vrot.lane.b32.xlu0 %v3289, 64
  %v3306 = vpop.permute.xlu0 %3305
  %3307 = vrot.lane.b32.xlu0 %v3290, 64
  %v3308 = vpop.permute.xlu0 %3307
  %3309 = vrot.lane.b32.xlu0 %v3291, 64
  %v3310 = vpop.permute.xlu0 %3309
  %3311 = vrot.lane.b32.xlu0 %v3292, 64
  %v3312 = vpop.permute.xlu0 %3311
  %3313 = vrot.lane.b32.xlu0 %v3293, 64
  %v3314 = vpop.permute.xlu0 %3313
  %3315 = vrot.lane.b32.xlu0 %v3294, 64
  %v3316 = vpop.permute.xlu0 %3315
  %3317 = vrot.lane.b32.xlu0 %v3295, 64
  %v3318 = vpop.permute.xlu0 %3317
  %3319 = vrot.lane.b32.xlu0 %v3296, 64
  %v3320 = vpop.permute.xlu0 %3319
  %3329 = vst.msk [vmem:[#allocation8 + $0x8] sm:$0xff] %vm3263, %v3306
  %3330 = vst.msk [vmem:[#allocation8 + $0x30] sm:$0xff] %vm3263, %v3308
  %3331 = vst.msk [vmem:[#allocation8 + $0x58] sm:$0xff] %vm3263, %v3310
  %3332 = vst.msk [vmem:[#allocation8 + $0x80] sm:$0xff] %vm3263, %v3312
  %3333 = vst.msk [vmem:[#allocation8 + $0xa8] sm:$0xff] %vm3263, %v3314
  %3334 = vst.msk [vmem:[#allocation8 + $0xd0] sm:$0xff] %vm3263, %v3316
  %3335 = vst.msk [vmem:[#allocation8 + $0xf8] sm:$0xff] %vm3263, %v3318
  %3336 = vst.msk [vmem:[#allocation8 + $0x120] sm:$0x3] %vm3271, %v3320
  %v3337 = vld [vmem:[#allocation5 + $0x7] sm:$0xff]
  %v3338 = vld [vmem:[#allocation5 + $0xf] sm:$0xff]
  %v3339 = vld [vmem:[#allocation5 + $0x17] sm:$0xff]
  %v3340 = vld [vmem:[#allocation5 + $0x1f] sm:$0xff]
  %v3341 = vld [vmem:[#allocation5 + $0x27] sm:$0xff]
  %v3342 = vld [vmem:[#allocation5 + $0x2f] sm:$0xff]
  %v3343 = vld [vmem:[#allocation5 + $0x37] sm:$0xff]
  %v3344 = vld [vmem:[#allocation5 + $0x3f] sm:$0x3]
  %3345 = vst.msk [vmem:[#allocation8 + $0x10] sm:$0xff] %vm2457, %v3337
  %3346 = vst.msk [vmem:[#allocation8 + $0x38] sm:$0xff] %vm2457, %v3338
  %3347 = vst.msk [vmem:[#allocation8 + $0x60] sm:$0xff] %vm2457, %v3339
  %3348 = vst.msk [vmem:[#allocation8 + $0x88] sm:$0xff] %vm2457, %v3340
  %3349 = vst.msk [vmem:[#allocation8 + $0xb0] sm:$0xff] %vm2457, %v3341
  %3350 = vst.msk [vmem:[#allocation8 + $0xd8] sm:$0xff] %vm2457, %v3342
  %3351 = vst.msk [vmem:[#allocation8 + $0x100] sm:$0xff] %vm2457, %v3343
  %3352 = vst.msk [vmem:[#allocation8 + $0x128] sm:$0x3] %vm3062, %v3344
  %v3353 = vld [vmem:[#allocation5 + $0x8] sm:$0xff]
  %v3354 = vld [vmem:[#allocation5 + $0x10] sm:$0xff]
  %v3355 = vld [vmem:[#allocation5 + $0x18] sm:$0xff]
  %v3356 = vld [vmem:[#allocation5 + $0x20] sm:$0xff]
  %v3357 = vld [vmem:[#allocation5 + $0x28] sm:$0xff]
  %v3358 = vld [vmem:[#allocation5 + $0x30] sm:$0xff]
  %v3359 = vld [vmem:[#allocation5 + $0x38] sm:$0xff]
  %v3360 = vld [vmem:[#allocation5 + $0x40] sm:$0x3]
  %3369 = vrot.lane.b32.xlu0 %v3353, 64
  %v3370 = vpop.permute.xlu0 %3369
  %3371 = vrot.lane.b32.xlu0 %v3354, 64
  %v3372 = vpop.permute.xlu0 %3371
  %3373 = vrot.lane.b32.xlu0 %v3355, 64
  %v3374 = vpop.permute.xlu0 %3373
  %3375 = vrot.lane.b32.xlu0 %v3356, 64
  %v3376 = vpop.permute.xlu0 %3375
  %3377 = vrot.lane.b32.xlu0 %v3357, 64
  %v3378 = vpop.permute.xlu0 %3377
  %3379 = vrot.lane.b32.xlu0 %v3358, 64
  %v3380 = vpop.permute.xlu0 %3379
  %3381 = vrot.lane.b32.xlu0 %v3359, 64
  %v3382 = vpop.permute.xlu0 %3381
  %3383 = vrot.lane.b32.xlu0 %v3360, 64
  %v3384 = vpop.permute.xlu0 %3383
  %3393 = vst.msk [vmem:[#allocation8 + $0x10] sm:$0xff] %vm3263, %v3370
  %3394 = vst.msk [vmem:[#allocation8 + $0x38] sm:$0xff] %vm3263, %v3372
  %3395 = vst.msk [vmem:[#allocation8 + $0x60] sm:$0xff] %vm3263, %v3374
  %3396 = vst.msk [vmem:[#allocation8 + $0x88] sm:$0xff] %vm3263, %v3376
  %3397 = vst.msk [vmem:[#allocation8 + $0xb0] sm:$0xff] %vm3263, %v3378
  %3398 = vst.msk [vmem:[#allocation8 + $0xd8] sm:$0xff] %vm3263, %v3380
  %3399 = vst.msk [vmem:[#allocation8 + $0x100] sm:$0xff] %vm3263, %v3382
  %3400 = vst.msk [vmem:[#allocation8 + $0x128] sm:$0x3] %vm3271, %v3384
  %v3401 = vld [vmem:[#allocation5 + $0xc] sm:$0xff]
  %v3402 = vld [vmem:[#allocation5 + $0x14] sm:$0xff]
  %v3403 = vld [vmem:[#allocation5 + $0x1c] sm:$0xff]
  %v3404 = vld [vmem:[#allocation5 + $0x24] sm:$0xff]
  %v3405 = vld [vmem:[#allocation5 + $0x2c] sm:$0xff]
  %v3406 = vld [vmem:[#allocation5 + $0x34] sm:$0xff]
  %v3407 = vld [vmem:[#allocation5 + $0x3c] sm:$0xff]
  %v3408 = vld [vmem:[#allocation5 + $0x44] sm:$0x3]
  %3409 = vst.msk [vmem:[#allocation8 + $0x18] sm:$0xff] %vm2457, %v3401
  %3410 = vst.msk [vmem:[#allocation8 + $0x40] sm:$0xff] %vm2457, %v3402
  %3411 = vst.msk [vmem:[#allocation8 + $0x68] sm:$0xff] %vm2457, %v3403
  %3412 = vst.msk [vmem:[#allocation8 + $0x90] sm:$0xff] %vm2457, %v3404
  %3413 = vst.msk [vmem:[#allocation8 + $0xb8] sm:$0xff] %vm2457, %v3405
  %3414 = vst.msk [vmem:[#allocation8 + $0xe0] sm:$0xff] %vm2457, %v3406
  %3415 = vst.msk [vmem:[#allocation8 + $0x108] sm:$0xff] %vm2457, %v3407
  %3416 = vst.msk [vmem:[#allocation8 + $0x130] sm:$0x3] %vm3062, %v3408
  %v3417 = vld [vmem:[#allocation5 + $0xd] sm:$0xff]
  %v3418 = vld [vmem:[#allocation5 + $0x15] sm:$0xff]
  %v3419 = vld [vmem:[#allocation5 + $0x1d] sm:$0xff]
  %v3420 = vld [vmem:[#allocation5 + $0x25] sm:$0xff]
  %v3421 = vld [vmem:[#allocation5 + $0x2d] sm:$0xff]
  %v3422 = vld [vmem:[#allocation5 + $0x35] sm:$0xff]
  %v3423 = vld [vmem:[#allocation5 + $0x3d] sm:$0xff]
  %v3424 = vld [vmem:[#allocation5 + $0x45] sm:$0x3]
  %3433 = vrot.lane.b32.xlu0 %v3417, 64
  %v3434 = vpop.permute.xlu0 %3433
  %3435 = vrot.lane.b32.xlu0 %v3418, 64
  %v3436 = vpop.permute.xlu0 %3435
  %3437 = vrot.lane.b32.xlu0 %v3419, 64
  %v3438 = vpop.permute.xlu0 %3437
  %3439 = vrot.lane.b32.xlu0 %v3420, 64
  %v3440 = vpop.permute.xlu0 %3439
  %3441 = vrot.lane.b32.xlu0 %v3421, 64
  %v3442 = vpop.permute.xlu0 %3441
  %3443 = vrot.lane.b32.xlu0 %v3422, 64
  %v3444 = vpop.permute.xlu0 %3443
  %3445 = vrot.lane.b32.xlu0 %v3423, 64
  %v3446 = vpop.permute.xlu0 %3445
  %3447 = vrot.lane.b32.xlu0 %v3424, 64
  %v3448 = vpop.permute.xlu0 %3447
  %3457 = vst.msk [vmem:[#allocation8 + $0x18] sm:$0xff] %vm3263, %v3434
  %3458 = vst.msk [vmem:[#allocation8 + $0x40] sm:$0xff] %vm3263, %v3436
  %3459 = vst.msk [vmem:[#allocation8 + $0x68] sm:$0xff] %vm3263, %v3438
  %3460 = vst.msk [vmem:[#allocation8 + $0x90] sm:$0xff] %vm3263, %v3440
  %3461 = vst.msk [vmem:[#allocation8 + $0xb8] sm:$0xff] %vm3263, %v3442
  %3462 = vst.msk [vmem:[#allocation8 + $0xe0] sm:$0xff] %vm3263, %v3444
  %3463 = vst.msk [vmem:[#allocation8 + $0x108] sm:$0xff] %vm3263, %v3446
  %3464 = vst.msk [vmem:[#allocation8 + $0x130] sm:$0x3] %vm3271, %v3448
  %v3465 = vld [vmem:[#allocation5 + $0xe] sm:$0xff]
  %v3466 = vld [vmem:[#allocation5 + $0x16] sm:$0xff]
  %v3467 = vld [vmem:[#allocation5 + $0x1e] sm:$0xff]
  %v3468 = vld [vmem:[#allocation5 + $0x26] sm:$0xff]
  %v3469 = vld [vmem:[#allocation5 + $0x2e] sm:$0xff]
  %v3470 = vld [vmem:[#allocation5 + $0x36] sm:$0xff]
  %v3471 = vld [vmem:[#allocation5 + $0x3e] sm:$0xff]
  %v3472 = vld [vmem:[#allocation5 + $0x46] sm:$0x3]
  %3473 = vst.msk [vmem:[#allocation8 + $0x20] sm:$0xff] %vm2457, %v3465
  %3474 = vst.msk [vmem:[#allocation8 + $0x48] sm:$0xff] %vm2457, %v3466
  %3475 = vst.msk [vmem:[#allocation8 + $0x70] sm:$0xff] %vm2457, %v3467
  %3476 = vst.msk [vmem:[#allocation8 + $0x98] sm:$0xff] %vm2457, %v3468
  %3477 = vst.msk [vmem:[#allocation8 + $0xc0] sm:$0xff] %vm2457, %v3469
  %3478 = vst.msk [vmem:[#allocation8 + $0xe8] sm:$0xff] %vm2457, %v3470
  %3479 = vst.msk [vmem:[#allocation8 + $0x110] sm:$0xff] %vm2457, %v3471
  %3480 = vst.msk [vmem:[#allocation8 + $0x138] sm:$0x3] %vm3062, %v3472
  %v3481 = vld [vmem:[#allocation8] sm:$0xff]
  %v3482 = vld [vmem:[#allocation8 + $0x8] sm:$0xff]
  %v3483 = vld [vmem:[#allocation8 + $0x10] sm:$0xff]
  %v3484 = vld [vmem:[#allocation8 + $0x18] sm:$0xff]
  %v3485 = vld [vmem:[#allocation8 + $0x20] sm:$0xff]
  %v3486 = vld [vmem:[#allocation8 + $0x28] sm:$0xff]
  %v3487 = vld [vmem:[#allocation8 + $0x30] sm:$0xff]
  %v3488 = vld [vmem:[#allocation8 + $0x38] sm:$0xff]
  %v3489 = vld [vmem:[#allocation8 + $0x40] sm:$0xff]
  %v3490 = vld [vmem:[#allocation8 + $0x48] sm:$0xff]
  %v3491 = vld [vmem:[#allocation8 + $0x50] sm:$0xff]
  %v3492 = vld [vmem:[#allocation8 + $0x58] sm:$0xff]
  %v3493 = vld [vmem:[#allocation8 + $0x60] sm:$0xff]
  %v3494 = vld [vmem:[#allocation8 + $0x68] sm:$0xff]
  %v3495 = vld [vmem:[#allocation8 + $0x70] sm:$0xff]
  %v3496 = vld [vmem:[#allocation8 + $0x78] sm:$0xff]
  %v3497 = vld [vmem:[#allocation8 + $0x80] sm:$0xff]
  %v3498 = vld [vmem:[#allocation8 + $0x88] sm:$0xff]
  %v3499 = vld [vmem:[#allocation8 + $0x90] sm:$0xff]
  %v3500 = vld [vmem:[#allocation8 + $0x98] sm:$0xff]
  %v3501 = vld [vmem:[#allocation8 + $0xa0] sm:$0xff]
  %v3502 = vld [vmem:[#allocation8 + $0xa8] sm:$0xff]
  %v3503 = vld [vmem:[#allocation8 + $0xb0] sm:$0xff]
  %v3504 = vld [vmem:[#allocation8 + $0xb8] sm:$0xff]
  %v3505 = vld [vmem:[#allocation8 + $0xc0] sm:$0xff]
  %v3506 = vld [vmem:[#allocation8 + $0xc8] sm:$0xff]
  %v3507 = vld [vmem:[#allocation8 + $0xd0] sm:$0xff]
  %v3508 = vld [vmem:[#allocation8 + $0xd8] sm:$0xff]
  %v3509 = vld [vmem:[#allocation8 + $0xe0] sm:$0xff]
  %v3510 = vld [vmem:[#allocation8 + $0xe8] sm:$0xff]
  %v3511 = vld [vmem:[#allocation8 + $0xf0] sm:$0xff]
  %v3512 = vld [vmem:[#allocation8 + $0xf8] sm:$0xff]
  %v3513 = vld [vmem:[#allocation8 + $0x100] sm:$0xff]
  %v3514 = vld [vmem:[#allocation8 + $0x108] sm:$0xff]
  %v3515 = vld [vmem:[#allocation8 + $0x110] sm:$0xff]
  %v3516 = vld [vmem:[#allocation8 + $0x118] sm:$0x3]
  %v3517 = vld [vmem:[#allocation8 + $0x120] sm:$0x3]
  %v3518 = vld [vmem:[#allocation8 + $0x128] sm:$0x3]
  %v3519 = vld [vmem:[#allocation8 + $0x130] sm:$0x3]
  %v3520 = vld [vmem:[#allocation8 + $0x138] sm:$0x3]
  %v3521 = vld [vmem:[%s5] sm:$0xff]
  %v3522 = vld [vmem:[%s5 + $0x8] sm:$0xff]
  %v3523 = vld [vmem:[%s5 + $0x10] sm:$0xff]
  %v3524 = vld [vmem:[%s5 + $0x18] sm:$0xff]
  %v3525 = vld [vmem:[%s5 + $0x20] sm:$0xff]
  %v3526 = vld [vmem:[%s5 + $0x28] sm:$0xff]
  %v3527 = vld [vmem:[%s5 + $0x30] sm:$0xff]
  %v3528 = vld [vmem:[%s5 + $0x38] sm:$0xff]
  %v3529 = vld [vmem:[%s5 + $0x40] sm:$0xff]
  %v3530 = vld [vmem:[%s5 + $0x48] sm:$0xff]
  %v3531 = vld [vmem:[%s5 + $0x50] sm:$0xff]
  %v3532 = vld [vmem:[%s5 + $0x58] sm:$0xff]
  %v3533 = vld [vmem:[%s5 + $0x60] sm:$0xff]
  %v3534 = vld [vmem:[%s5 + $0x68] sm:$0xff]
  %v3535 = vld [vmem:[%s5 + $0x70] sm:$0xff]
  %v3536 = vld [vmem:[%s5 + $0x78] sm:$0xff]
  %v3537 = vld [vmem:[%s5 + $0x80] sm:$0xff]
  %v3538 = vld [vmem:[%s5 + $0x88] sm:$0xff]
  %v3539 = vld [vmem:[%s5 + $0x90] sm:$0xff]
  %v3540 = vld [vmem:[%s5 + $0x98] sm:$0xff]
  %v3541 = vld [vmem:[%s5 + $0xa0] sm:$0xff]
  %v3542 = vld [vmem:[%s5 + $0xa8] sm:$0xff]
  %v3543 = vld [vmem:[%s5 + $0xb0] sm:$0xff]
  %v3544 = vld [vmem:[%s5 + $0xb8] sm:$0xff]
  %v3545 = vld [vmem:[%s5 + $0xc0] sm:$0xff]
  %v3546 = vld [vmem:[%s5 + $0xc8] sm:$0xff]
  %v3547 = vld [vmem:[%s5 + $0xd0] sm:$0xff]
  %v3548 = vld [vmem:[%s5 + $0xd8] sm:$0xff]
  %v3549 = vld [vmem:[%s5 + $0xe0] sm:$0xff]
  %v3550 = vld [vmem:[%s5 + $0xe8] sm:$0xff]
  %v3551 = vld [vmem:[%s5 + $0xf0] sm:$0xff]
  %v3552 = vld [vmem:[%s5 + $0xf8] sm:$0xff]
  %v3553 = vld [vmem:[%s5 + $0x100] sm:$0xff]
  %v3554 = vld [vmem:[%s5 + $0x108] sm:$0xff]
  %v3555 = vld [vmem:[%s5 + $0x110] sm:$0xff]
  %v3556 = vld [vmem:[%s5 + $0x118] sm:$0xff]
  %v3557 = vld [vmem:[%s5 + $0x120] sm:$0xff]
  %v3558 = vld [vmem:[%s5 + $0x128] sm:$0xff]
  %v3559 = vld [vmem:[%s5 + $0x130] sm:$0xff]
  %v3560 = vld [vmem:[%s5 + $0x138] sm:$0xff]
  %v3561 = vld [vmem:[%s5 + $0x140] sm:$0xff]
  %v3562 = vld [vmem:[%s5 + $0x148] sm:$0xff]
  %v3563 = vld [vmem:[%s5 + $0x150] sm:$0xff]
  %v3564 = vld [vmem:[%s5 + $0x158] sm:$0xff]
  %v3565 = vld [vmem:[%s5 + $0x160] sm:$0xff]
  %v3566 = vld [vmem:[%s5 + $0x168] sm:$0xff]
  %v3567 = vld [vmem:[%s5 + $0x170] sm:$0xff]
  %v3568 = vld [vmem:[%s5 + $0x178] sm:$0xff]
  %v3569 = vld [vmem:[%s5 + $0x180] sm:$0xff]
  %v3570 = vld [vmem:[%s5 + $0x188] sm:$0xff]
  %v3571 = vld [vmem:[%s5 + $0x190] sm:$0xff]
  %v3572 = vld [vmem:[%s5 + $0x198] sm:$0xff]
  %v3573 = vld [vmem:[%s5 + $0x1a0] sm:$0xff]
  %v3574 = vld [vmem:[%s5 + $0x1a8] sm:$0xff]
  %v3575 = vld [vmem:[%s5 + $0x1b0] sm:$0xff]
  %v3576 = vld [vmem:[%s5 + $0x1b8] sm:$0xff]
  %v3577 = vld [vmem:[%s5 + $0x1c0] sm:$0xff]
  %v3578 = vld [vmem:[%s5 + $0x1c8] sm:$0xff]
  %v3579 = vld [vmem:[%s5 + $0x1d0] sm:$0xff]
  %v3580 = vld [vmem:[%s5 + $0x1d8] sm:$0xff]
  %v3581 = vld [vmem:[%s5 + $0x1e0] sm:$0xff]
  %v3582 = vld [vmem:[%s5 + $0x1e8] sm:$0xff]
  %v3583 = vld [vmem:[%s5 + $0x1f0] sm:$0xff]
  %v3584 = vld [vmem:[%s5 + $0x1f8] sm:$0xff]
  %v3585 = vld [vmem:[%s5 + $0x200] sm:$0xff]
  %v3586 = vld [vmem:[%s5 + $0x208] sm:$0xff]
  %v3587 = vld [vmem:[%s5 + $0x210] sm:$0xff]
  %v3588 = vld [vmem:[%s5 + $0x218] sm:$0xff]
  %v3589 = vld [vmem:[%s5 + $0x220] sm:$0xff]
  %v3590 = vld [vmem:[%s5 + $0x228] sm:$0xff]
  %v3591 = vld [vmem:[%s5 + $0x230] sm:$0xff]
  %v3592 = vld [vmem:[%s5 + $0x238] sm:$0xff]
  %v3594 = vlaneseq
  %v3595 = vshrl.u32 %v3594, 7
  %v3596 = vsub.s32 0, %v3595
  %v3597 = vrot.slane %v3206, %v3596
  %v3600 = vsel %vm2457, %v3485, 0
  %v3603 = vsel %vm2457, %v3490, 0
  %v3606 = vsel %vm2457, %v3495, 0
  %v3609 = vsel %vm2457, %v3500, 0
  %v3612 = vsel %vm2457, %v3505, 0
  %v3615 = vsel %vm2457, %v3510, 0
  %v3618 = vsel %vm2457, %v3515, 0
  %v3621 = vsel %vm2457, %v3520, 0
  %3623 = vmatprep.subr.mxu0 0.0
  %3624 = vmatpush1.msra.mxu0 %v3521
  %3625 = vmatprep.subr.mxu0 0.0
  %3626 = vmatpush1.msra.mxu0 %v3522
  %3627 = vmatprep.subr.mxu0 0.0
  %3628 = vmatpush1.msra.mxu0 %v3523
  %3629 = vmatprep.subr.mxu0 0.0
  %3630 = vmatpush1.msra.mxu0 %v3524
  %3631 = vmatprep.subr.mxu0 0.0
  %3632 = vmatpush1.msra.mxu0 %v3525
  %3633 = vmatprep.subr.mxu0 0.0
  %3634 = vmatpush1.msra.mxu0 %v3526
  %3635 = vmatprep.subr.mxu0 0.0
  %3636 = vmatpush1.msra.mxu0 %v3527
  %3637 = vmatprep.subr.mxu0 0.0
  %3638 = vmatpush1.msra.mxu0 %v3528
  %3639 = vmatprep.subr.mxu0 0.0
  %3640 = vmatpush1.msra.mxu0 %v3529
  %3641 = vmatprep.subr.mxu0 0.0
  %3642 = vmatpush1.msra.mxu0 %v3530
  %3643 = vmatprep.subr.mxu0 0.0
  %3644 = vmatpush1.msra.mxu0 %v3531
  %3645 = vmatprep.subr.mxu0 0.0
  %3646 = vmatpush1.msra.mxu0 %v3532
  %3647 = vmatprep.subr.mxu0 0.0
  %3648 = vmatpush1.msra.mxu0 %v3533
  %3649 = vmatprep.subr.mxu0 0.0
  %3650 = vmatpush1.msra.mxu0 %v3534
  %3651 = vmatprep.subr.mxu0 0.0
  %3652 = vmatpush1.msra.mxu0 %v3535
  %3653 = vmatprep.subr.mxu0 0.0
  %3654 = vmatpush1.msra.mxu0 %v3536
  %3655 = vmatprep.subr.mxu0 0.0
  %3656 = vmatpush1.msra.mxu0 %v3537
  %3657 = vmatprep.subr.mxu0 0.0
  %3658 = vmatpush1.msra.mxu0 %v3538
  %3659 = vmatprep.subr.mxu0 0.0
  %3660 = vmatpush1.msra.mxu0 %v3539
  %3661 = vmatprep.subr.mxu0 0.0
  %3662 = vmatpush1.msra.mxu0 %v3540
  %3663 = vmatprep.subr.mxu0 0.0
  %3664 = vmatpush1.msra.mxu0 %v3541
  %3665 = vmatprep.subr.mxu0 0.0
  %3666 = vmatpush1.msra.mxu0 %v3542
  %3667 = vmatprep.subr.mxu0 0.0
  %3668 = vmatpush1.msra.mxu0 %v3543
  %3669 = vmatprep.subr.mxu0 0.0
  %3670 = vmatpush1.msra.mxu0 %v3544
  %3671 = vmatprep.subr.mxu0 0.0
  %3672 = vmatpush1.msra.mxu0 %v3545
  %3673 = vmatprep.subr.mxu0 0.0
  %3674 = vmatpush1.msra.mxu0 %v3546
  %3675 = vmatprep.subr.mxu0 0.0
  %3676 = vmatpush1.msra.mxu0 %v3547
  %3677 = vmatprep.subr.mxu0 0.0
  %3678 = vmatpush1.msra.mxu0 %v3548
  %3679 = vmatprep.subr.mxu0 0.0
  %3680 = vmatpush1.msra.mxu0 %v3549
  %3681 = vmatprep.subr.mxu0 0.0
  %3682 = vmatpush1.msra.mxu0 %v3550
  %3683 = vmatprep.subr.mxu0 0.0
  %3684 = vmatpush1.msra.mxu0 %v3551
  %3685 = vmatprep.subr.mxu0 0.0
  %3686 = vmatpush1.msra.mxu0 %v3552
  %3687 = vmatprep.mubr.f32.mxu0 %v3482
  %3688 = vmatmul.mubr.f32.gmra.mrb[0].mxu0 %v3481
  %v3689 = vpop.f32.mrb[0].mxu0
  %v3690 = vadd.f32 %v3597, %v3689
  %v3691 = vpop.f32.mrb[0].mxu0
  %3692 = vmatprep.mubr.f32.mxu0 %v3487
  %3693 = vmatmul.mubr.f32.gmra.mrb[0].mxu0 %v3486
  %v3694 = vpop.f32.mrb[0].mxu0
  %v3695 = vadd.f32 %v3597, %v3694
  %v3696 = vpop.f32.mrb[0].mxu0
  %3697 = vmatprep.mubr.f32.mxu0 %v3492
  %3698 = vmatmul.mubr.f32.gmra.mrb[0].mxu0 %v3491
  %v3699 = vpop.f32.mrb[0].mxu0
  %v3700 = vadd.f32 %v3597, %v3699
  %v3701 = vpop.f32.mrb[0].mxu0
  %3702 = vmatprep.mubr.f32.mxu0 %v3497
  %3703 = vmatmul.mubr.f32.gmra.mrb[0].mxu0 %v3496
  %v3704 = vpop.f32.mrb[0].mxu0
  %v3705 = vadd.f32 %v3597, %v3704
  %v3706 = vpop.f32.mrb[0].mxu0
  %3707 = vmatprep.mubr.f32.mxu0 %v3502
  %3708 = vmatmul.mubr.f32.gmra.mrb[0].mxu0 %v3501
  %v3709 = vpop.f32.mrb[0].mxu0
  %v3710 = vadd.f32 %v3597, %v3709
  %v3711 = vpop.f32.mrb[0].mxu0
  %3712 = vmatprep.mubr.f32.mxu0 %v3507
  %3713 = vmatmul.mubr.f32.gmra.mrb[0].mxu0 %v3506
  %v3714 = vpop.f32.mrb[0].mxu0
  %v3715 = vadd.f32 %v3597, %v3714
  %v3716 = vpop.f32.mrb[0].mxu0
  %3717 = vmatprep.mubr.f32.mxu0 %v3512
  %3718 = vmatmul.mubr.f32.gmra.mrb[0].mxu0 %v3511
  %v3719 = vpop.f32.mrb[0].mxu0
  %v3720 = vadd.f32 %v3597, %v3719
  %v3721 = vpop.f32.mrb[0].mxu0
  %3722 = vmatprep.mubr.f32.mxu0 %v3517
  %3723 = vmatmul.mubr.f32.gmra.mrb[0].mxu0 %v3516
  %v3724 = vpop.f32.mrb[0].mxu0
  %v3725 = vadd.f32 %v3597, %v3724
  %v3726 = vpop.f32.mrb[0].mxu0
  %3727 = vdwg.mxu0
  %3728 = vmatprep.subr.mxu0 0.0
  %3729 = vmatpush1.msra.mxu0 %v3553
  %3730 = vmatprep.subr.mxu0 0.0
  %3731 = vmatpush1.msra.mxu0 %v3554
  %3732 = vmatprep.subr.mxu0 0.0
  %3733 = vmatpush1.msra.mxu0 %v3555
  %3734 = vmatprep.subr.mxu0 0.0
  %3735 = vmatpush1.msra.mxu0 %v3556
  %3736 = vmatprep.subr.mxu0 0.0
  %3737 = vmatpush1.msra.mxu0 %v3557
  %3738 = vmatprep.subr.mxu0 0.0
  %3739 = vmatpush1.msra.mxu0 %v3558
  %3740 = vmatprep.subr.mxu0 0.0
  %3741 = vmatpush1.msra.mxu0 %v3559
  %3742 = vmatprep.subr.mxu0 0.0
  %3743 = vmatpush1.msra.mxu0 %v3560
  %3744 = vmatprep.subr.mxu0 0.0
  %3745 = vmatpush1.msra.mxu0 %v3561
  %3746 = vmatprep.subr.mxu0 0.0
  %3747 = vmatpush1.msra.mxu0 %v3562
  %3748 = vmatprep.subr.mxu0 0.0
  %3749 = vmatpush1.msra.mxu0 %v3563
  %3750 = vmatprep.subr.mxu0 0.0
  %3751 = vmatpush1.msra.mxu0 %v3564
  %3752 = vmatprep.subr.mxu0 0.0
  %3753 = vmatpush1.msra.mxu0 %v3565
  %3754 = vmatprep.subr.mxu0 0.0
  %3755 = vmatpush1.msra.mxu0 %v3566
  %3756 = vmatprep.subr.mxu0 0.0
  %3757 = vmatpush1.msra.mxu0 %v3567
  %3758 = vmatprep.subr.mxu0 0.0
  %3759 = vmatpush1.msra.mxu0 %v3568
  %3760 = vmatprep.subr.mxu0 0.0
  %3761 = vmatpush1.msra.mxu0 %v3569
  %3762 = vmatprep.subr.mxu0 0.0
  %3763 = vmatpush1.msra.mxu0 %v3570
  %3764 = vmatprep.subr.mxu0 0.0
  %3765 = vmatpush1.msra.mxu0 %v3571
  %3766 = vmatprep.subr.mxu0 0.0
  %3767 = vmatpush1.msra.mxu0 %v3572
  %3768 = vmatprep.subr.mxu0 0.0
  %3769 = vmatpush1.msra.mxu0 %v3573
  %3770 = vmatprep.subr.mxu0 0.0
  %3771 = vmatpush1.msra.mxu0 %v3574
  %3772 = vmatprep.subr.mxu0 0.0
  %3773 = vmatpush1.msra.mxu0 %v3575
  %3774 = vmatprep.subr.mxu0 0.0
  %3775 = vmatpush1.msra.mxu0 %v3576
  %3776 = vmatprep.subr.mxu0 0.0
  %3777 = vmatpush1.msra.mxu0 %v3577
  %3778 = vmatprep.subr.mxu0 0.0
  %3779 = vmatpush1.msra.mxu0 %v3578
  %3780 = vmatprep.subr.mxu0 0.0
  %3781 = vmatpush1.msra.mxu0 %v3579
  %3782 = vmatprep.subr.mxu0 0.0
  %3783 = vmatpush1.msra.mxu0 %v3580
  %3784 = vmatprep.subr.mxu0 0.0
  %3785 = vmatpush1.msra.mxu0 %v3581
  %3786 = vmatprep.subr.mxu0 0.0
  %3787 = vmatpush1.msra.mxu0 %v3582
  %3788 = vmatprep.subr.mxu0 0.0
  %3789 = vmatpush1.msra.mxu0 %v3583
  %3790 = vmatprep.subr.mxu0 0.0
  %3791 = vmatpush1.msra.mxu0 %v3584
  %3792 = vmatprep.mubr.f32.mxu0 %v3484
  %3793 = vmatmul.mubr.f32.gmra.mrb[0].mxu0 %v3483
  %v3794 = vpop.f32.mrb[0].mxu0
  %v3795 = vadd.f32 %v3690, %v3794
  %v3796 = vpop.f32.mrb[0].mxu0
  %3797 = vmatprep.mubr.f32.mxu0 %v3489
  %3798 = vmatmul.mubr.f32.gmra.mrb[0].mxu0 %v3488
  %v3799 = vpop.f32.mrb[0].mxu0
  %v3800 = vadd.f32 %v3695, %v3799
  %v3801 = vpop.f32.mrb[0].mxu0
  %3802 = vmatprep.mubr.f32.mxu0 %v3494
  %3803 = vmatmul.mubr.f32.gmra.mrb[0].mxu0 %v3493
  %v3804 = vpop.f32.mrb[0].mxu0
  %v3805 = vadd.f32 %v3700, %v3804
  %v3806 = vpop.f32.mrb[0].mxu0
  %3807 = vmatprep.mubr.f32.mxu0 %v3499
  %3808 = vmatmul.mubr.f32.gmra.mrb[0].mxu0 %v3498
  %v3809 = vpop.f32.mrb[0].mxu0
  %v3810 = vadd.f32 %v3705, %v3809
  %v3811 = vpop.f32.mrb[0].mxu0
  %3812 = vmatprep.mubr.f32.mxu0 %v3504
  %3813 = vmatmul.mubr.f32.gmra.mrb[0].mxu0 %v3503
  %v3814 = vpop.f32.mrb[0].mxu0
  %v3815 = vadd.f32 %v3710, %v3814
  %v3816 = vpop.f32.mrb[0].mxu0
  %3817 = vmatprep.mubr.f32.mxu0 %v3509
  %3818 = vmatmul.mubr.f32.gmra.mrb[0].mxu0 %v3508
  %v3819 = vpop.f32.mrb[0].mxu0
  %v3820 = vadd.f32 %v3715, %v3819
  %v3821 = vpop.f32.mrb[0].mxu0
  %3822 = vmatprep.mubr.f32.mxu0 %v3514
  %3823 = vmatmul.mubr.f32.gmra.mrb[0].mxu0 %v3513
  %v3824 = vpop.f32.mrb[0].mxu0
  %v3825 = vadd.f32 %v3720, %v3824
  %v3826 = vpop.f32.mrb[0].mxu0
  %3827 = vmatprep.mubr.f32.mxu0 %v3519
  %3828 = vmatmul.mubr.f32.gmra.mrb[0].mxu0 %v3518
  %v3829 = vpop.f32.mrb[0].mxu0
  %v3830 = vadd.f32 %v3725, %v3829
  %v3831 = vpop.f32.mrb[0].mxu0
  %3832 = vdwg.mxu0
  %3833 = vmatprep.subr.mxu0 0.0
  %3834 = vmatpush1.msra.mxu0 %v3585
  %3835 = vmatprep.subr.mxu0 0.0
  %3836 = vmatpush1.msra.mxu0 %v3586
  %3837 = vmatprep.subr.mxu0 0.0
  %3838 = vmatpush1.msra.mxu0 %v3587
  %3839 = vmatprep.subr.mxu0 0.0
  %3840 = vmatpush1.msra.mxu0 %v3588
  %3841 = vmatprep.subr.mxu0 0.0
  %3842 = vmatpush1.msra.mxu0 %v3589
  %3843 = vmatprep.subr.mxu0 0.0
  %3844 = vmatpush1.msra.mxu0 %v3590
  %3845 = vmatprep.subr.mxu0 0.0
  %3846 = vmatpush1.msra.mxu0 %v3591
  %3847 = vmatprep.subr.mxu0 0.0
  %3848 = vmatpush1.msra.mxu0 %v3592
  %3849 = vmatprep.subr.mxu0 0.0
  %3850 = vmatpush1.msra.mxu0 0.0
  %3851 = vmatprep.subr.mxu0 0.0
  %3852 = vmatpush1.msra.mxu0 0.0
  %3853 = vmatprep.subr.mxu0 0.0
  %3854 = vmatpush1.msra.mxu0 0.0
  %3855 = vmatprep.subr.mxu0 0.0
  %3856 = vmatpush1.msra.mxu0 0.0
  %3857 = vmatprep.subr.mxu0 0.0
  %3858 = vmatpush1.msra.mxu0 0.0
  %3859 = vmatprep.subr.mxu0 0.0
  %3860 = vmatpush1.msra.mxu0 0.0
  %3861 = vmatprep.subr.mxu0 0.0
  %3862 = vmatpush1.msra.mxu0 0.0
  %3863 = vmatprep.subr.mxu0 0.0
  %3864 = vmatpush1.msra.mxu0 0.0
  %3865 = vmatprep.subr.mxu0 0.0
  %3866 = vmatpush1.msra.mxu0 0.0
  %3867 = vmatprep.subr.mxu0 0.0
  %3868 = vmatpush1.msra.mxu0 0.0
  %3869 = vmatprep.subr.mxu0 0.0
  %3870 = vmatpush1.msra.mxu0 0.0
  %3871 = vmatprep.subr.mxu0 0.0
  %3872 = vmatpush1.msra.mxu0 0.0
  %3873 = vmatprep.subr.mxu0 0.0
  %3874 = vmatpush1.msra.mxu0 0.0
  %3875 = vmatprep.subr.mxu0 0.0
  %3876 = vmatpush1.msra.mxu0 0.0
  %3877 = vmatprep.subr.mxu0 0.0
  %3878 = vmatpush1.msra.mxu0 0.0
  %3879 = vmatprep.subr.mxu0 0.0
  %3880 = vmatpush1.msra.mxu0 0.0
  %3881 = vmatprep.subr.mxu0 0.0
  %3882 = vmatpush1.msra.mxu0 0.0
  %3883 = vmatprep.subr.mxu0 0.0
  %3884 = vmatpush1.msra.mxu0 0.0
  %3885 = vmatprep.subr.mxu0 0.0
  %3886 = vmatpush1.msra.mxu0 0.0
  %3887 = vmatprep.subr.mxu0 0.0
  %3888 = vmatpush1.msra.mxu0 0.0
  %3889 = vmatprep.subr.mxu0 0.0
  %3890 = vmatpush1.msra.mxu0 0.0
  %3891 = vmatprep.subr.mxu0 0.0
  %3892 = vmatpush1.msra.mxu0 0.0
  %3893 = vmatprep.subr.mxu0 0.0
  %3894 = vmatpush1.msra.mxu0 0.0
  %3895 = vmatprep.subr.mxu0 0.0
  %3896 = vmatpush1.msra.mxu0 0.0
  %3897 = vmatprep.mubr.f32.mxu0 0.0
  %3898 = vmatmul.mubr.f32.gmra.mrb[0].mxu0 %v3600
  %v3899 = vpop.f32.mrb[0].mxu0
  %v3900 = vadd.f32 %v3795, %v3899
  %v3901 = vpop.f32.mrb[0].mxu0
  %3902 = vmatprep.mubr.f32.mxu0 0.0
  %3903 = vmatmul.mubr.f32.gmra.mrb[0].mxu0 %v3603
  %v3904 = vpop.f32.mrb[0].mxu0
  %v3905 = vadd.f32 %v3800, %v3904
  %v3906 = vpop.f32.mrb[0].mxu0
  %3907 = vmatprep.mubr.f32.mxu0 0.0
  %3908 = vmatmul.mubr.f32.gmra.mrb[0].mxu0 %v3606
  %v3909 = vpop.f32.mrb[0].mxu0
  %v3910 = vadd.f32 %v3805, %v3909
  %v3911 = vpop.f32.mrb[0].mxu0
  %3912 = vmatprep.mubr.f32.mxu0 0.0
  %3913 = vmatmul.mubr.f32.gmra.mrb[0].mxu0 %v3609
  %v3914 = vpop.f32.mrb[0].mxu0
  %v3915 = vadd.f32 %v3810, %v3914
  %v3916 = vpop.f32.mrb[0].mxu0
  %3917 = vmatprep.mubr.f32.mxu0 0.0
  %3918 = vmatmul.mubr.f32.gmra.mrb[0].mxu0 %v3612
  %v3919 = vpop.f32.mrb[0].mxu0
  %v3920 = vadd.f32 %v3815, %v3919
  %v3921 = vpop.f32.mrb[0].mxu0
  %3922 = vmatprep.mubr.f32.mxu0 0.0
  %3923 = vmatmul.mubr.f32.gmra.mrb[0].mxu0 %v3615
  %v3924 = vpop.f32.mrb[0].mxu0
  %v3925 = vadd.f32 %v3820, %v3924
  %v3926 = vpop.f32.mrb[0].mxu0
  %3927 = vmatprep.mubr.f32.mxu0 0.0
  %3928 = vmatmul.mubr.f32.gmra.mrb[0].mxu0 %v3618
  %v3929 = vpop.f32.mrb[0].mxu0
  %v3930 = vadd.f32 %v3825, %v3929
  %v3931 = vpop.f32.mrb[0].mxu0
  %3932 = vmatprep.mubr.f32.mxu0 0.0
  %3933 = vmatmul.mubr.f32.gmra.mrb[0].mxu0 %v3621
  %v3934 = vpop.f32.mrb[0].mxu0
  %v3935 = vadd.f32 %v3830, %v3934
  %v3936 = vpop.f32.mrb[0].mxu0
  %3937 = vdwg.mxu0
  %v3938 = vmax.f32 %v3900, 0.0
  %v3939 = vmax.f32 %v3905, 0.0
  %v3940 = vmax.f32 %v3910, 0.0
  %v3941 = vmax.f32 %v3915, 0.0
  %v3942 = vmax.f32 %v3920, 0.0
  %v3943 = vmax.f32 %v3925, 0.0
  %v3944 = vmax.f32 %v3930, 0.0
  %v3945 = vmax.f32 %v3935, 0.0
  %3946 = vst [vmem:[#allocation6 + $0x7] sm:$0xff] %v3938
  %3947 = vst [vmem:[#allocation6 + $0xf] sm:$0xff] %v3939
  %3948 = vst [vmem:[#allocation6 + $0x17] sm:$0xff] %v3940
  %3949 = vst [vmem:[#allocation6 + $0x1f] sm:$0xff] %v3941
  %3950 = vst [vmem:[#allocation6 + $0x27] sm:$0xff] %v3942
  %3951 = vst [vmem:[#allocation6 + $0x2f] sm:$0xff] %v3943
  %3952 = vst [vmem:[#allocation6 + $0x37] sm:$0xff] %v3944
  %3953 = vst [vmem:[#allocation6 + $0x3f] sm:$0x3] %v3945
  %3954 = vst [vmem:[#allocation9] sm:$0xff] 0.0
  %3955 = vst [vmem:[#allocation9 + $0x8] sm:$0xff] 0.0
  %3956 = vst [vmem:[#allocation9 + $0x10] sm:$0xff] 0.0
  %3957 = vst [vmem:[#allocation9 + $0x18] sm:$0xff] 0.0
  %v3958 = vld [vmem:[#allocation6 + $0x7] sm:$0x1]
  %v3959 = vld [vmem:[#allocation6 + $0x8] sm:$0x1]
  %v3960 = vmax.f32 %v3958, %v3959
  %v3961 = vld [vmem:[#allocation6 + $0xd] sm:$0x1]
  %v3962 = vld [vmem:[#allocation6 + $0xe] sm:$0x1]
  %v3963 = vmax.f32 %v3961, %v3962
  %v3964 = vmax.f32 %v3960, %v3963
  %3965 = vst [vmem:[#allocation9] sm:$0x1] %v3964
  %v3966 = vld [vmem:[#allocation6 + $0x9] sm:$0x1]
  %v3967 = vld [vmem:[#allocation6 + $0xa] sm:$0x1]
  %v3968 = vmax.f32 %v3966, %v3967
  %v3969 = vld [vmem:[#allocation6 + $0xf] sm:$0x1]
  %v3970 = vld [vmem:[#allocation6 + $0x10] sm:$0x1]
  %v3971 = vmax.f32 %v3969, %v3970
  %v3972 = vmax.f32 %v3968, %v3971
  %3973 = vst [vmem:[#allocation9 + $0x8] sm:$0x1] %v3972
  %v3974 = vld [vmem:[#allocation6 + $0x13] sm:$0x1]
  %v3975 = vld [vmem:[#allocation6 + $0x14] sm:$0x1]
  %v3976 = vmax.f32 %v3974, %v3975
  %v3977 = vld [vmem:[#allocation6 + $0x19] sm:$0x1]
  %v3978 = vld [vmem:[#allocation6 + $0x1a] sm:$0x1]
  %v3979 = vmax.f32 %v3977, %v3978
  %v3980 = vmax.f32 %v3976, %v3979
  %3981 = vst [vmem:[#allocation9 + $0x10] sm:$0x1] %v3980
  %v3982 = vld [vmem:[#allocation6 + $0x15] sm:$0x1]
  %v3983 = vld [vmem:[#allocation6 + $0x16] sm:$0x1]
  %v3984 = vmax.f32 %v3982, %v3983
  %v3985 = vld [vmem:[#allocation6 + $0x1b] sm:$0x1]
  %v3986 = vld [vmem:[#allocation6 + $0x1c] sm:$0x1]
  %v3987 = vmax.f32 %v3985, %v3986
  %v3988 = vmax.f32 %v3984, %v3987
  %3989 = vst [vmem:[#allocation9 + $0x18] sm:$0x1] %v3988
  %v3990 = vld [vmem:[#allocation6 + $0x2b] sm:$0x1]
  %v3991 = vld [vmem:[#allocation6 + $0x2c] sm:$0x1]
  %v3992 = vmax.f32 %v3990, %v3991
  %v3993 = vld [vmem:[#allocation6 + $0x31] sm:$0x1]
  %v3994 = vld [vmem:[#allocation6 + $0x32] sm:$0x1]
  %v3995 = vmax.f32 %v3993, %v3994
  %v3996 = vmax.f32 %v3992, %v3995
  %3997 = vst [vmem:[#allocation9 + $0x1] sm:$0x1] %v3996
  %v3998 = vld [vmem:[#allocation6 + $0x2d] sm:$0x1]
  %v3999 = vld [vmem:[#allocation6 + $0x2e] sm:$0x1]
  %v4000 = vmax.f32 %v3998, %v3999
  %v4001 = vld [vmem:[#allocation6 + $0x33] sm:$0x1]
  %v4002 = vld [vmem:[#allocation6 + $0x34] sm:$0x1]
  %v4003 = vmax.f32 %v4001, %v4002
  %v4004 = vmax.f32 %v4000, %v4003
  %4005 = vst [vmem:[#allocation9 + $0x9] sm:$0x1] %v4004
  %v4006 = vld [vmem:[#allocation6 + $0x37] sm:$0x1]
  %v4007 = vld [vmem:[#allocation6 + $0x38] sm:$0x1]
  %v4008 = vmax.f32 %v4006, %v4007
  %v4009 = vld [vmem:[#allocation6 + $0x3d] sm:$0x1]
  %v4010 = vld [vmem:[#allocation6 + $0x3e] sm:$0x1]
  %v4011 = vmax.f32 %v4009, %v4010
  %v4012 = vmax.f32 %v4008, %v4011
  %4013 = vst [vmem:[#allocation9 + $0x11] sm:$0x1] %v4012
  %v4014 = vld [vmem:[#allocation6 + $0x39] sm:$0x1]
  %v4015 = vld [vmem:[#allocation6 + $0x3a] sm:$0x1]
  %v4016 = vmax.f32 %v4014, %v4015
  %v4017 = vld [vmem:[#allocation6 + $0x3f] sm:$0x1]
  %v4018 = vld [vmem:[#allocation6 + $0x40] sm:$0x1]
  %v4019 = vmax.f32 %v4017, %v4018
  %v4020 = vmax.f32 %v4016, %v4019
  %4021 = vst [vmem:[#allocation9 + $0x19] sm:$0x1] %v4020
  %v4022 = vld [vmem:[#allocation9] sm:$0xff]
  %v4023 = vld [vmem:[#allocation9 + $0x8] sm:$0xff]
  %v4024 = vld [vmem:[#allocation9 + $0x10] sm:$0xff]
  %v4025 = vld [vmem:[#allocation9 + $0x18] sm:$0xff]
  %v4026 = vld [vmem:[%s7] sm:$0xff]
  %v4027 = vld [vmem:[%s7 + $0x8] sm:$0xff]
  %v4028 = vld [vmem:[%s7 + $0x10] sm:$0xff]
  %v4029 = vld [vmem:[%s7 + $0x18] sm:$0xff]
  %v4030 = vld [vmem:[%s7 + $0x20] sm:$0xff]
  %v4031 = vld [vmem:[%s7 + $0x28] sm:$0xff]
  %v4032 = vld [vmem:[%s7 + $0x30] sm:$0xff]
  %v4033 = vld [vmem:[%s7 + $0x38] sm:$0xff]
  %v4034 = vld [vmem:[%s7 + $0x40] sm:$0xff]
  %v4035 = vld [vmem:[%s7 + $0x48] sm:$0xff]
  %v4036 = vld [vmem:[%s7 + $0x50] sm:$0xff]
  %v4037 = vld [vmem:[%s7 + $0x58] sm:$0xff]
  %v4038 = vld [vmem:[%s7 + $0x60] sm:$0xff]
  %v4039 = vld [vmem:[%s7 + $0x68] sm:$0xff]
  %v4040 = vld [vmem:[%s7 + $0x70] sm:$0xff]
  %v4041 = vld [vmem:[%s7 + $0x78] sm:$0xff]
  %v4042 = vld [vmem:[%s7 + $0x80] sm:$0xff]
  %v4043 = vld [vmem:[%s7 + $0x88] sm:$0xff]
  %v4044 = vld [vmem:[%s7 + $0x90] sm:$0xff]
  %v4045 = vld [vmem:[%s7 + $0x98] sm:$0xff]
  %v4046 = vld [vmem:[%s7 + $0xa0] sm:$0xff]
  %v4047 = vld [vmem:[%s7 + $0xa8] sm:$0xff]
  %v4048 = vld [vmem:[%s7 + $0xb0] sm:$0xff]
  %v4049 = vld [vmem:[%s7 + $0xb8] sm:$0xff]
  %v4050 = vld [vmem:[%s7 + $0xc0] sm:$0xff]
  %v4051 = vld [vmem:[%s7 + $0xc8] sm:$0xff]
  %v4052 = vld [vmem:[%s7 + $0xd0] sm:$0xff]
  %v4053 = vld [vmem:[%s7 + $0xd8] sm:$0xff]
  %v4054 = vld [vmem:[%s7 + $0xe0] sm:$0xff]
  %v4055 = vld [vmem:[%s7 + $0xe8] sm:$0xff]
  %v4056 = vld [vmem:[%s7 + $0xf0] sm:$0xff]
  %v4057 = vld [vmem:[%s7 + $0xf8] sm:$0xff]
  %v4058 = vld [vmem:[%s7 + $0x100] sm:$0xff]
  %v4059 = vld [vmem:[%s7 + $0x108] sm:$0xff]
  %v4060 = vld [vmem:[%s7 + $0x110] sm:$0xff]
  %v4061 = vld [vmem:[%s7 + $0x118] sm:$0xff]
  %v4062 = vld [vmem:[%s7 + $0x120] sm:$0xff]
  %v4063 = vld [vmem:[%s7 + $0x128] sm:$0xff]
  %v4064 = vld [vmem:[%s7 + $0x130] sm:$0xff]
  %v4065 = vld [vmem:[%s7 + $0x138] sm:$0xff]
  %v4066 = vld [vmem:[%s7 + $0x140] sm:$0xff]
  %v4067 = vld [vmem:[%s7 + $0x148] sm:$0xff]
  %v4068 = vld [vmem:[%s7 + $0x150] sm:$0xff]
  %v4069 = vld [vmem:[%s7 + $0x158] sm:$0xff]
  %v4070 = vld [vmem:[%s7 + $0x160] sm:$0xff]
  %v4071 = vld [vmem:[%s7 + $0x168] sm:$0xff]
  %v4072 = vld [vmem:[%s7 + $0x170] sm:$0xff]
  %v4073 = vld [vmem:[%s7 + $0x178] sm:$0xff]
  %v4074 = vld [vmem:[%s7 + $0x180] sm:$0xff]
  %v4075 = vld [vmem:[%s7 + $0x188] sm:$0xff]
  %v4076 = vld [vmem:[%s7 + $0x190] sm:$0xff]
  %v4077 = vld [vmem:[%s7 + $0x198] sm:$0xff]
  %v4078 = vld [vmem:[%s7 + $0x1a0] sm:$0xff]
  %v4079 = vld [vmem:[%s7 + $0x1a8] sm:$0xff]
  %v4080 = vld [vmem:[%s7 + $0x1b0] sm:$0xff]
  %v4081 = vld [vmem:[%s7 + $0x1b8] sm:$0xff]
  %v4082 = vld [vmem:[%s7 + $0x1c0] sm:$0xff]
  %v4083 = vld [vmem:[%s7 + $0x1c8] sm:$0xff]
  %v4084 = vld [vmem:[%s7 + $0x1d0] sm:$0xff]
  %v4085 = vld [vmem:[%s7 + $0x1d8] sm:$0xff]
  %v4086 = vld [vmem:[%s7 + $0x1e0] sm:$0xff]
  %v4087 = vld [vmem:[%s7 + $0x1e8] sm:$0xff]
  %v4088 = vld [vmem:[%s7 + $0x1f0] sm:$0xff]
  %v4089 = vld [vmem:[%s7 + $0x1f8] sm:$0xff]
  %v4090 = vld [vmem:[%s8] sm:$0x1]
  %v4092 = vlaneseq
  %v4093 = vshrl.u32 %v4092, 7
  %v4094 = vsub.s32 0, %v4093
  %v4095 = vrot.slane %v4090, %v4094
  %4097 = vmatprep.subr.mxu0 0.0
  %4098 = vmatpush1.msra.mxu0 %v4026
  %4099 = vmatprep.subr.mxu0 0.0
  %4100 = vmatpush1.msra.mxu0 %v4027
  %4101 = vmatprep.subr.mxu0 0.0
  %4102 = vmatpush1.msra.mxu0 %v4028
  %4103 = vmatprep.subr.mxu0 0.0
  %4104 = vmatpush1.msra.mxu0 %v4029
  %4105 = vmatprep.subr.mxu0 0.0
  %4106 = vmatpush1.msra.mxu0 %v4030
  %4107 = vmatprep.subr.mxu0 0.0
  %4108 = vmatpush1.msra.mxu0 %v4031
  %4109 = vmatprep.subr.mxu0 0.0
  %4110 = vmatpush1.msra.mxu0 %v4032
  %4111 = vmatprep.subr.mxu0 0.0
  %4112 = vmatpush1.msra.mxu0 %v4033
  %4113 = vmatprep.subr.mxu0 0.0
  %4114 = vmatpush1.msra.mxu0 %v4034
  %4115 = vmatprep.subr.mxu0 0.0
  %4116 = vmatpush1.msra.mxu0 %v4035
  %4117 = vmatprep.subr.mxu0 0.0
  %4118 = vmatpush1.msra.mxu0 %v4036
  %4119 = vmatprep.subr.mxu0 0.0
  %4120 = vmatpush1.msra.mxu0 %v4037
  %4121 = vmatprep.subr.mxu0 0.0
  %4122 = vmatpush1.msra.mxu0 %v4038
  %4123 = vmatprep.subr.mxu0 0.0
  %4124 = vmatpush1.msra.mxu0 %v4039
  %4125 = vmatprep.subr.mxu0 0.0
  %4126 = vmatpush1.msra.mxu0 %v4040
  %4127 = vmatprep.subr.mxu0 0.0
  %4128 = vmatpush1.msra.mxu0 %v4041
  %4129 = vmatprep.subr.mxu0 0.0
  %4130 = vmatpush1.msra.mxu0 %v4042
  %4131 = vmatprep.subr.mxu0 0.0
  %4132 = vmatpush1.msra.mxu0 %v4043
  %4133 = vmatprep.subr.mxu0 0.0
  %4134 = vmatpush1.msra.mxu0 %v4044
  %4135 = vmatprep.subr.mxu0 0.0
  %4136 = vmatpush1.msra.mxu0 %v4045
  %4137 = vmatprep.subr.mxu0 0.0
  %4138 = vmatpush1.msra.mxu0 %v4046
  %4139 = vmatprep.subr.mxu0 0.0
  %4140 = vmatpush1.msra.mxu0 %v4047
  %4141 = vmatprep.subr.mxu0 0.0
  %4142 = vmatpush1.msra.mxu0 %v4048
  %4143 = vmatprep.subr.mxu0 0.0
  %4144 = vmatpush1.msra.mxu0 %v4049
  %4145 = vmatprep.subr.mxu0 0.0
  %4146 = vmatpush1.msra.mxu0 %v4050
  %4147 = vmatprep.subr.mxu0 0.0
  %4148 = vmatpush1.msra.mxu0 %v4051
  %4149 = vmatprep.subr.mxu0 0.0
  %4150 = vmatpush1.msra.mxu0 %v4052
  %4151 = vmatprep.subr.mxu0 0.0
  %4152 = vmatpush1.msra.mxu0 %v4053
  %4153 = vmatprep.subr.mxu0 0.0
  %4154 = vmatpush1.msra.mxu0 %v4054
  %4155 = vmatprep.subr.mxu0 0.0
  %4156 = vmatpush1.msra.mxu0 %v4055
  %4157 = vmatprep.subr.mxu0 0.0
  %4158 = vmatpush1.msra.mxu0 %v4056
  %4159 = vmatprep.subr.mxu0 0.0
  %4160 = vmatpush1.msra.mxu0 %v4057
  %4161 = vmatprep.mubr.f32.mxu0 %v4023
  %4162 = vmatmul.mubr.f32.gmra.mrb[0].mxu0 %v4022
  %v4163 = vpop.f32.mrb[0].mxu0
  %v4164 = vadd.f32 %v4095, %v4163
  %v4165 = vpop.f32.mrb[0].mxu0
  %4166 = vdwg.mxu0
  %4167 = vmatprep.subr.mxu0 0.0
  %4168 = vmatpush1.msra.mxu0 %v4058
  %4169 = vmatprep.subr.mxu0 0.0
  %4170 = vmatpush1.msra.mxu0 %v4059
  %4171 = vmatprep.subr.mxu0 0.0
  %4172 = vmatpush1.msra.mxu0 %v4060
  %4173 = vmatprep.subr.mxu0 0.0
  %4174 = vmatpush1.msra.mxu0 %v4061
  %4175 = vmatprep.subr.mxu0 0.0
  %4176 = vmatpush1.msra.mxu0 %v4062
  %4177 = vmatprep.subr.mxu0 0.0
  %4178 = vmatpush1.msra.mxu0 %v4063
  %4179 = vmatprep.subr.mxu0 0.0
  %4180 = vmatpush1.msra.mxu0 %v4064
  %4181 = vmatprep.subr.mxu0 0.0
  %4182 = vmatpush1.msra.mxu0 %v4065
  %4183 = vmatprep.subr.mxu0 0.0
  %4184 = vmatpush1.msra.mxu0 %v4066
  %4185 = vmatprep.subr.mxu0 0.0
  %4186 = vmatpush1.msra.mxu0 %v4067
  %4187 = vmatprep.subr.mxu0 0.0
  %4188 = vmatpush1.msra.mxu0 %v4068
  %4189 = vmatprep.subr.mxu0 0.0
  %4190 = vmatpush1.msra.mxu0 %v4069
  %4191 = vmatprep.subr.mxu0 0.0
  %4192 = vmatpush1.msra.mxu0 %v4070
  %4193 = vmatprep.subr.mxu0 0.0
  %4194 = vmatpush1.msra.mxu0 %v4071
  %4195 = vmatprep.subr.mxu0 0.0
  %4196 = vmatpush1.msra.mxu0 %v4072
  %4197 = vmatprep.subr.mxu0 0.0
  %4198 = vmatpush1.msra.mxu0 %v4073
  %4199 = vmatprep.subr.mxu0 0.0
  %4200 = vmatpush1.msra.mxu0 %v4074
  %4201 = vmatprep.subr.mxu0 0.0
  %4202 = vmatpush1.msra.mxu0 %v4075
  %4203 = vmatprep.subr.mxu0 0.0
  %4204 = vmatpush1.msra.mxu0 %v4076
  %4205 = vmatprep.subr.mxu0 0.0
  %4206 = vmatpush1.msra.mxu0 %v4077
  %4207 = vmatprep.subr.mxu0 0.0
  %4208 = vmatpush1.msra.mxu0 %v4078
  %4209 = vmatprep.subr.mxu0 0.0
  %4210 = vmatpush1.msra.mxu0 %v4079
  %4211 = vmatprep.subr.mxu0 0.0
  %4212 = vmatpush1.msra.mxu0 %v4080
  %4213 = vmatprep.subr.mxu0 0.0
  %4214 = vmatpush1.msra.mxu0 %v4081
  %4215 = vmatprep.subr.mxu0 0.0
  %4216 = vmatpush1.msra.mxu0 %v4082
  %4217 = vmatprep.subr.mxu0 0.0
  %4218 = vmatpush1.msra.mxu0 %v4083
  %4219 = vmatprep.subr.mxu0 0.0
  %4220 = vmatpush1.msra.mxu0 %v4084
  %4221 = vmatprep.subr.mxu0 0.0
  %4222 = vmatpush1.msra.mxu0 %v4085
  %4223 = vmatprep.subr.mxu0 0.0
  %4224 = vmatpush1.msra.mxu0 %v4086
  %4225 = vmatprep.subr.mxu0 0.0
  %4226 = vmatpush1.msra.mxu0 %v4087
  %4227 = vmatprep.subr.mxu0 0.0
  %4228 = vmatpush1.msra.mxu0 %v4088
  %4229 = vmatprep.subr.mxu0 0.0
  %4230 = vmatpush1.msra.mxu0 %v4089
  %4231 = vmatprep.mubr.f32.mxu0 %v4025
  %4232 = vmatmul.mubr.f32.gmra.mrb[0].mxu0 %v4024
  %v4233 = vpop.f32.mrb[0].mxu0
  %v4234 = vadd.f32 %v4164, %v4233
  %v4235 = vpop.f32.mrb[0].mxu0
  %4236 = vdwg.mxu0
  %v4237 = vld [vmem:[%s9] sm:$0xff]
  %v4238 = vld [vmem:[%s9 + $0x8] sm:$0xff]
  %v4239 = vld [vmem:[%s9 + $0x10] sm:$0xff]
  %v4240 = vld [vmem:[%s9 + $0x18] sm:$0xff]
  %v4241 = vld [vmem:[%s9 + $0x20] sm:$0xff]
  %v4242 = vld [vmem:[%s9 + $0x28] sm:$0xff]
  %v4243 = vld [vmem:[%s9 + $0x30] sm:$0xff]
  %v4244 = vld [vmem:[%s9 + $0x38] sm:$0xff]
  %v4245 = vld [vmem:[%s9 + $0x40] sm:$0xff]
  %v4246 = vld [vmem:[%s9 + $0x48] sm:$0xff]
  %v4247 = vld [vmem:[%s9 + $0x50] sm:$0xff]
  %v4248 = vld [vmem:[%s9 + $0x58] sm:$0xff]
  %v4249 = vld [vmem:[%s9 + $0x60] sm:$0xff]
  %v4250 = vld [vmem:[%s9 + $0x68] sm:$0xff]
  %v4251 = vld [vmem:[%s9 + $0x70] sm:$0xff]
  %v4252 = vld [vmem:[%s9 + $0x78] sm:$0xff]
  %v4253 = vld [vmem:[%s10] sm:$0x1]
  %v4255 = vlaneseq
  %v4256 = vshrl.u32 %v4255, 7
  %v4257 = vsub.s32 0, %v4256
  %v4258 = vrot.slane %v4253, %v4257
  %4260 = vmatprep.subr.mxu0 0.0
  %4261 = vmatpush1.msra.mxu0 %v4237
  %4262 = vmatprep.subr.mxu0 0.0
  %4263 = vmatpush1.msra.mxu0 %v4238
  %4264 = vmatprep.subr.mxu0 0.0
  %4265 = vmatpush1.msra.mxu0 %v4239
  %4266 = vmatprep.subr.mxu0 0.0
  %4267 = vmatpush1.msra.mxu0 %v4240
  %4268 = vmatprep.subr.mxu0 0.0
  %4269 = vmatpush1.msra.mxu0 %v4241
  %4270 = vmatprep.subr.mxu0 0.0
  %4271 = vmatpush1.msra.mxu0 %v4242
  %4272 = vmatprep.subr.mxu0 0.0
  %4273 = vmatpush1.msra.mxu0 %v4243
  %4274 = vmatprep.subr.mxu0 0.0
  %4275 = vmatpush1.msra.mxu0 %v4244
  %4276 = vmatprep.subr.mxu0 0.0
  %4277 = vmatpush1.msra.mxu0 %v4245
  %4278 = vmatprep.subr.mxu0 0.0
  %4279 = vmatpush1.msra.mxu0 %v4246
  %4280 = vmatprep.subr.mxu0 0.0
  %4281 = vmatpush1.msra.mxu0 %v4247
  %4282 = vmatprep.subr.mxu0 0.0
  %4283 = vmatpush1.msra.mxu0 %v4248
  %4284 = vmatprep.subr.mxu0 0.0
  %4285 = vmatpush1.msra.mxu0 %v4249
  %4286 = vmatprep.subr.mxu0 0.0
  %4287 = vmatpush1.msra.mxu0 %v4250
  %4288 = vmatprep.subr.mxu0 0.0
  %4289 = vmatpush1.msra.mxu0 %v4251
  %4290 = vmatprep.subr.mxu0 0.0
  %4291 = vmatpush1.msra.mxu0 %v4252
  %4292 = vmatprep.subr.mxu0 0.0
  %4293 = vmatpush1.msra.mxu0 0.0
  %4294 = vmatprep.subr.mxu0 0.0
  %4295 = vmatpush1.msra.mxu0 0.0
  %4296 = vmatprep.subr.mxu0 0.0
  %4297 = vmatpush1.msra.mxu0 0.0
  %4298 = vmatprep.subr.mxu0 0.0
  %4299 = vmatpush1.msra.mxu0 0.0
  %4300 = vmatprep.subr.mxu0 0.0
  %4301 = vmatpush1.msra.mxu0 0.0
  %4302 = vmatprep.subr.mxu0 0.0
  %4303 = vmatpush1.msra.mxu0 0.0
  %4304 = vmatprep.subr.mxu0 0.0
  %4305 = vmatpush1.msra.mxu0 0.0
  %4306 = vmatprep.subr.mxu0 0.0
  %4307 = vmatpush1.msra.mxu0 0.0
  %4308 = vmatprep.subr.mxu0 0.0
  %4309 = vmatpush1.msra.mxu0 0.0
  %4310 = vmatprep.subr.mxu0 0.0
  %4311 = vmatpush1.msra.mxu0 0.0
  %4312 = vmatprep.subr.mxu0 0.0
  %4313 = vmatpush1.msra.mxu0 0.0
  %4314 = vmatprep.subr.mxu0 0.0
  %4315 = vmatpush1.msra.mxu0 0.0
  %4316 = vmatprep.subr.mxu0 0.0
  %4317 = vmatpush1.msra.mxu0 0.0
  %4318 = vmatprep.subr.mxu0 0.0
  %4319 = vmatpush1.msra.mxu0 0.0
  %4320 = vmatprep.subr.mxu0 0.0
  %4321 = vmatpush1.msra.mxu0 0.0
  %4322 = vmatprep.subr.mxu0 0.0
  %4323 = vmatpush1.msra.mxu0 0.0
  %4324 = vmatprep.mubr.f32.mxu0 0.0
  %4325 = vmatmul.mubr.f32.gmra.mrb[0].mxu0 %v4234
  %v4326 = vpop.f32.mrb[0].mxu0
  %v4327 = vadd.f32 %v4258, %v4326
  %v4328 = vpop.f32.mrb[0].mxu0
  %4329 = vdwg.mxu0
  %4330 = vst [vmem:[%s11] sm:$0xff] %v4327
  // Predicated region
  $region46: #{dogcat_forward.1} parent=0 // pred_check
    _
  $region47: #{dogcat_forward.1} parent=0 // pred_check_branch
    %4332 = sbr.rel (0) target = $region49
  $region48: #{dogcat_forward.1} parent=0 // pred_region
    _
  $region49: #{dogcat_forward.1} parent=0 // pred_fallthru
    _
  // Predicated region
  $region50: #{dogcat_forward.1} parent=0 // pred_check
    _
  $region51: #{dogcat_forward.1} parent=0 // pred_check_branch
    %4334 = sbr.rel (0) target = $region53
  $region52: #{dogcat_forward.1} parent=0 // pred_region
    _
  $region53: #{dogcat_forward.1} parent=0 // pred_fallthru
    _

</llo_original>
